<compile_context>
chip_gen: v7x
topology: tpu7x:2x2x1
jax: 0.10.0
libtpu: 0.0.40
codegen_flags: <defaults>
</compile_context>

<pallas_src>
import jax
import jax.numpy as jnp
from jax import lax
from jax.experimental import pallas as pl
from jax.experimental.pallas import tpu as pltpu

LANE = 128


def _round_up(v, m):
    return (v + m - 1) // m * m


# ----------------------------- fused kernel ----------------------------------

def _bottleneck_kernel(x_ref, w1_ref, b1_ref, w2_ref, b2_ref, w3_ref, b3_ref,
                       o_ref, h1p_ref):
    # x_ref  : (1, H, W, Cin)  f32   (Cin == Cout, identity residual)
    # w1_ref : (Cin, Cp)       bf16  (BN scale folded, Cout padded to Cp=128k)
    # w2_ref : (9*Cp, Cp)      bf16  (3x3 HWIO flattened for im2col, padded)
    # w3_ref : (Cp, Cout)      bf16
    # b*_ref : (1, Cp|Cout)    f32   folded BN biases
    # h1p_ref: (H+2, W+2, Cp)  bf16  VMEM scratch, zero-padded stage-1 output
    H, W = x_ref.shape[1], x_ref.shape[2]
    cin = x_ref.shape[3]
    cp = w1_ref.shape[1]
    cout = w3_ref.shape[1]

    x2d = x_ref[0].reshape(H * W, cin)                       # f32, reused as residual
    x_bf = x2d.astype(jnp.bfloat16)

    # ---- stage 1: 1x1 conv (+folded BN) + ReLU -> padded bf16 VMEM scratch ----
    y1 = jnp.dot(x_bf, w1_ref[...], preferred_element_type=jnp.float32)
    y1 = jnp.maximum(y1 + b1_ref[...], 0.0).astype(jnp.bfloat16)
    # zero every step (scratch is per-core; keeps the 1-pixel border at zero)
    h1p_ref[...] = jnp.zeros_like(h1p_ref)
    h1p_ref[1:H + 1, 1:W + 1, :] = y1.reshape(H, W, cp)

    # ---- stage 2: 3x3 conv as a single im2col matmul (K = 9*Cp) --------------
    taps = [h1p_ref[kh:kh + H, kw:kw + W, :].reshape(H * W, cp)
            for kh in range(3) for kw in range(3)]
    patches = jnp.concatenate(taps, axis=-1)                 # (H*W, 9*Cp) bf16
    y2 = jnp.dot(patches, w2_ref[...], preferred_element_type=jnp.float32)
    y2 = jnp.maximum(y2 + b2_ref[...], 0.0).astype(jnp.bfloat16)

    # ---- stage 3: 1x1 conv (+folded BN) + identity residual + ReLU -----------
    y3 = jnp.dot(y2, w3_ref[...], preferred_element_type=jnp.float32)
    y3 = y3 + b3_ref[...] + x2d                              # residual in f32
    o_ref[0] = jnp.maximum(y3, 0.0).reshape(H, W, cout).astype(o_ref.dtype)


# ----------------------------- wrapper ----------------------------------------

def bottleneck_forward(x_nchw, kparams):
    """Fused Pallas Bottleneck. Input/output NCHW float32 (matches PyTorch)."""
    N, Cin, H, W = x_nchw.shape
    cp = kparams["w1"].shape[1]
    cout = kparams["w3"].shape[1]
    assert Cin == cout, "identity residual requires inplanes == planes*expansion"

    x = jnp.transpose(x_nchw, (0, 2, 3, 1))                  # NCHW -> NHWC

    def full(a):
        return pl.BlockSpec(a.shape, lambda n, _nd=a.ndim: (0,) * _nd)

    out = pl.pallas_call(
        _bottleneck_kernel,
        out_shape=jax.ShapeDtypeStruct((N, H, W, cout), jnp.float32),
        grid=(N,),
        in_specs=[pl.BlockSpec((1, H, W, Cin), lambda n: (n, 0, 0, 0)),
                  full(kparams["w1"]), full(kparams["b1"]),
                  full(kparams["w2"]), full(kparams["b2"]),
                  full(kparams["w3"]), full(kparams["b3"])],
        out_specs=pl.BlockSpec((1, H, W, cout), lambda n: (n, 0, 0, 0)),
        scratch_shapes=[pltpu.VMEM((H + 2, W + 2, cp), jnp.bfloat16)],
        compiler_params=pltpu.CompilerParams(
            dimension_semantics=("parallel",),
            vmem_limit_bytes=32 * 1024 * 1024),
    )(x, kparams["w1"], kparams["b1"], kparams["w2"], kparams["b2"],
      kparams["w3"], kparams["b3"])

    return jnp.transpose(out, (0, 3, 1, 2))                  # NHWC -> NCHW


# ----------------------------- parameter prep ---------------------------------

def fold_bn(gamma, beta, mean, var, eps=1e-5):
    scale = gamma / jnp.sqrt(var + eps)
    bias = beta - mean * scale
    return scale, bias


def prepare_kernel_params(p):
    """Fold BN into weights, convert to kernel layouts, pad hidden channels to 128."""
    planes = p["w1_torch"].shape[0]
    outplanes = p["w3_torch"].shape[0]
    cp = _round_up(planes, LANE)

    s1, b1 = fold_bn(*p["bn1"])
    s2, b2 = fold_bn(*p["bn2"])
    s3, b3 = fold_bn(*p["bn3"])

    # 1x1: OIHW -> (Cin, P), scale-folded, Cout padded to Cp
    w1 = (p["w1_torch"][:, :, 0, 0] * s1[:, None]).T
    w1 = jnp.pad(w1, ((0, 0), (0, cp - planes))).astype(jnp.bfloat16)
    b1p = jnp.pad(b1, (0, cp - planes)).reshape(1, cp).astype(jnp.float32)

    # 3x3: OIHW -> HWIO, scale-folded, both channel dims padded, im2col-flattened
    w2 = p["w2_torch"] * s2[:, None, None, None]
    w2 = jnp.transpose(w2, (2, 3, 1, 0))                     # (3,3,P,P) HWIO
    w2 = jnp.pad(w2, ((0, 0), (0, 0), (0, cp - planes), (0, cp - planes)))
    w2 = w2.reshape(9 * cp, cp).astype(jnp.bfloat16)
    b2p = jnp.pad(b2, (0, cp - planes)).reshape(1, cp).astype(jnp.float32)

    # 1x1: OIHW -> (P, 4P), scale-folded, Cin padded to Cp
    w3 = (p["w3_torch"][:, :, 0, 0] * s3[:, None]).T
    w3 = jnp.pad(w3, ((0, cp - planes), (0, 0))).astype(jnp.bfloat16)
    b3p = b3.reshape(1, outplanes).astype(jnp.float32)

    return {"w1": w1, "b1": b1p, "w2": w2, "b2": b2p, "w3": w3, "b3": b3p}


def init_bottleneck_params(key, inplanes, planes, expansion=4):
    ks = jax.random.split(key, 12)
    p = {}
    w1 = jax.random.normal(ks[0], (planes, inplanes, 1, 1), jnp.float32) * 0.1
    w2 = jax.random.normal(ks[1], (planes, planes, 3, 3), jnp.float32) * 0.1
    w3 = jax.random.normal(ks[2], (planes * expansion, planes, 1, 1),
                           jnp.float32) * 0.1
    p["w1_torch"], p["w2_torch"], p["w3_torch"] = w1, w2, w3

    def bn_params(kg, kb, c):
        gamma = 1.0 + 0.1 * jax.random.normal(kg, (c,), jnp.float32)
        beta = 0.1 * jax.random.normal(kb, (c,), jnp.float32)
        mean = 0.05 * jax.random.normal(jax.random.fold_in(kg, 7), (c,),
                                        jnp.float32)
        var = 1.0 + 0.1 * jax.nn.softplus(
            jax.random.normal(jax.random.fold_in(kb, 7), (c,), jnp.float32))
        return gamma, beta, mean, var

    p["bn1"] = bn_params(ks[3], ks[4], planes)
    p["bn2"] = bn_params(ks[5], ks[6], planes)
    p["bn3"] = bn_params(ks[7], ks[8], planes * expansion)
    return p


# ----------------------------- pure-JAX reference -----------------------------

def bottleneck_reference(x_nchw, params):
    def conv(x, w, stride=1, pad=0):
        return lax.conv_general_dilated(
            x, w, window_strides=(stride, stride),
            padding=[(pad, pad), (pad, pad)],
            dimension_numbers=("NCHW", "OIHW", "NCHW"))

    def bn(x, prm):
        gamma, beta, mean, var = prm
        s = gamma / jnp.sqrt(var + 1e-5)
        return x * s[None, :, None, None] + (beta - mean * s)[None, :, None, None]

    relu = lambda v: jnp.maximum(v, 0.0)
    out = relu(bn(conv(x_nchw, params["w1_torch"]), params["bn1"]))
    out = relu(bn(conv(out, params["w2_torch"], 1, 1), params["bn2"]))
    out = bn(conv(out, params["w3_torch"]), params["bn3"])
    return relu(out + x_nchw)


# ----------------------------- main -------------------------------------------

if __name__ == "__main__":
    key = jax.random.PRNGKey(0)
    kx, kp = jax.random.split(key)

    planes, expansion = 4, 4
    inplanes = planes * expansion      # identity residual (downsample=None)
    N, H, W = 2, 16, 16

    x = jax.random.normal(kx, (N, inplanes, H, W), jnp.float32)
    params = init_bottleneck_params(kp, inplanes, planes, expansion)
    kernel_params = prepare_kernel_params(params)

    fwd = jax.jit(bottleneck_forward)
    out = jax.block_until_ready(fwd(x, kernel_params))
    ref = jax.block_until_ready(bottleneck_reference(x, params))

    assert out.shape == (N, planes * expansion, H, W)
    max_err = float(jnp.max(jnp.abs(out - ref)))
    assert jnp.allclose(out, ref, rtol=2e-2, atol=2e-2), max_err
    print("KERNEL_OK")
</pallas_src>

<mosaic_0001>
module attributes {stable_mosaic.version = 11 : i64} {
  func.func @_bottleneck_kernel(%arg0: i32, %arg1: memref<1x16x16x16xf32, #tpu.memory_space<vmem>>, %arg2: memref<16x128xbf16, #tpu.memory_space<vmem>>, %arg3: memref<1x128xf32, #tpu.memory_space<vmem>>, %arg4: memref<1152x128xbf16, #tpu.memory_space<vmem>>, %arg5: memref<1x128xf32, #tpu.memory_space<vmem>>, %arg6: memref<128x16xbf16, #tpu.memory_space<vmem>>, %arg7: memref<1x16xf32, #tpu.memory_space<vmem>>, %arg8: memref<1x16x16x16xf32, #tpu.memory_space<vmem>>, %arg9: memref<18x18x128xbf16, #tpu.memory_space<vmem>>) attributes {dimension_semantics = [#tpu.dimension_semantics<parallel>], iteration_bounds = array<i64: 2>, scalar_prefetch = 0 : i64, scratch_operands = 1 : i64, tpu.core_type = #tpu.core_type<tc>, window_params = [{transform_indices = @transform_0, window_bounds = array<i64: 1, 16, 16, 16>}, {pipeline_mode = #tpu.pipeline_mode<synchronous>, transform_indices = @transform_1, window_bounds = array<i64: 16, 128>}, {pipeline_mode = #tpu.pipeline_mode<synchronous>, transform_indices = @transform_2, window_bounds = array<i64: 1, 128>}, {pipeline_mode = #tpu.pipeline_mode<synchronous>, transform_indices = @transform_3, window_bounds = array<i64: 1152, 128>}, {pipeline_mode = #tpu.pipeline_mode<synchronous>, transform_indices = @transform_4, window_bounds = array<i64: 1, 128>}, {pipeline_mode = #tpu.pipeline_mode<synchronous>, transform_indices = @transform_5, window_bounds = array<i64: 128, 16>}, {pipeline_mode = #tpu.pipeline_mode<synchronous>, transform_indices = @transform_6, window_bounds = array<i64: 1, 16>}, {transform_indices = @transform_7, window_bounds = array<i64: 1, 16, 16, 16>}]} {
    %c0 = arith.constant 0 : index
    %c0_0 = arith.constant 0 : index
    %c0_1 = arith.constant 0 : index
    %c0_2 = arith.constant 0 : index
    %0 = vector.load %arg1[%c0, %c0_0, %c0_1, %c0_2] : memref<1x16x16x16xf32, #tpu.memory_space<vmem>>, vector<1x16x16x16xf32>
    %1 = vector.shape_cast %0 : vector<1x16x16x16xf32> to vector<16x16x16xf32>
    %2 = vector.shape_cast %1 : vector<16x16x16xf32> to vector<256x16xf32>
    %3 = arith.truncf %2 : vector<256x16xf32> to vector<256x16xbf16>
    %c0_3 = arith.constant 0 : index
    %c0_4 = arith.constant 0 : index
    %4 = vector.load %arg2[%c0_3, %c0_4] : memref<16x128xbf16, #tpu.memory_space<vmem>>, vector<16x128xbf16>
    %cst = arith.constant dense<0.000000e+00> : vector<256x128xf32>
    %5 = tpu.matmul %3, %4, %cst {dimension_numbers = #tpu.dot_dimension_numbers<[1], [0], [0], [1], [0, 0, 1, 1], [], []>} : vector<256x16xbf16>, vector<16x128xbf16>, vector<256x128xf32> -> vector<256x128xf32>
    %c0_5 = arith.constant 0 : index
    %c0_6 = arith.constant 0 : index
    %6 = vector.load %arg3[%c0_5, %c0_6] : memref<1x128xf32, #tpu.memory_space<vmem>>, vector<1x128xf32>
    %7 = vector.broadcast %6 : vector<1x128xf32> to vector<256x128xf32>
    %8 = arith.addf %5, %7 : vector<256x128xf32>
    %cst_7 = arith.constant 0.000000e+00 : f32
    %9 = vector.broadcast %cst_7 : f32 to vector<256x128xf32>
    %10 = arith.maximumf %8, %9 : vector<256x128xf32>
    %11 = arith.truncf %10 : vector<256x128xf32> to vector<256x128xbf16>
    %cst_8 = arith.constant 0.000000e+00 : bf16
    %12 = vector.broadcast %cst_8 : bf16 to vector<18x18x128xbf16>
    %c0_9 = arith.constant 0 : index
    %c0_10 = arith.constant 0 : index
    %c0_11 = arith.constant 0 : index
    %13 = vector.load %arg9[%c0_9, %c0_10, %c0_11] : memref<18x18x128xbf16, #tpu.memory_space<vmem>>, vector<18x18x128xbf16>
    tpu.vector_store %arg9[%c0_9, %c0_10, %c0_11], %12 {strides = array<i32>} : memref<18x18x128xbf16, #tpu.memory_space<vmem>>, vector<18x18x128xbf16>,
    %14 = vector.shape_cast %11 : vector<256x128xbf16> to vector<16x16x128xbf16>
    %c1 = arith.constant 1 : index
    %c1_12 = arith.constant 1 : index
    %c0_13 = arith.constant 0 : index
    %15 = vector.load %arg9[%c1, %c1_12, %c0_13] : memref<18x18x128xbf16, #tpu.memory_space<vmem>>, vector<16x16x128xbf16>
    tpu.vector_store %arg9[%c1, %c1_12, %c0_13], %14 {strides = array<i32>} : memref<18x18x128xbf16, #tpu.memory_space<vmem>>, vector<16x16x128xbf16>,
    %c0_14 = arith.constant 0 : index
    %c0_15 = arith.constant 0 : index
    %c0_16 = arith.constant 0 : index
    %16 = vector.load %arg9[%c0_14, %c0_15, %c0_16] : memref<18x18x128xbf16, #tpu.memory_space<vmem>>, vector<16x16x128xbf16>
    %17 = vector.shape_cast %16 : vector<16x16x128xbf16> to vector<256x128xbf16>
    %c0_17 = arith.constant 0 : index
    %c1_18 = arith.constant 1 : index
    %c0_19 = arith.constant 0 : index
    %18 = vector.load %arg9[%c0_17, %c1_18, %c0_19] : memref<18x18x128xbf16, #tpu.memory_space<vmem>>, vector<16x16x128xbf16>
    %19 = vector.shape_cast %18 : vector<16x16x128xbf16> to vector<256x128xbf16>
    %c0_20 = arith.constant 0 : index
    %c2 = arith.constant 2 : index
    %c0_21 = arith.constant 0 : index
    %20 = vector.load %arg9[%c0_20, %c2, %c0_21] : memref<18x18x128xbf16, #tpu.memory_space<vmem>>, vector<16x16x128xbf16>
    %21 = vector.shape_cast %20 : vector<16x16x128xbf16> to vector<256x128xbf16>
    %c1_22 = arith.constant 1 : index
    %c0_23 = arith.constant 0 : index
    %c0_24 = arith.constant 0 : index
    %22 = vector.load %arg9[%c1_22, %c0_23, %c0_24] : memref<18x18x128xbf16, #tpu.memory_space<vmem>>, vector<16x16x128xbf16>
    %23 = vector.shape_cast %22 : vector<16x16x128xbf16> to vector<256x128xbf16>
    %c1_25 = arith.constant 1 : index
    %c1_26 = arith.constant 1 : index
    %c0_27 = arith.constant 0 : index
    %24 = vector.load %arg9[%c1_25, %c1_26, %c0_27] : memref<18x18x128xbf16, #tpu.memory_space<vmem>>, vector<16x16x128xbf16>
    %25 = vector.shape_cast %24 : vector<16x16x128xbf16> to vector<256x128xbf16>
    %c1_28 = arith.constant 1 : index
    %c2_29 = arith.constant 2 : index
    %c0_30 = arith.constant 0 : index
    %26 = vector.load %arg9[%c1_28, %c2_29, %c0_30] : memref<18x18x128xbf16, #tpu.memory_space<vmem>>, vector<16x16x128xbf16>
    %27 = vector.shape_cast %26 : vector<16x16x128xbf16> to vector<256x128xbf16>
    %c2_31 = arith.constant 2 : index
    %c0_32 = arith.constant 0 : index
    %c0_33 = arith.constant 0 : index
    %28 = vector.load %arg9[%c2_31, %c0_32, %c0_33] : memref<18x18x128xbf16, #tpu.memory_space<vmem>>, vector<16x16x128xbf16>
    %29 = vector.shape_cast %28 : vector<16x16x128xbf16> to vector<256x128xbf16>
    %c2_34 = arith.constant 2 : index
    %c1_35 = arith.constant 1 : index
    %c0_36 = arith.constant 0 : index
    %30 = vector.load %arg9[%c2_34, %c1_35, %c0_36] : memref<18x18x128xbf16, #tpu.memory_space<vmem>>, vector<16x16x128xbf16>
    %31 = vector.shape_cast %30 : vector<16x16x128xbf16> to vector<256x128xbf16>
    %c2_37 = arith.constant 2 : index
    %c2_38 = arith.constant 2 : index
    %c0_39 = arith.constant 0 : index
    %32 = vector.load %arg9[%c2_37, %c2_38, %c0_39] : memref<18x18x128xbf16, #tpu.memory_space<vmem>>, vector<16x16x128xbf16>
    %33 = vector.shape_cast %32 : vector<16x16x128xbf16> to vector<256x128xbf16>
    %34 = tpu.concatenate %17, %19, %21, %23, %25, %27, %29, %31, %33 in 1 : vector<256x128xbf16>, vector<256x128xbf16>, vector<256x128xbf16>, vector<256x128xbf16>, vector<256x128xbf16>, vector<256x128xbf16>, vector<256x128xbf16>, vector<256x128xbf16>, vector<256x128xbf16> -> vector<256x1152xbf16>
    %c0_40 = arith.constant 0 : index
    %c0_41 = arith.constant 0 : index
    %35 = vector.load %arg4[%c0_40, %c0_41] : memref<1152x128xbf16, #tpu.memory_space<vmem>>, vector<1152x128xbf16>
    %cst_42 = arith.constant dense<0.000000e+00> : vector<256x128xf32>
    %36 = tpu.matmul %34, %35, %cst_42 {dimension_numbers = #tpu.dot_dimension_numbers<[1], [0], [0], [1], [0, 0, 1, 1], [], []>} : vector<256x1152xbf16>, vector<1152x128xbf16>, vector<256x128xf32> -> vector<256x128xf32>
    %c0_43 = arith.constant 0 : index
    %c0_44 = arith.constant 0 : index
    %37 = vector.load %arg5[%c0_43, %c0_44] : memref<1x128xf32, #tpu.memory_space<vmem>>, vector<1x128xf32>
    %38 = vector.broadcast %37 : vector<1x128xf32> to vector<256x128xf32>
    %39 = arith.addf %36, %38 : vector<256x128xf32>
    %cst_45 = arith.constant 0.000000e+00 : f32
    %40 = vector.broadcast %cst_45 : f32 to vector<256x128xf32>
    %41 = arith.maximumf %39, %40 : vector<256x128xf32>
    %42 = arith.truncf %41 : vector<256x128xf32> to vector<256x128xbf16>
    %c0_46 = arith.constant 0 : index
    %c0_47 = arith.constant 0 : index
    %43 = vector.load %arg6[%c0_46, %c0_47] : memref<128x16xbf16, #tpu.memory_space<vmem>>, vector<128x16xbf16>
    %cst_48 = arith.constant dense<0.000000e+00> : vector<256x16xf32>
    %44 = tpu.matmul %42, %43, %cst_48 {dimension_numbers = #tpu.dot_dimension_numbers<[1], [0], [0], [1], [0, 0, 1, 1], [], []>} : vector<256x128xbf16>, vector<128x16xbf16>, vector<256x16xf32> -> vector<256x16xf32>
    %c0_49 = arith.constant 0 : index
    %c0_50 = arith.constant 0 : index
    %45 = vector.load %arg7[%c0_49, %c0_50] : memref<1x16xf32, #tpu.memory_space<vmem>>, vector<1x16xf32>
    %46 = vector.broadcast %45 : vector<1x16xf32> to vector<256x16xf32>
    %47 = arith.addf %44, %46 : vector<256x16xf32>
    %48 = arith.addf %47, %2 : vector<256x16xf32>
    %cst_51 = arith.constant 0.000000e+00 : f32
    %49 = vector.broadcast %cst_51 : f32 to vector<256x16xf32>
    %50 = arith.maximumf %48, %49 : vector<256x16xf32>
    %51 = vector.shape_cast %50 : vector<256x16xf32> to vector<16x16x16xf32>
    %c0_52 = arith.constant 0 : index
    %c0_53 = arith.constant 0 : index
    %c0_54 = arith.constant 0 : index
    %c0_55 = arith.constant 0 : index
    %52 = vector.load %arg8[%c0_52, %c0_53, %c0_54, %c0_55] : memref<1x16x16x16xf32, #tpu.memory_space<vmem>>, vector<1x16x16x16xf32>
    %53 = vector.shape_cast %52 : vector<1x16x16x16xf32> to vector<16x16x16xf32>
    %54 = vector.shape_cast %51 : vector<16x16x16xf32> to vector<1x16x16x16xf32>
    tpu.vector_store %arg8[%c0_52, %c0_53, %c0_54, %c0_55], %54 {strides = array<i32>} : memref<1x16x16x16xf32, #tpu.memory_space<vmem>>, vector<1x16x16x16xf32>,
    return
  }
  func.func @transform_0(%arg0: i32) -> (i32, i32, i32, i32) {
    %c0_i32 = arith.constant 0 : i32
    %c0_i32_0 = arith.constant 0 : i32
    %c0_i32_1 = arith.constant 0 : i32
    %c0_i32_2 = arith.constant 0 : i32
    return %arg0, %c0_i32, %c0_i32_0, %c0_i32_1 : i32, i32, i32, i32
  }
  func.func @transform_1(%arg0: i32) -> (i32, i32) {
    %c0_i32 = arith.constant 0 : i32
    %c0_i32_0 = arith.constant 0 : i32
    %c0_i32_1 = arith.constant 0 : i32
    return %c0_i32, %c0_i32_0 : i32, i32
  }
  func.func @transform_2(%arg0: i32) -> (i32, i32) {
    %c0_i32 = arith.constant 0 : i32
    %c0_i32_0 = arith.constant 0 : i32
    %c0_i32_1 = arith.constant 0 : i32
    return %c0_i32, %c0_i32_0 : i32, i32
  }
  func.func @transform_3(%arg0: i32) -> (i32, i32) {
    %c0_i32 = arith.constant 0 : i32
    %c0_i32_0 = arith.constant 0 : i32
    %c0_i32_1 = arith.constant 0 : i32
    return %c0_i32, %c0_i32_0 : i32, i32
  }
  func.func @transform_4(%arg0: i32) -> (i32, i32) {
    %c0_i32 = arith.constant 0 : i32
    %c0_i32_0 = arith.constant 0 : i32
    %c0_i32_1 = arith.constant 0 : i32
    return %c0_i32, %c0_i32_0 : i32, i32
  }
  func.func @transform_5(%arg0: i32) -> (i32, i32) {
    %c0_i32 = arith.constant 0 : i32
    %c0_i32_0 = arith.constant 0 : i32
    %c0_i32_1 = arith.constant 0 : i32
    return %c0_i32, %c0_i32_0 : i32, i32
  }
  func.func @transform_6(%arg0: i32) -> (i32, i32) {
    %c0_i32 = arith.constant 0 : i32
    %c0_i32_0 = arith.constant 0 : i32
    %c0_i32_1 = arith.constant 0 : i32
    return %c0_i32, %c0_i32_0 : i32, i32
  }
  func.func @transform_7(%arg0: i32) -> (i32, i32, i32, i32) {
    %c0_i32 = arith.constant 0 : i32
    %c0_i32_0 = arith.constant 0 : i32
    %c0_i32_1 = arith.constant 0 : i32
    %c0_i32_2 = arith.constant 0 : i32
    return %arg0, %c0_i32, %c0_i32_0, %c0_i32_1 : i32, i32, i32, i32
  }
}

</mosaic_0001>

<llo_original>
// kernel: bottleneck_forward.1
$region0: #{bottleneck_forward.1}
  #allocation0 [shape = 'u32[]', space=smem, size = 0x4, offset = 0x4, fixed_abs, tag = 'smem constant byte address 0x4 - core index']
  #allocation1 [shape = 'u32[144,128]{1,0:T(1,128)}', space=vmem, size = 0x12000, scoped, tag = 'internal scratch']
  #allocation2 [shape = 'bf16[18,18,128]{2,1,0:T(8,128)(2,1)}', space=vmem, size = 0x1b000, scoped, tag = 'scratch operand']
  %s0 = inlined_call_operand.vmem [shape: f32[2,16,16,16], index: 0, kind: input, shape index: {}]
  %s1 = inlined_call_operand.vmem [shape: bf16[16,128], index: 1, kind: input, shape index: {}]
  %s2 = inlined_call_operand.vmem [shape: f32[1,128], index: 2, kind: input, shape index: {}]
  %s3 = inlined_call_operand.vmem [shape: bf16[1152,128], index: 3, kind: input, shape index: {}]
  %s4 = inlined_call_operand.vmem [shape: f32[1,128], index: 4, kind: input, shape index: {}]
  %s5 = inlined_call_operand.vmem [shape: bf16[128,16], index: 5, kind: input, shape index: {}]
  %s6 = inlined_call_operand.vmem [shape: f32[1,16], index: 6, kind: input, shape index: {}]
  %s7 = inlined_call_operand.vmem [shape: f32[2,16,16,16], index: 7, kind: output, shape index: {}]
  %s8 = sld [smem:[#allocation0]]
  $region61: #{bottleneck_forward.1} parent=0
    _
  %s10 = ssub.s32 1, %s8
  %s11 = scalar_select 0, %s10, %s8
  loop: start=0, step=1, limit=4
  $region2: #{bottleneck_forward.1} parent=0 // loop_pre_header
    _
  $region3: #{bottleneck_forward.1} parent=0 // loop_header
    %s13 = sphi 0, %s17
    %p14 = scmp.ge.s32.totalorder %s13, 4
    %s23 = sphi 0, %s25
    %s26 = sphi 0, %s23
    %s27 = sphi 0, %s26
    %s43 = sphi 0, %s27
    %s47 = sphi 0, %s47
    %s49 = sphi 0, %s47
    %s50 = sphi 0, %s49
    %s64 = sphi 0, %s50
    %s68 = sphi 0, %s68
    %s70 = sphi 0, %s68
    %s71 = sphi 0, %s70
    %s85 = sphi 0, %s71
    %s89 = sphi 0, %s89
    %s91 = sphi 0, %s89
    %s92 = sphi 0, %s91
    %s106 = sphi 0, %s92
    %s110 = sphi 0, %s110
    %s112 = sphi 0, %s110
    %s113 = sphi 0, %s112
    %s127 = sphi 0, %s113
    %s131 = sphi 0, %s131
    %s133 = sphi 0, %s131
    %s134 = sphi 0, %s133
    %s148 = sphi 0, %s134
    %s152 = sphi 0, %s152
    %s154 = sphi 0, %s152
    %s155 = sphi 0, %s154
    %s169 = sphi 0, %s155
    %s175 = sphi 0, %s177
    %s178 = sphi 0, %s175
    %s179 = sphi 0, %s178
    %s195 = sphi 0, %s179
  $region4: #{bottleneck_forward.1} parent=0 // loop_header_branch
    %16 = sbr.rel (%p14) target = $region8
  $region5: #{bottleneck_forward.1} parent=0 // loop_body
    %s18 = ssub.s32 %s13, 1
    %s19 = ssub.s32 %s13, 2
    %s20 = sadd.s32 %s13, 1
    %s21 = ssub.s32 %s13, %s20
    %p22 = scmp.eq.s32.totalorder %s21, 0
    %s24 = sadd.s32 %s23, 1
    %s25 = scalar_select %p22, %s23, %s24
    %p28 = pneg %p22
    %p29 = scmp.eq.s32.totalorder %s13, 1
    %p30 = por %p28, %p29
    %p31 = scmp.ne.s32.totalorder %s23, %s26
    %p32 = scmp.eq.s32.totalorder %s13, 0
    %p33 = por %p31, %p32
    %p34 = scmp.ne.s32.totalorder %s23, %s26
    %p35 = scmp.eq.s32.totalorder %s18, 1
    %p36 = por %p34, %p35
    %p37 = scmp.ne.s32.totalorder %s26, %s27
    %p38 = scmp.eq.s32.totalorder %s18, 0
    %p39 = por %p37, %p38
    %p40 = scmp.ne.s32.totalorder %s26, %s27
    %p41 = scmp.eq.s32.totalorder %s19, 1
    %p42 = por %p40, %p41
    %p44 = scmp.ne.s32.totalorder %s27, %s43
    %p45 = scmp.eq.s32.totalorder %s19, 0
    %p46 = por %p44, %p45
    %s48 = sadd.s32 %s47, 1
    %p51 = scmp.eq.s32.totalorder %s13, 1
    %p52 = scmp.ne.s32.totalorder %s47, %s49
    %p53 = scmp.eq.s32.totalorder %s13, 0
    %p54 = por %p52, %p53
    %p55 = scmp.ne.s32.totalorder %s47, %s49
    %p56 = scmp.eq.s32.totalorder %s18, 1
    %p57 = por %p55, %p56
    %p58 = scmp.ne.s32.totalorder %s49, %s50
    %p59 = scmp.eq.s32.totalorder %s18, 0
    %p60 = por %p58, %p59
    %p61 = scmp.ne.s32.totalorder %s49, %s50
    %p62 = scmp.eq.s32.totalorder %s19, 1
    %p63 = por %p61, %p62
    %p65 = scmp.ne.s32.totalorder %s50, %s64
    %p66 = scmp.eq.s32.totalorder %s19, 0
    %p67 = por %p65, %p66
    %s69 = sadd.s32 %s68, 1
    %p72 = scmp.eq.s32.totalorder %s13, 1
    %p73 = scmp.ne.s32.totalorder %s68, %s70
    %p74 = scmp.eq.s32.totalorder %s13, 0
    %p75 = por %p73, %p74
    %p76 = scmp.ne.s32.totalorder %s68, %s70
    %p77 = scmp.eq.s32.totalorder %s18, 1
    %p78 = por %p76, %p77
    %p79 = scmp.ne.s32.totalorder %s70, %s71
    %p80 = scmp.eq.s32.totalorder %s18, 0
    %p81 = por %p79, %p80
    %p82 = scmp.ne.s32.totalorder %s70, %s71
    %p83 = scmp.eq.s32.totalorder %s19, 1
    %p84 = por %p82, %p83
    %p86 = scmp.ne.s32.totalorder %s71, %s85
    %p87 = scmp.eq.s32.totalorder %s19, 0
    %p88 = por %p86, %p87
    %s90 = sadd.s32 %s89, 1
    %p93 = scmp.eq.s32.totalorder %s13, 1
    %p94 = scmp.ne.s32.totalorder %s89, %s91
    %p95 = scmp.eq.s32.totalorder %s13, 0
    %p96 = por %p94, %p95
    %p97 = scmp.ne.s32.totalorder %s89, %s91
    %p98 = scmp.eq.s32.totalorder %s18, 1
    %p99 = por %p97, %p98
    %p100 = scmp.ne.s32.totalorder %s91, %s92
    %p101 = scmp.eq.s32.totalorder %s18, 0
    %p102 = por %p100, %p101
    %p103 = scmp.ne.s32.totalorder %s91, %s92
    %p104 = scmp.eq.s32.totalorder %s19, 1
    %p105 = por %p103, %p104
    %p107 = scmp.ne.s32.totalorder %s92, %s106
    %p108 = scmp.eq.s32.totalorder %s19, 0
    %p109 = por %p107, %p108
    %s111 = sadd.s32 %s110, 1
    %p114 = scmp.eq.s32.totalorder %s13, 1
    %p115 = scmp.ne.s32.totalorder %s110, %s112
    %p116 = scmp.eq.s32.totalorder %s13, 0
    %p117 = por %p115, %p116
    %p118 = scmp.ne.s32.totalorder %s110, %s112
    %p119 = scmp.eq.s32.totalorder %s18, 1
    %p120 = por %p118, %p119
    %p121 = scmp.ne.s32.totalorder %s112, %s113
    %p122 = scmp.eq.s32.totalorder %s18, 0
    %p123 = por %p121, %p122
    %p124 = scmp.ne.s32.totalorder %s112, %s113
    %p125 = scmp.eq.s32.totalorder %s19, 1
    %p126 = por %p124, %p125
    %p128 = scmp.ne.s32.totalorder %s113, %s127
    %p129 = scmp.eq.s32.totalorder %s19, 0
    %p130 = por %p128, %p129
    %s132 = sadd.s32 %s131, 1
    %p135 = scmp.eq.s32.totalorder %s13, 1
    %p136 = scmp.ne.s32.totalorder %s131, %s133
    %p137 = scmp.eq.s32.totalorder %s13, 0
    %p138 = por %p136, %p137
    %p139 = scmp.ne.s32.totalorder %s131, %s133
    %p140 = scmp.eq.s32.totalorder %s18, 1
    %p141 = por %p139, %p140
    %p142 = scmp.ne.s32.totalorder %s133, %s134
    %p143 = scmp.eq.s32.totalorder %s18, 0
    %p144 = por %p142, %p143
    %p145 = scmp.ne.s32.totalorder %s133, %s134
    %p146 = scmp.eq.s32.totalorder %s19, 1
    %p147 = por %p145, %p146
    %p149 = scmp.ne.s32.totalorder %s134, %s148
    %p150 = scmp.eq.s32.totalorder %s19, 0
    %p151 = por %p149, %p150
    %s153 = sadd.s32 %s152, 1
    %p156 = scmp.eq.s32.totalorder %s13, 1
    %p157 = scmp.ne.s32.totalorder %s152, %s154
    %p158 = scmp.eq.s32.totalorder %s13, 0
    %p159 = por %p157, %p158
    %p160 = scmp.ne.s32.totalorder %s152, %s154
    %p161 = scmp.eq.s32.totalorder %s18, 1
    %p162 = por %p160, %p161
    %p163 = scmp.ne.s32.totalorder %s154, %s155
    %p164 = scmp.eq.s32.totalorder %s18, 0
    %p165 = por %p163, %p164
    %p166 = scmp.ne.s32.totalorder %s154, %s155
    %p167 = scmp.eq.s32.totalorder %s19, 1
    %p168 = por %p166, %p167
    %p170 = scmp.ne.s32.totalorder %s155, %s169
    %p171 = scmp.eq.s32.totalorder %s19, 0
    %p172 = por %p170, %p171
    %s173 = ssub.s32 %s13, %s20
    %p174 = scmp.eq.s32.totalorder %s173, 0
    %s176 = sadd.s32 %s175, 1
    %s177 = scalar_select %p174, %s175, %s176
    %p180 = pneg %p174
    %p181 = scmp.eq.s32.totalorder %s13, 1
    %p182 = por %p180, %p181
    %p183 = scmp.ne.s32.totalorder %s175, %s178
    %p184 = scmp.eq.s32.totalorder %s13, 0
    %p185 = por %p183, %p184
    %p186 = scmp.ne.s32.totalorder %s175, %s178
    %p187 = scmp.eq.s32.totalorder %s18, 1
    %p188 = por %p186, %p187
    %p189 = scmp.ne.s32.totalorder %s178, %s179
    %p190 = scmp.eq.s32.totalorder %s18, 0
    %p191 = por %p189, %p190
    %p192 = scmp.ne.s32.totalorder %s178, %s179
    %p193 = scmp.eq.s32.totalorder %s19, 1
    %p194 = por %p192, %p193
    %p196 = scmp.ne.s32.totalorder %s179, %s195
    %p197 = scmp.eq.s32.totalorder %s19, 0
    %p198 = por %p196, %p197
    %p199 = scmp.le.s32.totalorder 1, %s13
    %p200 = scmp.lt.s32.totalorder %s13, 3
    %p201 = pnand %p199, %p200
    %p202 = pneg %p201
    // Predicated region
    $region9: #{bottleneck_forward.1} parent=5 // pred_check
      _
    $region10: #{bottleneck_forward.1} parent=5 // pred_check_branch
      %204 = sbr.rel (%p201) target = $region12
    $region11: #{bottleneck_forward.1} parent=5 // pred_region
      %s205 = ssub.s32 %s13, 1
      // Predicated region
      $region13: #{bottleneck_forward.1} parent=11 // pred_check
        %p206 = pneg %p60
      $region14: #{bottleneck_forward.1} parent=11 // pred_check_branch
        %208 = sbr.rel (%p206) target = $region16
      $region15: #{bottleneck_forward.1} parent=11 // pred_region
        _
      $region16: #{bottleneck_forward.1} parent=11 // pred_fallthru
        _
      // Predicated region
      $region17: #{bottleneck_forward.1} parent=11 // pred_check
        %p209 = pneg %p81
      $region18: #{bottleneck_forward.1} parent=11 // pred_check_branch
        %211 = sbr.rel (%p209) target = $region20
      $region19: #{bottleneck_forward.1} parent=11 // pred_region
        _
      $region20: #{bottleneck_forward.1} parent=11 // pred_fallthru
        _
      // Predicated region
      $region21: #{bottleneck_forward.1} parent=11 // pred_check
        %p212 = pneg %p102
      $region22: #{bottleneck_forward.1} parent=11 // pred_check_branch
        %214 = sbr.rel (%p212) target = $region24
      $region23: #{bottleneck_forward.1} parent=11 // pred_region
        _
      $region24: #{bottleneck_forward.1} parent=11 // pred_fallthru
        _
      // Predicated region
      $region25: #{bottleneck_forward.1} parent=11 // pred_check
        %p215 = pneg %p123
      $region26: #{bottleneck_forward.1} parent=11 // pred_check_branch
        %217 = sbr.rel (%p215) target = $region28
      $region27: #{bottleneck_forward.1} parent=11 // pred_region
        _
      $region28: #{bottleneck_forward.1} parent=11 // pred_fallthru
        _
      // Predicated region
      $region29: #{bottleneck_forward.1} parent=11 // pred_check
        %p218 = pneg %p144
      $region30: #{bottleneck_forward.1} parent=11 // pred_check_branch
        %220 = sbr.rel (%p218) target = $region32
      $region31: #{bottleneck_forward.1} parent=11 // pred_region
        _
      $region32: #{bottleneck_forward.1} parent=11 // pred_fallthru
        _
      // Predicated region
      $region33: #{bottleneck_forward.1} parent=11 // pred_check
        %p221 = pneg %p165
      $region34: #{bottleneck_forward.1} parent=11 // pred_check_branch
        %223 = sbr.rel (%p221) target = $region36
      $region35: #{bottleneck_forward.1} parent=11 // pred_region
        _
      $region36: #{bottleneck_forward.1} parent=11 // pred_fallthru
        _
    $region12: #{bottleneck_forward.1} parent=5 // pred_fallthru
      _
    %p224 = scmp.lt.s32.totalorder %s13, 2
    // Predicated region
    $region37: #{bottleneck_forward.1} parent=5 // pred_check
      %p225 = pneg %p224
    $region38: #{bottleneck_forward.1} parent=5 // pred_check_branch
      %227 = sbr.rel (%p225) target = $region40
    $region39: #{bottleneck_forward.1} parent=5 // pred_region
      // Predicated region
      $region41: #{bottleneck_forward.1} parent=39 // pred_check
        %p228 = pneg %p33
      $region42: #{bottleneck_forward.1} parent=39 // pred_check_branch
        %230 = sbr.rel (%p228) target = $region44
      $region43: #{bottleneck_forward.1} parent=39 // pred_region
        %p231 = scmp.lt.s32.totalorder %s13, 1
        %s232 = scalar_select %p231, %s13, 1
        %s233 = smul.addr %s232, 32
        %s234 = smul.addr %s233, 8
        %s235 = scalar_lea.vmem %s0, %s234
      $region44: #{bottleneck_forward.1} parent=39 // pred_fallthru
        _
    $region40: #{bottleneck_forward.1} parent=5 // pred_fallthru
      _
    %p236 = scmp.le.s32.totalorder 1, %s13
    %p237 = scmp.lt.s32.totalorder %s13, 3
    %p238 = pnand %p236, %p237
    %p239 = pneg %p238
    // Predicated region
    $region45: #{bottleneck_forward.1} parent=5 // pred_check
      _
    $region46: #{bottleneck_forward.1} parent=5 // pred_check_branch
      %241 = sbr.rel (%p238) target = $region48
    $region47: #{bottleneck_forward.1} parent=5 // pred_region
      %s242 = ssub.s32 %s13, 1
      %p243 = scmp.lt.s32.totalorder %s18, 1
      %s244 = scalar_select %p243, %s18, 1
      %s245 = smul.addr %s244, 32
      %s246 = smul.addr %s245, 8
      %s247 = scalar_lea.vmem %s0, %s246
      %p248 = pneg %p39
      %p249 = pneg %p36
      %p250 = pneg %p60
      %p251 = pneg %p57
      %p252 = pneg %p81
      %p253 = pneg %p78
      %p254 = pneg %p102
      %p255 = pneg %p99
      %p256 = pneg %p123
      %p257 = pneg %p120
      %p258 = pneg %p144
      %p259 = pneg %p141
      %p260 = pneg %p165
      %p261 = pneg %p162
      %p262 = pneg %p191
      %p263 = pneg %p188
      %p264 = scmp.lt.s32.totalorder %s18, 1
      %s265 = scalar_select %p264, %s18, 1
      %s266 = smul.addr %s265, 32
      %s267 = smul.addr %s266, 8
      %s268 = scalar_lea.vmem %s7, %s267
      %p269 = scmp.lt.s32.totalorder %s18, 1
      %s270 = scalar_select %p269, %s18, 1
      %s271 = smul.addr %s270, 32
      %s272 = smul.addr %s271, 8
      %s273 = scalar_lea.vmem %s0, %s272
      %p274 = scmp.lt.s32.totalorder %s18, 1
      %s275 = scalar_select %p274, %s18, 1
      %s276 = smul.addr %s275, 32
      %s277 = smul.addr %s276, 8
      %s278 = scalar_lea.vmem %s7, %s277
      %v280 = vld [vmem:[%s273] sm:$0xff]
      %v281 = vld [vmem:[%s273 + $0x8] sm:$0xff]
      %v282 = vld [vmem:[%s273 + $0x10] sm:$0xff]
      %v283 = vld [vmem:[%s273 + $0x18] sm:$0xff]
      %v284 = vld [vmem:[%s273 + $0x20] sm:$0xff]
      %v285 = vld [vmem:[%s273 + $0x28] sm:$0xff]
      %v286 = vld [vmem:[%s273 + $0x30] sm:$0xff]
      %v287 = vld [vmem:[%s273 + $0x38] sm:$0xff]
      %v288 = vld [vmem:[%s273 + $0x40] sm:$0xff]
      %v289 = vld [vmem:[%s273 + $0x48] sm:$0xff]
      %v290 = vld [vmem:[%s273 + $0x50] sm:$0xff]
      %v291 = vld [vmem:[%s273 + $0x58] sm:$0xff]
      %v292 = vld [vmem:[%s273 + $0x60] sm:$0xff]
      %v293 = vld [vmem:[%s273 + $0x68] sm:$0xff]
      %v294 = vld [vmem:[%s273 + $0x70] sm:$0xff]
      %v295 = vld [vmem:[%s273 + $0x78] sm:$0xff]
      %v296 = vld [vmem:[%s273 + $0x80] sm:$0xff]
      %v297 = vld [vmem:[%s273 + $0x88] sm:$0xff]
      %v298 = vld [vmem:[%s273 + $0x90] sm:$0xff]
      %v299 = vld [vmem:[%s273 + $0x98] sm:$0xff]
      %v300 = vld [vmem:[%s273 + $0xa0] sm:$0xff]
      %v301 = vld [vmem:[%s273 + $0xa8] sm:$0xff]
      %v302 = vld [vmem:[%s273 + $0xb0] sm:$0xff]
      %v303 = vld [vmem:[%s273 + $0xb8] sm:$0xff]
      %v304 = vld [vmem:[%s273 + $0xc0] sm:$0xff]
      %v305 = vld [vmem:[%s273 + $0xc8] sm:$0xff]
      %v306 = vld [vmem:[%s273 + $0xd0] sm:$0xff]
      %v307 = vld [vmem:[%s273 + $0xd8] sm:$0xff]
      %v308 = vld [vmem:[%s273 + $0xe0] sm:$0xff]
      %v309 = vld [vmem:[%s273 + $0xe8] sm:$0xff]
      %v310 = vld [vmem:[%s273 + $0xf0] sm:$0xff]
      %v311 = vld [vmem:[%s273 + $0xf8] sm:$0xff]
      %v312 = vpack.c.bf16 %v281, %v280
      %v313 = vpack.c.bf16 %v283, %v282
      %v314 = vpack.c.bf16 %v285, %v284
      %v315 = vpack.c.bf16 %v287, %v286
      %v316 = vpack.c.bf16 %v289, %v288
      %v317 = vpack.c.bf16 %v291, %v290
      %v318 = vpack.c.bf16 %v293, %v292
      %v319 = vpack.c.bf16 %v295, %v294
      %v320 = vpack.c.bf16 %v297, %v296
      %v321 = vpack.c.bf16 %v299, %v298
      %v322 = vpack.c.bf16 %v301, %v300
      %v323 = vpack.c.bf16 %v303, %v302
      %v324 = vpack.c.bf16 %v305, %v304
      %v325 = vpack.c.bf16 %v307, %v306
      %v326 = vpack.c.bf16 %v309, %v308
      %v327 = vpack.c.bf16 %v311, %v310
      %v328 = vld [vmem:[%s1] sm:$0xf]
      %v329 = vld [vmem:[%s1 + $0x4] sm:$0xf]
      %v330 = vld [vmem:[%s2] sm:$0x1]
      %v332 = vlaneseq
      %v333 = vshrl.u32 %v332, 7
      %v334 = vsub.s32 0, %v333
      %v335 = vrot.slane %v330, %v334
      %v339 = vunpack.c.l.b16 %v328
      %v340 = vunpack.c.l.b16 %v329
      %v341 = vpack.c.b16 %v340, %v339
      %vm343 = vcmask 130048
      %v345 = vsel %vm343, %v312, 0
      %v348 = vsel %vm343, %v313, 0
      %v351 = vsel %vm343, %v314, 0
      %v354 = vsel %vm343, %v315, 0
      %v357 = vsel %vm343, %v316, 0
      %v360 = vsel %vm343, %v317, 0
      %v363 = vsel %vm343, %v318, 0
      %v366 = vsel %vm343, %v319, 0
      %v369 = vsel %vm343, %v320, 0
      %v372 = vsel %vm343, %v321, 0
      %v375 = vsel %vm343, %v322, 0
      %v378 = vsel %vm343, %v323, 0
      %v381 = vsel %vm343, %v324, 0
      %v384 = vsel %vm343, %v325, 0
      %v387 = vsel %vm343, %v326, 0
      %v390 = vsel %vm343, %v327, 0
      %392 = vmatprep.subr.bf16.mxu0 0
      %393 = vmatpush1.bf16.msra.mxu0 %v341
      %394 = vmatprep.subr.bf16.mxu0 0
      %395 = vmatpush1.bf16.msra.mxu0 0
      %396 = vmatprep.subr.bf16.mxu0 0
      %397 = vmatpush1.bf16.msra.mxu0 0
      %398 = vmatprep.subr.bf16.mxu0 0
      %399 = vmatpush1.bf16.msra.mxu0 0
      %400 = vmatprep.subr.bf16.mxu0 0
      %401 = vmatpush1.bf16.msra.mxu0 0
      %402 = vmatprep.subr.bf16.mxu0 0
      %403 = vmatpush1.bf16.msra.mxu0 0
      %404 = vmatprep.subr.bf16.mxu0 0
      %405 = vmatpush1.bf16.msra.mxu0 0
      %406 = vmatprep.subr.bf16.mxu0 0
      %407 = vmatpush1.bf16.msra.mxu0 0
      %408 = vmatprep.subr.bf16.mxu0 0
      %409 = vmatpush1.bf16.msra.mxu0 0
      %410 = vmatprep.subr.bf16.mxu0 0
      %411 = vmatpush1.bf16.msra.mxu0 0
      %412 = vmatprep.subr.bf16.mxu0 0
      %413 = vmatpush1.bf16.msra.mxu0 0
      %414 = vmatprep.subr.bf16.mxu0 0
      %415 = vmatpush1.bf16.msra.mxu0 0
      %416 = vmatprep.subr.bf16.mxu0 0
      %417 = vmatpush1.bf16.msra.mxu0 0
      %418 = vmatprep.subr.bf16.mxu0 0
      %419 = vmatpush1.bf16.msra.mxu0 0
      %420 = vmatprep.subr.bf16.mxu0 0
      %421 = vmatpush1.bf16.msra.mxu0 0
      %422 = vmatprep.subr.bf16.mxu0 0
      %423 = vmatpush1.bf16.msra.mxu0 0
      %424 = vmatprep.mubr.bf16.mxu0 0
      %425 = vmatmul.mubr.bf16.gmra.mrb[0].mxu0 %v345
      %v426 = vpop.f32.mrb[0].mxu0
      %v427 = vadd.f32 %v335, %v426
      %v428 = vpop.f32.mrb[0].mxu0
      %v429 = vpop.f32.mrb[0].mxu0
      %v430 = vadd.f32 %v335, %v429
      %v431 = vpop.f32.mrb[0].mxu0
      %432 = vmatprep.mubr.bf16.mxu0 0
      %433 = vmatmul.mubr.bf16.gmra.mrb[0].mxu0 %v348
      %v434 = vpop.f32.mrb[0].mxu0
      %v435 = vadd.f32 %v335, %v434
      %v436 = vpop.f32.mrb[0].mxu0
      %v437 = vpop.f32.mrb[0].mxu0
      %v438 = vadd.f32 %v335, %v437
      %v439 = vpop.f32.mrb[0].mxu0
      %440 = vmatprep.mubr.bf16.mxu0 0
      %441 = vmatmul.mubr.bf16.gmra.mrb[0].mxu0 %v351
      %v442 = vpop.f32.mrb[0].mxu0
      %v443 = vadd.f32 %v335, %v442
      %v444 = vpop.f32.mrb[0].mxu0
      %v445 = vpop.f32.mrb[0].mxu0
      %v446 = vadd.f32 %v335, %v445
      %v447 = vpop.f32.mrb[0].mxu0
      %448 = vmatprep.mubr.bf16.mxu0 0
      %449 = vmatmul.mubr.bf16.gmra.mrb[0].mxu0 %v354
      %v450 = vpop.f32.mrb[0].mxu0
      %v451 = vadd.f32 %v335, %v450
      %v452 = vpop.f32.mrb[0].mxu0
      %v453 = vpop.f32.mrb[0].mxu0
      %v454 = vadd.f32 %v335, %v453
      %v455 = vpop.f32.mrb[0].mxu0
      %456 = vmatprep.mubr.bf16.mxu0 0
      %457 = vmatmul.mubr.bf16.gmra.mrb[0].mxu0 %v357
      %v458 = vpop.f32.mrb[0].mxu0
      %v459 = vadd.f32 %v335, %v458
      %v460 = vpop.f32.mrb[0].mxu0
      %v461 = vpop.f32.mrb[0].mxu0
      %v462 = vadd.f32 %v335, %v461
      %v463 = vpop.f32.mrb[0].mxu0
      %464 = vmatprep.mubr.bf16.mxu0 0
      %465 = vmatmul.mubr.bf16.gmra.mrb[0].mxu0 %v360
      %v466 = vpop.f32.mrb[0].mxu0
      %v467 = vadd.f32 %v335, %v466
      %v468 = vpop.f32.mrb[0].mxu0
      %v469 = vpop.f32.mrb[0].mxu0
      %v470 = vadd.f32 %v335, %v469
      %v471 = vpop.f32.mrb[0].mxu0
      %472 = vmatprep.mubr.bf16.mxu0 0
      %473 = vmatmul.mubr.bf16.gmra.mrb[0].mxu0 %v363
      %v474 = vpop.f32.mrb[0].mxu0
      %v475 = vadd.f32 %v335, %v474
      %v476 = vpop.f32.mrb[0].mxu0
      %v477 = vpop.f32.mrb[0].mxu0
      %v478 = vadd.f32 %v335, %v477
      %v479 = vpop.f32.mrb[0].mxu0
      %480 = vmatprep.mubr.bf16.mxu0 0
      %481 = vmatmul.mubr.bf16.gmra.mrb[0].mxu0 %v366
      %v482 = vpop.f32.mrb[0].mxu0
      %v483 = vadd.f32 %v335, %v482
      %v484 = vpop.f32.mrb[0].mxu0
      %v485 = vpop.f32.mrb[0].mxu0
      %v486 = vadd.f32 %v335, %v485
      %v487 = vpop.f32.mrb[0].mxu0
      %488 = vmatprep.mubr.bf16.mxu0 0
      %489 = vmatmul.mubr.bf16.gmra.mrb[0].mxu0 %v369
      %v490 = vpop.f32.mrb[0].mxu0
      %v491 = vadd.f32 %v335, %v490
      %v492 = vpop.f32.mrb[0].mxu0
      %v493 = vpop.f32.mrb[0].mxu0
      %v494 = vadd.f32 %v335, %v493
      %v495 = vpop.f32.mrb[0].mxu0
      %496 = vmatprep.mubr.bf16.mxu0 0
      %497 = vmatmul.mubr.bf16.gmra.mrb[0].mxu0 %v372
      %v498 = vpop.f32.mrb[0].mxu0
      %v499 = vadd.f32 %v335, %v498
      %v500 = vpop.f32.mrb[0].mxu0
      %v501 = vpop.f32.mrb[0].mxu0
      %v502 = vadd.f32 %v335, %v501
      %v503 = vpop.f32.mrb[0].mxu0
      %504 = vmatprep.mubr.bf16.mxu0 0
      %505 = vmatmul.mubr.bf16.gmra.mrb[0].mxu0 %v375
      %v506 = vpop.f32.mrb[0].mxu0
      %v507 = vadd.f32 %v335, %v506
      %v508 = vpop.f32.mrb[0].mxu0
      %v509 = vpop.f32.mrb[0].mxu0
      %v510 = vadd.f32 %v335, %v509
      %v511 = vpop.f32.mrb[0].mxu0
      %512 = vmatprep.mubr.bf16.mxu0 0
      %513 = vmatmul.mubr.bf16.gmra.mrb[0].mxu0 %v378
      %v514 = vpop.f32.mrb[0].mxu0
      %v515 = vadd.f32 %v335, %v514
      %v516 = vpop.f32.mrb[0].mxu0
      %v517 = vpop.f32.mrb[0].mxu0
      %v518 = vadd.f32 %v335, %v517
      %v519 = vpop.f32.mrb[0].mxu0
      %520 = vmatprep.mubr.bf16.mxu0 0
      %521 = vmatmul.mubr.bf16.gmra.mrb[0].mxu0 %v381
      %v522 = vpop.f32.mrb[0].mxu0
      %v523 = vadd.f32 %v335, %v522
      %v524 = vpop.f32.mrb[0].mxu0
      %v525 = vpop.f32.mrb[0].mxu0
      %v526 = vadd.f32 %v335, %v525
      %v527 = vpop.f32.mrb[0].mxu0
      %528 = vmatprep.mubr.bf16.mxu0 0
      %529 = vmatmul.mubr.bf16.gmra.mrb[0].mxu0 %v384
      %v530 = vpop.f32.mrb[0].mxu0
      %v531 = vadd.f32 %v335, %v530
      %v532 = vpop.f32.mrb[0].mxu0
      %v533 = vpop.f32.mrb[0].mxu0
      %v534 = vadd.f32 %v335, %v533
      %v535 = vpop.f32.mrb[0].mxu0
      %536 = vmatprep.mubr.bf16.mxu0 0
      %537 = vmatmul.mubr.bf16.gmra.mrb[0].mxu0 %v387
      %v538 = vpop.f32.mrb[0].mxu0
      %v539 = vadd.f32 %v335, %v538
      %v540 = vpop.f32.mrb[0].mxu0
      %v541 = vpop.f32.mrb[0].mxu0
      %v542 = vadd.f32 %v335, %v541
      %v543 = vpop.f32.mrb[0].mxu0
      %544 = vmatprep.mubr.bf16.mxu0 0
      %545 = vmatmul.mubr.bf16.gmra.mrb[0].mxu0 %v390
      %v546 = vpop.f32.mrb[0].mxu0
      %v547 = vadd.f32 %v335, %v546
      %v548 = vpop.f32.mrb[0].mxu0
      %v549 = vpop.f32.mrb[0].mxu0
      %v550 = vadd.f32 %v335, %v549
      %v551 = vpop.f32.mrb[0].mxu0
      %552 = vdwg.mxu0
      %v553 = vmax.f32 %v427, 0.0
      %v554 = vmax.f32 %v430, 0.0
      %v555 = vmax.f32 %v435, 0.0
      %v556 = vmax.f32 %v438, 0.0
      %v557 = vmax.f32 %v443, 0.0
      %v558 = vmax.f32 %v446, 0.0
      %v559 = vmax.f32 %v451, 0.0
      %v560 = vmax.f32 %v454, 0.0
      %v561 = vmax.f32 %v459, 0.0
      %v562 = vmax.f32 %v462, 0.0
      %v563 = vmax.f32 %v467, 0.0
      %v564 = vmax.f32 %v470, 0.0
      %v565 = vmax.f32 %v475, 0.0
      %v566 = vmax.f32 %v478, 0.0
      %v567 = vmax.f32 %v483, 0.0
      %v568 = vmax.f32 %v486, 0.0
      %v569 = vmax.f32 %v491, 0.0
      %v570 = vmax.f32 %v494, 0.0
      %v571 = vmax.f32 %v499, 0.0
      %v572 = vmax.f32 %v502, 0.0
      %v573 = vmax.f32 %v507, 0.0
      %v574 = vmax.f32 %v510, 0.0
      %v575 = vmax.f32 %v515, 0.0
      %v576 = vmax.f32 %v518, 0.0
      %v577 = vmax.f32 %v523, 0.0
      %v578 = vmax.f32 %v526, 0.0
      %v579 = vmax.f32 %v531, 0.0
      %v580 = vmax.f32 %v534, 0.0
      %v581 = vmax.f32 %v539, 0.0
      %v582 = vmax.f32 %v542, 0.0
      %v583 = vmax.f32 %v547, 0.0
      %v584 = vmax.f32 %v550, 0.0
      %v585 = vpack.c.bf16 %v554, %v553
      %v586 = vpack.c.bf16 %v556, %v555
      %v587 = vpack.c.bf16 %v558, %v557
      %v588 = vpack.c.bf16 %v560, %v559
      %v589 = vpack.c.bf16 %v562, %v561
      %v590 = vpack.c.bf16 %v564, %v563
      %v591 = vpack.c.bf16 %v566, %v565
      %v592 = vpack.c.bf16 %v568, %v567
      %v593 = vpack.c.bf16 %v570, %v569
      %v594 = vpack.c.bf16 %v572, %v571
      %v595 = vpack.c.bf16 %v574, %v573
      %v596 = vpack.c.bf16 %v576, %v575
      %v597 = vpack.c.bf16 %v578, %v577
      %v598 = vpack.c.bf16 %v580, %v579
      %v599 = vpack.c.bf16 %v582, %v581
      %v600 = vpack.c.bf16 %v584, %v583
      %601 = vst [vmem:[#allocation2] sm:$0xf] 0
      %602 = vst [vmem:[#allocation2 + $0x4] sm:$0xf] 0
      %603 = vst [vmem:[#allocation2 + $0x8] sm:$0x1] 0
      %604 = vst [vmem:[#allocation2 + $0xc] sm:$0xf] 0
      %605 = vst [vmem:[#allocation2 + $0x10] sm:$0xf] 0
      %606 = vst [vmem:[#allocation2 + $0x14] sm:$0x1] 0
      %607 = vst [vmem:[#allocation2 + $0x18] sm:$0xf] 0
      %608 = vst [vmem:[#allocation2 + $0x1c] sm:$0xf] 0
      %609 = vst [vmem:[#allocation2 + $0x20] sm:$0x1] 0
      %610 = vst [vmem:[#allocation2 + $0x24] sm:$0xf] 0
      %611 = vst [vmem:[#allocation2 + $0x28] sm:$0xf] 0
      %612 = vst [vmem:[#allocation2 + $0x2c] sm:$0x1] 0
      %613 = vst [vmem:[#allocation2 + $0x30] sm:$0xf] 0
      %614 = vst [vmem:[#allocation2 + $0x34] sm:$0xf] 0
      %615 = vst [vmem:[#allocation2 + $0x38] sm:$0x1] 0
      %616 = vst [vmem:[#allocation2 + $0x3c] sm:$0xf] 0
      %617 = vst [vmem:[#allocation2 + $0x40] sm:$0xf] 0
      %618 = vst [vmem:[#allocation2 + $0x44] sm:$0x1] 0
      %619 = vst [vmem:[#allocation2 + $0x48] sm:$0xf] 0
      %620 = vst [vmem:[#allocation2 + $0x4c] sm:$0xf] 0
      %621 = vst [vmem:[#allocation2 + $0x50] sm:$0x1] 0
      %622 = vst [vmem:[#allocation2 + $0x54] sm:$0xf] 0
      %623 = vst [vmem:[#allocation2 + $0x58] sm:$0xf] 0
      %624 = vst [vmem:[#allocation2 + $0x5c] sm:$0x1] 0
      %625 = vst [vmem:[#allocation2 + $0x60] sm:$0xf] 0
      %626 = vst [vmem:[#allocation2 + $0x64] sm:$0xf] 0
      %627 = vst [vmem:[#allocation2 + $0x68] sm:$0x1] 0
      %628 = vst [vmem:[#allocation2 + $0x6c] sm:$0xf] 0
      %629 = vst [vmem:[#allocation2 + $0x70] sm:$0xf] 0
      %630 = vst [vmem:[#allocation2 + $0x74] sm:$0x1] 0
      %631 = vst [vmem:[#allocation2 + $0x78] sm:$0xf] 0
      %632 = vst [vmem:[#allocation2 + $0x7c] sm:$0xf] 0
      %633 = vst [vmem:[#allocation2 + $0x80] sm:$0x1] 0
      %634 = vst [vmem:[#allocation2 + $0x84] sm:$0xf] 0
      %635 = vst [vmem:[#allocation2 + $0x88] sm:$0xf] 0
      %636 = vst [vmem:[#allocation2 + $0x8c] sm:$0x1] 0
      %637 = vst [vmem:[#allocation2 + $0x90] sm:$0xf] 0
      %638 = vst [vmem:[#allocation2 + $0x94] sm:$0xf] 0
      %639 = vst [vmem:[#allocation2 + $0x98] sm:$0x1] 0
      %640 = vst [vmem:[#allocation2 + $0x9c] sm:$0xf] 0
      %641 = vst [vmem:[#allocation2 + $0xa0] sm:$0xf] 0
      %642 = vst [vmem:[#allocation2 + $0xa4] sm:$0x1] 0
      %643 = vst [vmem:[#allocation2 + $0xa8] sm:$0xf] 0
      %644 = vst [vmem:[#allocation2 + $0xac] sm:$0xf] 0
      %645 = vst [vmem:[#allocation2 + $0xb0] sm:$0x1] 0
      %646 = vst [vmem:[#allocation2 + $0xb4] sm:$0xf] 0
      %647 = vst [vmem:[#allocation2 + $0xb8] sm:$0xf] 0
      %648 = vst [vmem:[#allocation2 + $0xbc] sm:$0x1] 0
      %649 = vst [vmem:[#allocation2 + $0xc0] sm:$0xf] 0
      %650 = vst [vmem:[#allocation2 + $0xc4] sm:$0xf] 0
      %651 = vst [vmem:[#allocation2 + $0xc8] sm:$0x1] 0
      %652 = vst [vmem:[#allocation2 + $0xcc] sm:$0xf] 0
      %653 = vst [vmem:[#allocation2 + $0xd0] sm:$0xf] 0
      %654 = vst [vmem:[#allocation2 + $0xd4] sm:$0x1] 0
      %v671 = vunpack.c.l.b16 %v585
      %v672 = vunpack.c.h.b16 %v585
      %v673 = vunpack.c.l.b16 %v586
      %v674 = vunpack.c.h.b16 %v586
      %v675 = vunpack.c.l.b16 %v587
      %v676 = vunpack.c.h.b16 %v587
      %v677 = vunpack.c.l.b16 %v588
      %v678 = vunpack.c.h.b16 %v588
      %v679 = vunpack.c.l.b16 %v589
      %v680 = vunpack.c.h.b16 %v589
      %v681 = vunpack.c.l.b16 %v590
      %v682 = vunpack.c.h.b16 %v590
      %v683 = vunpack.c.l.b16 %v591
      %v684 = vunpack.c.h.b16 %v591
      %v685 = vunpack.c.l.b16 %v592
      %v686 = vunpack.c.h.b16 %v592
      %v687 = vunpack.c.l.b16 %v593
      %v688 = vunpack.c.h.b16 %v593
      %v689 = vunpack.c.l.b16 %v594
      %v690 = vunpack.c.h.b16 %v594
      %v691 = vunpack.c.l.b16 %v595
      %v692 = vunpack.c.h.b16 %v595
      %v693 = vunpack.c.l.b16 %v596
      %v694 = vunpack.c.h.b16 %v596
      %v695 = vunpack.c.l.b16 %v597
      %v696 = vunpack.c.h.b16 %v597
      %v697 = vunpack.c.l.b16 %v598
      %v698 = vunpack.c.h.b16 %v598
      %v699 = vunpack.c.l.b16 %v599
      %v700 = vunpack.c.h.b16 %v599
      %v701 = vunpack.c.l.b16 %v600
      %v702 = vunpack.c.h.b16 %v600
      %v703 = vpack.c.b16 %v671, %v671
      %v704 = vpack.c.b16 %v672, %v672
      %v705 = vpack.c.b16 %v673, %v673
      %v706 = vpack.c.b16 %v674, %v674
      %v707 = vpack.c.b16 %v675, %v675
      %v708 = vpack.c.b16 %v676, %v676
      %v709 = vpack.c.b16 %v677, %v677
      %v710 = vpack.c.b16 %v678, %v678
      %v711 = vpack.c.b16 %v679, %v679
      %v712 = vpack.c.b16 %v680, %v680
      %v713 = vpack.c.b16 %v681, %v681
      %v714 = vpack.c.b16 %v682, %v682
      %v715 = vpack.c.b16 %v683, %v683
      %v716 = vpack.c.b16 %v684, %v684
      %v717 = vpack.c.b16 %v685, %v685
      %v718 = vpack.c.b16 %v686, %v686
      %v719 = vpack.c.b16 %v687, %v687
      %v720 = vpack.c.b16 %v688, %v688
      %v721 = vpack.c.b16 %v689, %v689
      %v722 = vpack.c.b16 %v690, %v690
      %v723 = vpack.c.b16 %v691, %v691
      %v724 = vpack.c.b16 %v692, %v692
      %v725 = vpack.c.b16 %v693, %v693
      %v726 = vpack.c.b16 %v694, %v694
      %v727 = vpack.c.b16 %v695, %v695
      %v728 = vpack.c.b16 %v696, %v696
      %v729 = vpack.c.b16 %v697, %v697
      %v730 = vpack.c.b16 %v698, %v698
      %v731 = vpack.c.b16 %v699, %v699
      %v732 = vpack.c.b16 %v700, %v700
      %v733 = vpack.c.b16 %v701, %v701
      %v734 = vpack.c.b16 %v702, %v702
      %vm735 = vsmask.f32 256
      %vm736 = vsmask.f32 4368
      %vm737 = vmor %vm735, %vm736
      %v739 = vshrl.u32 %v703, 16
      %v741 = vrot.slane %v739, 7
      %v742 = vshll.u32 %v703, 16
      %v744 = vor.u32 %v741, %v742
      %v745 = vrot.slane %v741, 4
      %v747 = vshrl.u32 %v704, 16
      %v749 = vrot.slane %v747, 7
      %v750 = vshll.u32 %v704, 16
      %v752 = vor.u32 %v749, %v750
      %v753 = vsel %vm737, %v745, %v752
      %v754 = vrot.slane %v749, 4
      %v756 = vshrl.u32 %v705, 16
      %v758 = vrot.slane %v756, 7
      %v759 = vshll.u32 %v705, 16
      %v761 = vor.u32 %v758, %v759
      %v762 = vrot.slane %v758, 4
      %v764 = vshrl.u32 %v706, 16
      %v766 = vrot.slane %v764, 7
      %v767 = vshll.u32 %v706, 16
      %v769 = vor.u32 %v766, %v767
      %v770 = vsel %vm737, %v762, %v769
      %v771 = vrot.slane %v766, 4
      %v773 = vshrl.u32 %v707, 16
      %v775 = vrot.slane %v773, 7
      %v776 = vshll.u32 %v707, 16
      %v778 = vor.u32 %v775, %v776
      %v779 = vrot.slane %v775, 4
      %v781 = vshrl.u32 %v708, 16
      %v783 = vrot.slane %v781, 7
      %v784 = vshll.u32 %v708, 16
      %v786 = vor.u32 %v783, %v784
      %v787 = vsel %vm737, %v779, %v786
      %v788 = vrot.slane %v783, 4
      %v790 = vshrl.u32 %v709, 16
      %v792 = vrot.slane %v790, 7
      %v793 = vshll.u32 %v709, 16
      %v795 = vor.u32 %v792, %v793
      %v796 = vrot.slane %v792, 4
      %v798 = vshrl.u32 %v710, 16
      %v800 = vrot.slane %v798, 7
      %v801 = vshll.u32 %v710, 16
      %v803 = vor.u32 %v800, %v801
      %v804 = vsel %vm737, %v796, %v803
      %v805 = vrot.slane %v800, 4
      %v807 = vshrl.u32 %v711, 16
      %v809 = vrot.slane %v807, 7
      %v810 = vshll.u32 %v711, 16
      %v812 = vor.u32 %v809, %v810
      %v813 = vrot.slane %v809, 4
      %v815 = vshrl.u32 %v712, 16
      %v817 = vrot.slane %v815, 7
      %v818 = vshll.u32 %v712, 16
      %v820 = vor.u32 %v817, %v818
      %v821 = vsel %vm737, %v813, %v820
      %v822 = vrot.slane %v817, 4
      %v824 = vshrl.u32 %v713, 16
      %v826 = vrot.slane %v824, 7
      %v827 = vshll.u32 %v713, 16
      %v829 = vor.u32 %v826, %v827
      %v830 = vrot.slane %v826, 4
      %v832 = vshrl.u32 %v714, 16
      %v834 = vrot.slane %v832, 7
      %v835 = vshll.u32 %v714, 16
      %v837 = vor.u32 %v834, %v835
      %v838 = vsel %vm737, %v830, %v837
      %v839 = vrot.slane %v834, 4
      %v841 = vshrl.u32 %v715, 16
      %v843 = vrot.slane %v841, 7
      %v844 = vshll.u32 %v715, 16
      %v846 = vor.u32 %v843, %v844
      %v847 = vrot.slane %v843, 4
      %v849 = vshrl.u32 %v716, 16
      %v851 = vrot.slane %v849, 7
      %v852 = vshll.u32 %v716, 16
      %v854 = vor.u32 %v851, %v852
      %v855 = vsel %vm737, %v847, %v854
      %v856 = vrot.slane %v851, 4
      %v858 = vshrl.u32 %v717, 16
      %v860 = vrot.slane %v858, 7
      %v861 = vshll.u32 %v717, 16
      %v863 = vor.u32 %v860, %v861
      %v864 = vrot.slane %v860, 4
      %v866 = vshrl.u32 %v718, 16
      %v868 = vrot.slane %v866, 7
      %v869 = vshll.u32 %v718, 16
      %v871 = vor.u32 %v868, %v869
      %v872 = vsel %vm737, %v864, %v871
      %v873 = vrot.slane %v868, 4
      %v875 = vshrl.u32 %v719, 16
      %v877 = vrot.slane %v875, 7
      %v878 = vshll.u32 %v719, 16
      %v880 = vor.u32 %v877, %v878
      %v881 = vrot.slane %v877, 4
      %v883 = vshrl.u32 %v720, 16
      %v885 = vrot.slane %v883, 7
      %v886 = vshll.u32 %v720, 16
      %v888 = vor.u32 %v885, %v886
      %v889 = vsel %vm737, %v881, %v888
      %v890 = vrot.slane %v885, 4
      %v892 = vshrl.u32 %v721, 16
      %v894 = vrot.slane %v892, 7
      %v895 = vshll.u32 %v721, 16
      %v897 = vor.u32 %v894, %v895
      %v898 = vrot.slane %v894, 4
      %v900 = vshrl.u32 %v722, 16
      %v902 = vrot.slane %v900, 7
      %v903 = vshll.u32 %v722, 16
      %v905 = vor.u32 %v902, %v903
      %v906 = vsel %vm737, %v898, %v905
      %v907 = vrot.slane %v902, 4
      %v909 = vshrl.u32 %v723, 16
      %v911 = vrot.slane %v909, 7
      %v912 = vshll.u32 %v723, 16
      %v914 = vor.u32 %v911, %v912
      %v915 = vrot.slane %v911, 4
      %v917 = vshrl.u32 %v724, 16
      %v919 = vrot.slane %v917, 7
      %v920 = vshll.u32 %v724, 16
      %v922 = vor.u32 %v919, %v920
      %v923 = vsel %vm737, %v915, %v922
      %v924 = vrot.slane %v919, 4
      %v926 = vshrl.u32 %v725, 16
      %v928 = vrot.slane %v926, 7
      %v929 = vshll.u32 %v725, 16
      %v931 = vor.u32 %v928, %v929
      %v932 = vrot.slane %v928, 4
      %v934 = vshrl.u32 %v726, 16
      %v936 = vrot.slane %v934, 7
      %v937 = vshll.u32 %v726, 16
      %v939 = vor.u32 %v936, %v937
      %v940 = vsel %vm737, %v932, %v939
      %v941 = vrot.slane %v936, 4
      %v943 = vshrl.u32 %v727, 16
      %v945 = vrot.slane %v943, 7
      %v946 = vshll.u32 %v727, 16
      %v948 = vor.u32 %v945, %v946
      %v949 = vrot.slane %v945, 4
      %v951 = vshrl.u32 %v728, 16
      %v953 = vrot.slane %v951, 7
      %v954 = vshll.u32 %v728, 16
      %v956 = vor.u32 %v953, %v954
      %v957 = vsel %vm737, %v949, %v956
      %v958 = vrot.slane %v953, 4
      %v960 = vshrl.u32 %v729, 16
      %v962 = vrot.slane %v960, 7
      %v963 = vshll.u32 %v729, 16
      %v965 = vor.u32 %v962, %v963
      %v966 = vrot.slane %v962, 4
      %v968 = vshrl.u32 %v730, 16
      %v970 = vrot.slane %v968, 7
      %v971 = vshll.u32 %v730, 16
      %v973 = vor.u32 %v970, %v971
      %v974 = vsel %vm737, %v966, %v973
      %v975 = vrot.slane %v970, 4
      %v977 = vshrl.u32 %v731, 16
      %v979 = vrot.slane %v977, 7
      %v980 = vshll.u32 %v731, 16
      %v982 = vor.u32 %v979, %v980
      %v983 = vrot.slane %v979, 4
      %v985 = vshrl.u32 %v732, 16
      %v987 = vrot.slane %v985, 7
      %v988 = vshll.u32 %v732, 16
      %v990 = vor.u32 %v987, %v988
      %v991 = vsel %vm737, %v983, %v990
      %v992 = vrot.slane %v987, 4
      %v994 = vshrl.u32 %v733, 16
      %v996 = vrot.slane %v994, 7
      %v997 = vshll.u32 %v733, 16
      %v999 = vor.u32 %v996, %v997
      %v1000 = vrot.slane %v996, 4
      %v1002 = vshrl.u32 %v734, 16
      %v1004 = vrot.slane %v1002, 7
      %v1005 = vshll.u32 %v734, 16
      %v1007 = vor.u32 %v1004, %v1005
      %v1008 = vsel %vm737, %v1000, %v1007
      %v1009 = vrot.slane %v1004, 4
      %s1058 = scalar_lea.vmem [#allocation2], 12
      %vm1059 = vcmask 1043456
      %vm1060 = vsmask.f32 7938
      %vm1061 = vmand %vm1059, %vm1060
      %v1062 = vld [vmem:[%s1058] sm:$0xf]
      %v1063 = vsel %vm1061, %v744, %v1062
      %1064 = vst [vmem:[%s1058] sm:$0xf] %v1063
      %1065 = vst [vmem:[%s1058 + $0x4] sm:$0xf] %v753
      %vm1066 = vcmask 1040384
      %vm1067 = vmand %vm1066, %vm735
      %v1068 = vld [vmem:[%s1058 + $0x8] sm:$0x1]
      %v1069 = vsel %vm1067, %v754, %v1068
      %1070 = vst [vmem:[%s1058 + $0x8] sm:$0x1] %v1069
      %v1071 = vld [vmem:[%s1058 + $0xc] sm:$0xf]
      %v1072 = vsel %vm1061, %v761, %v1071
      %1073 = vst [vmem:[%s1058 + $0xc] sm:$0xf] %v1072
      %1074 = vst [vmem:[%s1058 + $0x10] sm:$0xf] %v770
      %v1075 = vld [vmem:[%s1058 + $0x14] sm:$0x1]
      %v1076 = vsel %vm1067, %v771, %v1075
      %1077 = vst [vmem:[%s1058 + $0x14] sm:$0x1] %v1076
      %v1078 = vld [vmem:[%s1058 + $0x18] sm:$0xf]
      %v1079 = vsel %vm1061, %v778, %v1078
      %1080 = vst [vmem:[%s1058 + $0x18] sm:$0xf] %v1079
      %1081 = vst [vmem:[%s1058 + $0x1c] sm:$0xf] %v787
      %v1082 = vld [vmem:[%s1058 + $0x20] sm:$0x1]
      %v1083 = vsel %vm1067, %v788, %v1082
      %1084 = vst [vmem:[%s1058 + $0x20] sm:$0x1] %v1083
      %v1085 = vld [vmem:[%s1058 + $0x24] sm:$0xf]
      %v1086 = vsel %vm1061, %v795, %v1085
      %1087 = vst [vmem:[%s1058 + $0x24] sm:$0xf] %v1086
      %1088 = vst [vmem:[%s1058 + $0x28] sm:$0xf] %v804
      %v1089 = vld [vmem:[%s1058 + $0x2c] sm:$0x1]
      %v1090 = vsel %vm1067, %v805, %v1089
      %1091 = vst [vmem:[%s1058 + $0x2c] sm:$0x1] %v1090
      %v1092 = vld [vmem:[%s1058 + $0x30] sm:$0xf]
      %v1093 = vsel %vm1061, %v812, %v1092
      %1094 = vst [vmem:[%s1058 + $0x30] sm:$0xf] %v1093
      %1095 = vst [vmem:[%s1058 + $0x34] sm:$0xf] %v821
      %v1096 = vld [vmem:[%s1058 + $0x38] sm:$0x1]
      %v1097 = vsel %vm1067, %v822, %v1096
      %1098 = vst [vmem:[%s1058 + $0x38] sm:$0x1] %v1097
      %v1099 = vld [vmem:[%s1058 + $0x3c] sm:$0xf]
      %v1100 = vsel %vm1061, %v829, %v1099
      %1101 = vst [vmem:[%s1058 + $0x3c] sm:$0xf] %v1100
      %1102 = vst [vmem:[%s1058 + $0x40] sm:$0xf] %v838
      %v1103 = vld [vmem:[%s1058 + $0x44] sm:$0x1]
      %v1104 = vsel %vm1067, %v839, %v1103
      %1105 = vst [vmem:[%s1058 + $0x44] sm:$0x1] %v1104
      %v1106 = vld [vmem:[%s1058 + $0x48] sm:$0xf]
      %v1107 = vsel %vm1061, %v846, %v1106
      %1108 = vst [vmem:[%s1058 + $0x48] sm:$0xf] %v1107
      %1109 = vst [vmem:[%s1058 + $0x4c] sm:$0xf] %v855
      %v1110 = vld [vmem:[%s1058 + $0x50] sm:$0x1]
      %v1111 = vsel %vm1067, %v856, %v1110
      %1112 = vst [vmem:[%s1058 + $0x50] sm:$0x1] %v1111
      %v1113 = vld [vmem:[%s1058 + $0x54] sm:$0xf]
      %v1114 = vsel %vm1061, %v863, %v1113
      %1115 = vst [vmem:[%s1058 + $0x54] sm:$0xf] %v1114
      %1116 = vst [vmem:[%s1058 + $0x58] sm:$0xf] %v872
      %v1117 = vld [vmem:[%s1058 + $0x5c] sm:$0x1]
      %v1118 = vsel %vm1067, %v873, %v1117
      %1119 = vst [vmem:[%s1058 + $0x5c] sm:$0x1] %v1118
      %v1120 = vld [vmem:[%s1058 + $0x60] sm:$0xf]
      %v1121 = vsel %vm1061, %v880, %v1120
      %1122 = vst [vmem:[%s1058 + $0x60] sm:$0xf] %v1121
      %1123 = vst [vmem:[%s1058 + $0x64] sm:$0xf] %v889
      %v1124 = vld [vmem:[%s1058 + $0x68] sm:$0x1]
      %v1125 = vsel %vm1067, %v890, %v1124
      %1126 = vst [vmem:[%s1058 + $0x68] sm:$0x1] %v1125
      %v1127 = vld [vmem:[%s1058 + $0x6c] sm:$0xf]
      %v1128 = vsel %vm1061, %v897, %v1127
      %1129 = vst [vmem:[%s1058 + $0x6c] sm:$0xf] %v1128
      %1130 = vst [vmem:[%s1058 + $0x70] sm:$0xf] %v906
      %v1131 = vld [vmem:[%s1058 + $0x74] sm:$0x1]
      %v1132 = vsel %vm1067, %v907, %v1131
      %1133 = vst [vmem:[%s1058 + $0x74] sm:$0x1] %v1132
      %v1134 = vld [vmem:[%s1058 + $0x78] sm:$0xf]
      %v1135 = vsel %vm1061, %v914, %v1134
      %1136 = vst [vmem:[%s1058 + $0x78] sm:$0xf] %v1135
      %1137 = vst [vmem:[%s1058 + $0x7c] sm:$0xf] %v923
      %v1138 = vld [vmem:[%s1058 + $0x80] sm:$0x1]
      %v1139 = vsel %vm1067, %v924, %v1138
      %1140 = vst [vmem:[%s1058 + $0x80] sm:$0x1] %v1139
      %v1141 = vld [vmem:[%s1058 + $0x84] sm:$0xf]
      %v1142 = vsel %vm1061, %v931, %v1141
      %1143 = vst [vmem:[%s1058 + $0x84] sm:$0xf] %v1142
      %1144 = vst [vmem:[%s1058 + $0x88] sm:$0xf] %v940
      %v1145 = vld [vmem:[%s1058 + $0x8c] sm:$0x1]
      %v1146 = vsel %vm1067, %v941, %v1145
      %1147 = vst [vmem:[%s1058 + $0x8c] sm:$0x1] %v1146
      %v1148 = vld [vmem:[%s1058 + $0x90] sm:$0xf]
      %v1149 = vsel %vm1061, %v948, %v1148
      %1150 = vst [vmem:[%s1058 + $0x90] sm:$0xf] %v1149
      %1151 = vst [vmem:[%s1058 + $0x94] sm:$0xf] %v957
      %v1152 = vld [vmem:[%s1058 + $0x98] sm:$0x1]
      %v1153 = vsel %vm1067, %v958, %v1152
      %1154 = vst [vmem:[%s1058 + $0x98] sm:$0x1] %v1153
      %v1155 = vld [vmem:[%s1058 + $0x9c] sm:$0xf]
      %v1156 = vsel %vm1061, %v965, %v1155
      %1157 = vst [vmem:[%s1058 + $0x9c] sm:$0xf] %v1156
      %1158 = vst [vmem:[%s1058 + $0xa0] sm:$0xf] %v974
      %v1159 = vld [vmem:[%s1058 + $0xa4] sm:$0x1]
      %v1160 = vsel %vm1067, %v975, %v1159
      %1161 = vst [vmem:[%s1058 + $0xa4] sm:$0x1] %v1160
      %v1162 = vld [vmem:[%s1058 + $0xa8] sm:$0xf]
      %v1163 = vsel %vm1061, %v982, %v1162
      %1164 = vst [vmem:[%s1058 + $0xa8] sm:$0xf] %v1163
      %1165 = vst [vmem:[%s1058 + $0xac] sm:$0xf] %v991
      %v1166 = vld [vmem:[%s1058 + $0xb0] sm:$0x1]
      %v1167 = vsel %vm1067, %v992, %v1166
      %1168 = vst [vmem:[%s1058 + $0xb0] sm:$0x1] %v1167
      %v1169 = vld [vmem:[%s1058 + $0xb4] sm:$0xf]
      %v1170 = vsel %vm1061, %v999, %v1169
      %1171 = vst [vmem:[%s1058 + $0xb4] sm:$0xf] %v1170
      %1172 = vst [vmem:[%s1058 + $0xb8] sm:$0xf] %v1008
      %v1173 = vld [vmem:[%s1058 + $0xbc] sm:$0x1]
      %v1174 = vsel %vm1067, %v1009, %v1173
      %1175 = vst [vmem:[%s1058 + $0xbc] sm:$0x1] %v1174
      %v1176 = vld [vmem:[#allocation2] sm:$0xf]
      %v1177 = vld [vmem:[#allocation2 + $0x4] sm:$0xf]
      %v1178 = vld [vmem:[#allocation2 + $0xc] sm:$0xf]
      %v1179 = vld [vmem:[#allocation2 + $0x10] sm:$0xf]
      %v1180 = vld [vmem:[#allocation2 + $0x18] sm:$0xf]
      %v1181 = vld [vmem:[#allocation2 + $0x1c] sm:$0xf]
      %v1182 = vld [vmem:[#allocation2 + $0x24] sm:$0xf]
      %v1183 = vld [vmem:[#allocation2 + $0x28] sm:$0xf]
      %v1184 = vld [vmem:[#allocation2 + $0x30] sm:$0xf]
      %v1185 = vld [vmem:[#allocation2 + $0x34] sm:$0xf]
      %v1186 = vld [vmem:[#allocation2 + $0x3c] sm:$0xf]
      %v1187 = vld [vmem:[#allocation2 + $0x40] sm:$0xf]
      %v1188 = vld [vmem:[#allocation2 + $0x48] sm:$0xf]
      %v1189 = vld [vmem:[#allocation2 + $0x4c] sm:$0xf]
      %v1190 = vld [vmem:[#allocation2 + $0x54] sm:$0xf]
      %v1191 = vld [vmem:[#allocation2 + $0x58] sm:$0xf]
      %v1192 = vld [vmem:[#allocation2 + $0x60] sm:$0xf]
      %v1193 = vld [vmem:[#allocation2 + $0x64] sm:$0xf]
      %v1194 = vld [vmem:[#allocation2 + $0x6c] sm:$0xf]
      %v1195 = vld [vmem:[#allocation2 + $0x70] sm:$0xf]
      %v1196 = vld [vmem:[#allocation2 + $0x78] sm:$0xf]
      %v1197 = vld [vmem:[#allocation2 + $0x7c] sm:$0xf]
      %v1198 = vld [vmem:[#allocation2 + $0x84] sm:$0xf]
      %v1199 = vld [vmem:[#allocation2 + $0x88] sm:$0xf]
      %v1200 = vld [vmem:[#allocation2 + $0x90] sm:$0xf]
      %v1201 = vld [vmem:[#allocation2 + $0x94] sm:$0xf]
      %v1202 = vld [vmem:[#allocation2 + $0x9c] sm:$0xf]
      %v1203 = vld [vmem:[#allocation2 + $0xa0] sm:$0xf]
      %v1204 = vld [vmem:[#allocation2 + $0xa8] sm:$0xf]
      %v1205 = vld [vmem:[#allocation2 + $0xac] sm:$0xf]
      %v1206 = vld [vmem:[#allocation2 + $0xb4] sm:$0xf]
      %v1207 = vld [vmem:[#allocation2 + $0xb8] sm:$0xf]
      %v1208 = vld [vmem:[#allocation2 + $0x8] sm:$0x1]
      %v1209 = vld [vmem:[#allocation2 + $0x14] sm:$0x1]
      %v1210 = vld [vmem:[#allocation2 + $0x20] sm:$0x1]
      %v1211 = vld [vmem:[#allocation2 + $0x2c] sm:$0x1]
      %v1212 = vld [vmem:[#allocation2 + $0x38] sm:$0x1]
      %v1213 = vld [vmem:[#allocation2 + $0x44] sm:$0x1]
      %v1214 = vld [vmem:[#allocation2 + $0x50] sm:$0x1]
      %v1215 = vld [vmem:[#allocation2 + $0x5c] sm:$0x1]
      %v1216 = vld [vmem:[#allocation2 + $0x68] sm:$0x1]
      %v1217 = vld [vmem:[#allocation2 + $0x74] sm:$0x1]
      %v1218 = vld [vmem:[#allocation2 + $0x80] sm:$0x1]
      %v1219 = vld [vmem:[#allocation2 + $0x8c] sm:$0x1]
      %v1220 = vld [vmem:[#allocation2 + $0x98] sm:$0x1]
      %v1221 = vld [vmem:[#allocation2 + $0xa4] sm:$0x1]
      %v1222 = vld [vmem:[#allocation2 + $0xb0] sm:$0x1]
      %v1223 = vld [vmem:[#allocation2 + $0xbc] sm:$0x1]
      %vm1224 = vsmask.f32 3328
      %vm1225 = vsmask.f32 7440
      %vm1226 = vmor %vm1224, %vm1225
      %v1228 = vshrl.u32 %v1176, 16
      %v1230 = vrot.slane %v1228, 4
      %v1231 = vshll.u32 %v1176, 16
      %v1233 = vrot.slane %v1231, 5
      %v1234 = vor.u32 %v1230, %v1233
      %v1235 = vrot.slane %v1234, 4
      %v1237 = vshll.u32 %v1177, 16
      %v1239 = vrot.slane %v1237, 5
      %v1240 = vsel %vm1226, %v1235, %v1239
      %v1241 = vshrl.u32 %v1177, 16
      %v1243 = vrot.slane %v1241, 4
      %v1244 = vor.u32 %v1243, %v1239
      %v1245 = vrot.slane %v1244, 4
      %v1247 = vshll.u32 %v1208, 16
      %v1249 = vrot.slane %v1247, 5
      %v1250 = vsel %vm1226, %v1245, %v1249
      %v1252 = vshrl.u32 %v1178, 16
      %v1254 = vrot.slane %v1252, 4
      %v1255 = vshll.u32 %v1178, 16
      %v1257 = vrot.slane %v1255, 5
      %v1258 = vor.u32 %v1254, %v1257
      %v1259 = vrot.slane %v1258, 4
      %v1261 = vshll.u32 %v1179, 16
      %v1263 = vrot.slane %v1261, 5
      %v1264 = vsel %vm1226, %v1259, %v1263
      %v1265 = vshrl.u32 %v1179, 16
      %v1267 = vrot.slane %v1265, 4
      %v1268 = vor.u32 %v1267, %v1263
      %v1269 = vrot.slane %v1268, 4
      %v1271 = vshll.u32 %v1209, 16
      %v1273 = vrot.slane %v1271, 5
      %v1274 = vsel %vm1226, %v1269, %v1273
      %v1276 = vshrl.u32 %v1180, 16
      %v1278 = vrot.slane %v1276, 4
      %v1279 = vshll.u32 %v1180, 16
      %v1281 = vrot.slane %v1279, 5
      %v1282 = vor.u32 %v1278, %v1281
      %v1283 = vrot.slane %v1282, 4
      %v1285 = vshll.u32 %v1181, 16
      %v1287 = vrot.slane %v1285, 5
      %v1288 = vsel %vm1226, %v1283, %v1287
      %v1289 = vshrl.u32 %v1181, 16
      %v1291 = vrot.slane %v1289, 4
      %v1292 = vor.u32 %v1291, %v1287
      %v1293 = vrot.slane %v1292, 4
      %v1295 = vshll.u32 %v1210, 16
      %v1297 = vrot.slane %v1295, 5
      %v1298 = vsel %vm1226, %v1293, %v1297
      %v1300 = vshrl.u32 %v1182, 16
      %v1302 = vrot.slane %v1300, 4
      %v1303 = vshll.u32 %v1182, 16
      %v1305 = vrot.slane %v1303, 5
      %v1306 = vor.u32 %v1302, %v1305
      %v1307 = vrot.slane %v1306, 4
      %v1309 = vshll.u32 %v1183, 16
      %v1311 = vrot.slane %v1309, 5
      %v1312 = vsel %vm1226, %v1307, %v1311
      %v1313 = vshrl.u32 %v1183, 16
      %v1315 = vrot.slane %v1313, 4
      %v1316 = vor.u32 %v1315, %v1311
      %v1317 = vrot.slane %v1316, 4
      %v1319 = vshll.u32 %v1211, 16
      %v1321 = vrot.slane %v1319, 5
      %v1322 = vsel %vm1226, %v1317, %v1321
      %v1324 = vshrl.u32 %v1184, 16
      %v1326 = vrot.slane %v1324, 4
      %v1327 = vshll.u32 %v1184, 16
      %v1329 = vrot.slane %v1327, 5
      %v1330 = vor.u32 %v1326, %v1329
      %v1331 = vrot.slane %v1330, 4
      %v1333 = vshll.u32 %v1185, 16
      %v1335 = vrot.slane %v1333, 5
      %v1336 = vsel %vm1226, %v1331, %v1335
      %v1337 = vshrl.u32 %v1185, 16
      %v1339 = vrot.slane %v1337, 4
      %v1340 = vor.u32 %v1339, %v1335
      %v1341 = vrot.slane %v1340, 4
      %v1343 = vshll.u32 %v1212, 16
      %v1345 = vrot.slane %v1343, 5
      %v1346 = vsel %vm1226, %v1341, %v1345
      %v1348 = vshrl.u32 %v1186, 16
      %v1350 = vrot.slane %v1348, 4
      %v1351 = vshll.u32 %v1186, 16
      %v1353 = vrot.slane %v1351, 5
      %v1354 = vor.u32 %v1350, %v1353
      %v1355 = vrot.slane %v1354, 4
      %v1357 = vshll.u32 %v1187, 16
      %v1359 = vrot.slane %v1357, 5
      %v1360 = vsel %vm1226, %v1355, %v1359
      %v1361 = vshrl.u32 %v1187, 16
      %v1363 = vrot.slane %v1361, 4
      %v1364 = vor.u32 %v1363, %v1359
      %v1365 = vrot.slane %v1364, 4
      %v1367 = vshll.u32 %v1213, 16
      %v1369 = vrot.slane %v1367, 5
      %v1370 = vsel %vm1226, %v1365, %v1369
      %v1372 = vshrl.u32 %v1188, 16
      %v1374 = vrot.slane %v1372, 4
      %v1375 = vshll.u32 %v1188, 16
      %v1377 = vrot.slane %v1375, 5
      %v1378 = vor.u32 %v1374, %v1377
      %v1379 = vrot.slane %v1378, 4
      %v1381 = vshll.u32 %v1189, 16
      %v1383 = vrot.slane %v1381, 5
      %v1384 = vsel %vm1226, %v1379, %v1383
      %v1385 = vshrl.u32 %v1189, 16
      %v1387 = vrot.slane %v1385, 4
      %v1388 = vor.u32 %v1387, %v1383
      %v1389 = vrot.slane %v1388, 4
      %v1391 = vshll.u32 %v1214, 16
      %v1393 = vrot.slane %v1391, 5
      %v1394 = vsel %vm1226, %v1389, %v1393
      %v1396 = vshrl.u32 %v1190, 16
      %v1398 = vrot.slane %v1396, 4
      %v1399 = vshll.u32 %v1190, 16
      %v1401 = vrot.slane %v1399, 5
      %v1402 = vor.u32 %v1398, %v1401
      %v1403 = vrot.slane %v1402, 4
      %v1405 = vshll.u32 %v1191, 16
      %v1407 = vrot.slane %v1405, 5
      %v1408 = vsel %vm1226, %v1403, %v1407
      %v1409 = vshrl.u32 %v1191, 16
      %v1411 = vrot.slane %v1409, 4
      %v1412 = vor.u32 %v1411, %v1407
      %v1413 = vrot.slane %v1412, 4
      %v1415 = vshll.u32 %v1215, 16
      %v1417 = vrot.slane %v1415, 5
      %v1418 = vsel %vm1226, %v1413, %v1417
      %v1420 = vshrl.u32 %v1192, 16
      %v1422 = vrot.slane %v1420, 4
      %v1423 = vshll.u32 %v1192, 16
      %v1425 = vrot.slane %v1423, 5
      %v1426 = vor.u32 %v1422, %v1425
      %v1427 = vrot.slane %v1426, 4
      %v1429 = vshll.u32 %v1193, 16
      %v1431 = vrot.slane %v1429, 5
      %v1432 = vsel %vm1226, %v1427, %v1431
      %v1433 = vshrl.u32 %v1193, 16
      %v1435 = vrot.slane %v1433, 4
      %v1436 = vor.u32 %v1435, %v1431
      %v1437 = vrot.slane %v1436, 4
      %v1439 = vshll.u32 %v1216, 16
      %v1441 = vrot.slane %v1439, 5
      %v1442 = vsel %vm1226, %v1437, %v1441
      %v1444 = vshrl.u32 %v1194, 16
      %v1446 = vrot.slane %v1444, 4
      %v1447 = vshll.u32 %v1194, 16
      %v1449 = vrot.slane %v1447, 5
      %v1450 = vor.u32 %v1446, %v1449
      %v1451 = vrot.slane %v1450, 4
      %v1453 = vshll.u32 %v1195, 16
      %v1455 = vrot.slane %v1453, 5
      %v1456 = vsel %vm1226, %v1451, %v1455
      %v1457 = vshrl.u32 %v1195, 16
      %v1459 = vrot.slane %v1457, 4
      %v1460 = vor.u32 %v1459, %v1455
      %v1461 = vrot.slane %v1460, 4
      %v1463 = vshll.u32 %v1217, 16
      %v1465 = vrot.slane %v1463, 5
      %v1466 = vsel %vm1226, %v1461, %v1465
      %v1468 = vshrl.u32 %v1196, 16
      %v1470 = vrot.slane %v1468, 4
      %v1471 = vshll.u32 %v1196, 16
      %v1473 = vrot.slane %v1471, 5
      %v1474 = vor.u32 %v1470, %v1473
      %v1475 = vrot.slane %v1474, 4
      %v1477 = vshll.u32 %v1197, 16
      %v1479 = vrot.slane %v1477, 5
      %v1480 = vsel %vm1226, %v1475, %v1479
      %v1481 = vshrl.u32 %v1197, 16
      %v1483 = vrot.slane %v1481, 4
      %v1484 = vor.u32 %v1483, %v1479
      %v1485 = vrot.slane %v1484, 4
      %v1487 = vshll.u32 %v1218, 16
      %v1489 = vrot.slane %v1487, 5
      %v1490 = vsel %vm1226, %v1485, %v1489
      %v1492 = vshrl.u32 %v1198, 16
      %v1494 = vrot.slane %v1492, 4
      %v1495 = vshll.u32 %v1198, 16
      %v1497 = vrot.slane %v1495, 5
      %v1498 = vor.u32 %v1494, %v1497
      %v1499 = vrot.slane %v1498, 4
      %v1501 = vshll.u32 %v1199, 16
      %v1503 = vrot.slane %v1501, 5
      %v1504 = vsel %vm1226, %v1499, %v1503
      %v1505 = vshrl.u32 %v1199, 16
      %v1507 = vrot.slane %v1505, 4
      %v1508 = vor.u32 %v1507, %v1503
      %v1509 = vrot.slane %v1508, 4
      %v1511 = vshll.u32 %v1219, 16
      %v1513 = vrot.slane %v1511, 5
      %v1514 = vsel %vm1226, %v1509, %v1513
      %v1516 = vshrl.u32 %v1200, 16
      %v1518 = vrot.slane %v1516, 4
      %v1519 = vshll.u32 %v1200, 16
      %v1521 = vrot.slane %v1519, 5
      %v1522 = vor.u32 %v1518, %v1521
      %v1523 = vrot.slane %v1522, 4
      %v1525 = vshll.u32 %v1201, 16
      %v1527 = vrot.slane %v1525, 5
      %v1528 = vsel %vm1226, %v1523, %v1527
      %v1529 = vshrl.u32 %v1201, 16
      %v1531 = vrot.slane %v1529, 4
      %v1532 = vor.u32 %v1531, %v1527
      %v1533 = vrot.slane %v1532, 4
      %v1535 = vshll.u32 %v1220, 16
      %v1537 = vrot.slane %v1535, 5
      %v1538 = vsel %vm1226, %v1533, %v1537
      %v1540 = vshrl.u32 %v1202, 16
      %v1542 = vrot.slane %v1540, 4
      %v1543 = vshll.u32 %v1202, 16
      %v1545 = vrot.slane %v1543, 5
      %v1546 = vor.u32 %v1542, %v1545
      %v1547 = vrot.slane %v1546, 4
      %v1549 = vshll.u32 %v1203, 16
      %v1551 = vrot.slane %v1549, 5
      %v1552 = vsel %vm1226, %v1547, %v1551
      %v1553 = vshrl.u32 %v1203, 16
      %v1555 = vrot.slane %v1553, 4
      %v1556 = vor.u32 %v1555, %v1551
      %v1557 = vrot.slane %v1556, 4
      %v1559 = vshll.u32 %v1221, 16
      %v1561 = vrot.slane %v1559, 5
      %v1562 = vsel %vm1226, %v1557, %v1561
      %v1564 = vshrl.u32 %v1204, 16
      %v1566 = vrot.slane %v1564, 4
      %v1567 = vshll.u32 %v1204, 16
      %v1569 = vrot.slane %v1567, 5
      %v1570 = vor.u32 %v1566, %v1569
      %v1571 = vrot.slane %v1570, 4
      %v1573 = vshll.u32 %v1205, 16
      %v1575 = vrot.slane %v1573, 5
      %v1576 = vsel %vm1226, %v1571, %v1575
      %v1577 = vshrl.u32 %v1205, 16
      %v1579 = vrot.slane %v1577, 4
      %v1580 = vor.u32 %v1579, %v1575
      %v1581 = vrot.slane %v1580, 4
      %v1583 = vshll.u32 %v1222, 16
      %v1585 = vrot.slane %v1583, 5
      %v1586 = vsel %vm1226, %v1581, %v1585
      %v1588 = vshrl.u32 %v1206, 16
      %v1590 = vrot.slane %v1588, 4
      %v1591 = vshll.u32 %v1206, 16
      %v1593 = vrot.slane %v1591, 5
      %v1594 = vor.u32 %v1590, %v1593
      %v1595 = vrot.slane %v1594, 4
      %v1597 = vshll.u32 %v1207, 16
      %v1599 = vrot.slane %v1597, 5
      %v1600 = vsel %vm1226, %v1595, %v1599
      %v1601 = vshrl.u32 %v1207, 16
      %v1603 = vrot.slane %v1601, 4
      %v1604 = vor.u32 %v1603, %v1599
      %v1605 = vrot.slane %v1604, 4
      %v1607 = vshll.u32 %v1223, 16
      %v1609 = vrot.slane %v1607, 5
      %v1610 = vsel %vm1226, %v1605, %v1609
      %v1611 = vld [vmem:[#allocation2] sm:$0xe]
      %v1612 = vld [vmem:[#allocation2 + $0xc] sm:$0xe]
      %v1613 = vld [vmem:[#allocation2 + $0x18] sm:$0xe]
      %v1614 = vld [vmem:[#allocation2 + $0x24] sm:$0xe]
      %v1615 = vld [vmem:[#allocation2 + $0x30] sm:$0xe]
      %v1616 = vld [vmem:[#allocation2 + $0x3c] sm:$0xe]
      %v1617 = vld [vmem:[#allocation2 + $0x48] sm:$0xe]
      %v1618 = vld [vmem:[#allocation2 + $0x54] sm:$0xe]
      %v1619 = vld [vmem:[#allocation2 + $0x60] sm:$0xe]
      %v1620 = vld [vmem:[#allocation2 + $0x6c] sm:$0xe]
      %v1621 = vld [vmem:[#allocation2 + $0x78] sm:$0xe]
      %v1622 = vld [vmem:[#allocation2 + $0x84] sm:$0xe]
      %v1623 = vld [vmem:[#allocation2 + $0x90] sm:$0xe]
      %v1624 = vld [vmem:[#allocation2 + $0x9c] sm:$0xe]
      %v1625 = vld [vmem:[#allocation2 + $0xa8] sm:$0xe]
      %v1626 = vld [vmem:[#allocation2 + $0xb4] sm:$0xe]
      %vm1675 = vcmask 1042432
      %vm1676 = vcmask 1046532
      %vm1677 = vmor %vm1675, %vm1676
      %v1678 = vrot.slane %v1611, 5
      %v1679 = vrot.slane %v1678, 4
      %v1680 = vrot.slane %v1177, 5
      %v1681 = vsel %vm1677, %v1679, %v1680
      %v1682 = vrot.slane %v1680, 4
      %v1683 = vrot.slane %v1208, 5
      %v1684 = vsel %vm1677, %v1682, %v1683
      %v1685 = vrot.slane %v1612, 5
      %v1686 = vrot.slane %v1685, 4
      %v1687 = vrot.slane %v1179, 5
      %v1688 = vsel %vm1677, %v1686, %v1687
      %v1689 = vrot.slane %v1687, 4
      %v1690 = vrot.slane %v1209, 5
      %v1691 = vsel %vm1677, %v1689, %v1690
      %v1692 = vrot.slane %v1613, 5
      %v1693 = vrot.slane %v1692, 4
      %v1694 = vrot.slane %v1181, 5
      %v1695 = vsel %vm1677, %v1693, %v1694
      %v1696 = vrot.slane %v1694, 4
      %v1697 = vrot.slane %v1210, 5
      %v1698 = vsel %vm1677, %v1696, %v1697
      %v1699 = vrot.slane %v1614, 5
      %v1700 = vrot.slane %v1699, 4
      %v1701 = vrot.slane %v1183, 5
      %v1702 = vsel %vm1677, %v1700, %v1701
      %v1703 = vrot.slane %v1701, 4
      %v1704 = vrot.slane %v1211, 5
      %v1705 = vsel %vm1677, %v1703, %v1704
      %v1706 = vrot.slane %v1615, 5
      %v1707 = vrot.slane %v1706, 4
      %v1708 = vrot.slane %v1185, 5
      %v1709 = vsel %vm1677, %v1707, %v1708
      %v1710 = vrot.slane %v1708, 4
      %v1711 = vrot.slane %v1212, 5
      %v1712 = vsel %vm1677, %v1710, %v1711
      %v1713 = vrot.slane %v1616, 5
      %v1714 = vrot.slane %v1713, 4
      %v1715 = vrot.slane %v1187, 5
      %v1716 = vsel %vm1677, %v1714, %v1715
      %v1717 = vrot.slane %v1715, 4
      %v1718 = vrot.slane %v1213, 5
      %v1719 = vsel %vm1677, %v1717, %v1718
      %v1720 = vrot.slane %v1617, 5
      %v1721 = vrot.slane %v1720, 4
      %v1722 = vrot.slane %v1189, 5
      %v1723 = vsel %vm1677, %v1721, %v1722
      %v1724 = vrot.slane %v1722, 4
      %v1725 = vrot.slane %v1214, 5
      %v1726 = vsel %vm1677, %v1724, %v1725
      %v1727 = vrot.slane %v1618, 5
      %v1728 = vrot.slane %v1727, 4
      %v1729 = vrot.slane %v1191, 5
      %v1730 = vsel %vm1677, %v1728, %v1729
      %v1731 = vrot.slane %v1729, 4
      %v1732 = vrot.slane %v1215, 5
      %v1733 = vsel %vm1677, %v1731, %v1732
      %v1734 = vrot.slane %v1619, 5
      %v1735 = vrot.slane %v1734, 4
      %v1736 = vrot.slane %v1193, 5
      %v1737 = vsel %vm1677, %v1735, %v1736
      %v1738 = vrot.slane %v1736, 4
      %v1739 = vrot.slane %v1216, 5
      %v1740 = vsel %vm1677, %v1738, %v1739
      %v1741 = vrot.slane %v1620, 5
      %v1742 = vrot.slane %v1741, 4
      %v1743 = vrot.slane %v1195, 5
      %v1744 = vsel %vm1677, %v1742, %v1743
      %v1745 = vrot.slane %v1743, 4
      %v1746 = vrot.slane %v1217, 5
      %v1747 = vsel %vm1677, %v1745, %v1746
      %v1748 = vrot.slane %v1621, 5
      %v1749 = vrot.slane %v1748, 4
      %v1750 = vrot.slane %v1197, 5
      %v1751 = vsel %vm1677, %v1749, %v1750
      %v1752 = vrot.slane %v1750, 4
      %v1753 = vrot.slane %v1218, 5
      %v1754 = vsel %vm1677, %v1752, %v1753
      %v1755 = vrot.slane %v1622, 5
      %v1756 = vrot.slane %v1755, 4
      %v1757 = vrot.slane %v1199, 5
      %v1758 = vsel %vm1677, %v1756, %v1757
      %v1759 = vrot.slane %v1757, 4
      %v1760 = vrot.slane %v1219, 5
      %v1761 = vsel %vm1677, %v1759, %v1760
      %v1762 = vrot.slane %v1623, 5
      %v1763 = vrot.slane %v1762, 4
      %v1764 = vrot.slane %v1201, 5
      %v1765 = vsel %vm1677, %v1763, %v1764
      %v1766 = vrot.slane %v1764, 4
      %v1767 = vrot.slane %v1220, 5
      %v1768 = vsel %vm1677, %v1766, %v1767
      %v1769 = vrot.slane %v1624, 5
      %v1770 = vrot.slane %v1769, 4
      %v1771 = vrot.slane %v1203, 5
      %v1772 = vsel %vm1677, %v1770, %v1771
      %v1773 = vrot.slane %v1771, 4
      %v1774 = vrot.slane %v1221, 5
      %v1775 = vsel %vm1677, %v1773, %v1774
      %v1776 = vrot.slane %v1625, 5
      %v1777 = vrot.slane %v1776, 4
      %v1778 = vrot.slane %v1205, 5
      %v1779 = vsel %vm1677, %v1777, %v1778
      %v1780 = vrot.slane %v1778, 4
      %v1781 = vrot.slane %v1222, 5
      %v1782 = vsel %vm1677, %v1780, %v1781
      %v1783 = vrot.slane %v1626, 5
      %v1784 = vrot.slane %v1783, 4
      %v1785 = vrot.slane %v1207, 5
      %v1786 = vsel %vm1677, %v1784, %v1785
      %v1787 = vrot.slane %v1785, 4
      %v1788 = vrot.slane %v1223, 5
      %v1789 = vsel %vm1677, %v1787, %v1788
      %v1790 = vld [vmem:[%s1058] sm:$0xf]
      %v1791 = vld [vmem:[%s1058 + $0x4] sm:$0xf]
      %v1792 = vld [vmem:[%s1058 + $0xc] sm:$0xf]
      %v1793 = vld [vmem:[%s1058 + $0x10] sm:$0xf]
      %v1794 = vld [vmem:[%s1058 + $0x18] sm:$0xf]
      %v1795 = vld [vmem:[%s1058 + $0x1c] sm:$0xf]
      %v1796 = vld [vmem:[%s1058 + $0x24] sm:$0xf]
      %v1797 = vld [vmem:[%s1058 + $0x28] sm:$0xf]
      %v1798 = vld [vmem:[%s1058 + $0x30] sm:$0xf]
      %v1799 = vld [vmem:[%s1058 + $0x34] sm:$0xf]
      %v1800 = vld [vmem:[%s1058 + $0x3c] sm:$0xf]
      %v1801 = vld [vmem:[%s1058 + $0x40] sm:$0xf]
      %v1802 = vld [vmem:[%s1058 + $0x48] sm:$0xf]
      %v1803 = vld [vmem:[%s1058 + $0x4c] sm:$0xf]
      %v1804 = vld [vmem:[%s1058 + $0x54] sm:$0xf]
      %v1805 = vld [vmem:[%s1058 + $0x58] sm:$0xf]
      %v1806 = vld [vmem:[%s1058 + $0x60] sm:$0xf]
      %v1807 = vld [vmem:[%s1058 + $0x64] sm:$0xf]
      %v1808 = vld [vmem:[%s1058 + $0x6c] sm:$0xf]
      %v1809 = vld [vmem:[%s1058 + $0x70] sm:$0xf]
      %v1810 = vld [vmem:[%s1058 + $0x78] sm:$0xf]
      %v1811 = vld [vmem:[%s1058 + $0x7c] sm:$0xf]
      %v1812 = vld [vmem:[%s1058 + $0x84] sm:$0xf]
      %v1813 = vld [vmem:[%s1058 + $0x88] sm:$0xf]
      %v1814 = vld [vmem:[%s1058 + $0x90] sm:$0xf]
      %v1815 = vld [vmem:[%s1058 + $0x94] sm:$0xf]
      %v1816 = vld [vmem:[%s1058 + $0x9c] sm:$0xf]
      %v1817 = vld [vmem:[%s1058 + $0xa0] sm:$0xf]
      %v1818 = vld [vmem:[%s1058 + $0xa8] sm:$0xf]
      %v1819 = vld [vmem:[%s1058 + $0xac] sm:$0xf]
      %v1820 = vld [vmem:[%s1058 + $0xb4] sm:$0xf]
      %v1821 = vld [vmem:[%s1058 + $0xb8] sm:$0xf]
      %v1822 = vld [vmem:[%s1058 + $0x8] sm:$0x1]
      %v1823 = vld [vmem:[%s1058 + $0x14] sm:$0x1]
      %v1824 = vld [vmem:[%s1058 + $0x20] sm:$0x1]
      %v1825 = vld [vmem:[%s1058 + $0x2c] sm:$0x1]
      %v1826 = vld [vmem:[%s1058 + $0x38] sm:$0x1]
      %v1827 = vld [vmem:[%s1058 + $0x44] sm:$0x1]
      %v1828 = vld [vmem:[%s1058 + $0x50] sm:$0x1]
      %v1829 = vld [vmem:[%s1058 + $0x5c] sm:$0x1]
      %v1830 = vld [vmem:[%s1058 + $0x68] sm:$0x1]
      %v1831 = vld [vmem:[%s1058 + $0x74] sm:$0x1]
      %v1832 = vld [vmem:[%s1058 + $0x80] sm:$0x1]
      %v1833 = vld [vmem:[%s1058 + $0x8c] sm:$0x1]
      %v1834 = vld [vmem:[%s1058 + $0x98] sm:$0x1]
      %v1835 = vld [vmem:[%s1058 + $0xa4] sm:$0x1]
      %v1836 = vld [vmem:[%s1058 + $0xb0] sm:$0x1]
      %v1837 = vld [vmem:[%s1058 + $0xbc] sm:$0x1]
      %v1839 = vshrl.u32 %v1790, 16
      %v1841 = vrot.slane %v1839, 4
      %v1842 = vshll.u32 %v1790, 16
      %v1844 = vrot.slane %v1842, 5
      %v1845 = vor.u32 %v1841, %v1844
      %v1846 = vrot.slane %v1845, 4
      %v1848 = vshll.u32 %v1791, 16
      %v1850 = vrot.slane %v1848, 5
      %v1851 = vsel %vm1226, %v1846, %v1850
      %v1852 = vshrl.u32 %v1791, 16
      %v1854 = vrot.slane %v1852, 4
      %v1855 = vor.u32 %v1854, %v1850
      %v1856 = vrot.slane %v1855, 4
      %v1858 = vshll.u32 %v1822, 16
      %v1860 = vrot.slane %v1858, 5
      %v1861 = vsel %vm1226, %v1856, %v1860
      %v1863 = vshrl.u32 %v1792, 16
      %v1865 = vrot.slane %v1863, 4
      %v1866 = vshll.u32 %v1792, 16
      %v1868 = vrot.slane %v1866, 5
      %v1869 = vor.u32 %v1865, %v1868
      %v1870 = vrot.slane %v1869, 4
      %v1872 = vshll.u32 %v1793, 16
      %v1874 = vrot.slane %v1872, 5
      %v1875 = vsel %vm1226, %v1870, %v1874
      %v1876 = vshrl.u32 %v1793, 16
      %v1878 = vrot.slane %v1876, 4
      %v1879 = vor.u32 %v1878, %v1874
      %v1880 = vrot.slane %v1879, 4
      %v1882 = vshll.u32 %v1823, 16
      %v1884 = vrot.slane %v1882, 5
      %v1885 = vsel %vm1226, %v1880, %v1884
      %v1887 = vshrl.u32 %v1794, 16
      %v1889 = vrot.slane %v1887, 4
      %v1890 = vshll.u32 %v1794, 16
      %v1892 = vrot.slane %v1890, 5
      %v1893 = vor.u32 %v1889, %v1892
      %v1894 = vrot.slane %v1893, 4
      %v1896 = vshll.u32 %v1795, 16
      %v1898 = vrot.slane %v1896, 5
      %v1899 = vsel %vm1226, %v1894, %v1898
      %v1900 = vshrl.u32 %v1795, 16
      %v1902 = vrot.slane %v1900, 4
      %v1903 = vor.u32 %v1902, %v1898
      %v1904 = vrot.slane %v1903, 4
      %v1906 = vshll.u32 %v1824, 16
      %v1908 = vrot.slane %v1906, 5
      %v1909 = vsel %vm1226, %v1904, %v1908
      %v1911 = vshrl.u32 %v1796, 16
      %v1913 = vrot.slane %v1911, 4
      %v1914 = vshll.u32 %v1796, 16
      %v1916 = vrot.slane %v1914, 5
      %v1917 = vor.u32 %v1913, %v1916
      %v1918 = vrot.slane %v1917, 4
      %v1920 = vshll.u32 %v1797, 16
      %v1922 = vrot.slane %v1920, 5
      %v1923 = vsel %vm1226, %v1918, %v1922
      %v1924 = vshrl.u32 %v1797, 16
      %v1926 = vrot.slane %v1924, 4
      %v1927 = vor.u32 %v1926, %v1922
      %v1928 = vrot.slane %v1927, 4
      %v1930 = vshll.u32 %v1825, 16
      %v1932 = vrot.slane %v1930, 5
      %v1933 = vsel %vm1226, %v1928, %v1932
      %v1935 = vshrl.u32 %v1798, 16
      %v1937 = vrot.slane %v1935, 4
      %v1938 = vshll.u32 %v1798, 16
      %v1940 = vrot.slane %v1938, 5
      %v1941 = vor.u32 %v1937, %v1940
      %v1942 = vrot.slane %v1941, 4
      %v1944 = vshll.u32 %v1799, 16
      %v1946 = vrot.slane %v1944, 5
      %v1947 = vsel %vm1226, %v1942, %v1946
      %v1948 = vshrl.u32 %v1799, 16
      %v1950 = vrot.slane %v1948, 4
      %v1951 = vor.u32 %v1950, %v1946
      %v1952 = vrot.slane %v1951, 4
      %v1954 = vshll.u32 %v1826, 16
      %v1956 = vrot.slane %v1954, 5
      %v1957 = vsel %vm1226, %v1952, %v1956
      %v1959 = vshrl.u32 %v1800, 16
      %v1961 = vrot.slane %v1959, 4
      %v1962 = vshll.u32 %v1800, 16
      %v1964 = vrot.slane %v1962, 5
      %v1965 = vor.u32 %v1961, %v1964
      %v1966 = vrot.slane %v1965, 4
      %v1968 = vshll.u32 %v1801, 16
      %v1970 = vrot.slane %v1968, 5
      %v1971 = vsel %vm1226, %v1966, %v1970
      %v1972 = vshrl.u32 %v1801, 16
      %v1974 = vrot.slane %v1972, 4
      %v1975 = vor.u32 %v1974, %v1970
      %v1976 = vrot.slane %v1975, 4
      %v1978 = vshll.u32 %v1827, 16
      %v1980 = vrot.slane %v1978, 5
      %v1981 = vsel %vm1226, %v1976, %v1980
      %v1983 = vshrl.u32 %v1802, 16
      %v1985 = vrot.slane %v1983, 4
      %v1986 = vshll.u32 %v1802, 16
      %v1988 = vrot.slane %v1986, 5
      %v1989 = vor.u32 %v1985, %v1988
      %v1990 = vrot.slane %v1989, 4
      %v1992 = vshll.u32 %v1803, 16
      %v1994 = vrot.slane %v1992, 5
      %v1995 = vsel %vm1226, %v1990, %v1994
      %v1996 = vshrl.u32 %v1803, 16
      %v1998 = vrot.slane %v1996, 4
      %v1999 = vor.u32 %v1998, %v1994
      %v2000 = vrot.slane %v1999, 4
      %v2002 = vshll.u32 %v1828, 16
      %v2004 = vrot.slane %v2002, 5
      %v2005 = vsel %vm1226, %v2000, %v2004
      %v2007 = vshrl.u32 %v1804, 16
      %v2009 = vrot.slane %v2007, 4
      %v2010 = vshll.u32 %v1804, 16
      %v2012 = vrot.slane %v2010, 5
      %v2013 = vor.u32 %v2009, %v2012
      %v2014 = vrot.slane %v2013, 4
      %v2016 = vshll.u32 %v1805, 16
      %v2018 = vrot.slane %v2016, 5
      %v2019 = vsel %vm1226, %v2014, %v2018
      %v2020 = vshrl.u32 %v1805, 16
      %v2022 = vrot.slane %v2020, 4
      %v2023 = vor.u32 %v2022, %v2018
      %v2024 = vrot.slane %v2023, 4
      %v2026 = vshll.u32 %v1829, 16
      %v2028 = vrot.slane %v2026, 5
      %v2029 = vsel %vm1226, %v2024, %v2028
      %v2031 = vshrl.u32 %v1806, 16
      %v2033 = vrot.slane %v2031, 4
      %v2034 = vshll.u32 %v1806, 16
      %v2036 = vrot.slane %v2034, 5
      %v2037 = vor.u32 %v2033, %v2036
      %v2038 = vrot.slane %v2037, 4
      %v2040 = vshll.u32 %v1807, 16
      %v2042 = vrot.slane %v2040, 5
      %v2043 = vsel %vm1226, %v2038, %v2042
      %v2044 = vshrl.u32 %v1807, 16
      %v2046 = vrot.slane %v2044, 4
      %v2047 = vor.u32 %v2046, %v2042
      %v2048 = vrot.slane %v2047, 4
      %v2050 = vshll.u32 %v1830, 16
      %v2052 = vrot.slane %v2050, 5
      %v2053 = vsel %vm1226, %v2048, %v2052
      %v2055 = vshrl.u32 %v1808, 16
      %v2057 = vrot.slane %v2055, 4
      %v2058 = vshll.u32 %v1808, 16
      %v2060 = vrot.slane %v2058, 5
      %v2061 = vor.u32 %v2057, %v2060
      %v2062 = vrot.slane %v2061, 4
      %v2064 = vshll.u32 %v1809, 16
      %v2066 = vrot.slane %v2064, 5
      %v2067 = vsel %vm1226, %v2062, %v2066
      %v2068 = vshrl.u32 %v1809, 16
      %v2070 = vrot.slane %v2068, 4
      %v2071 = vor.u32 %v2070, %v2066
      %v2072 = vrot.slane %v2071, 4
      %v2074 = vshll.u32 %v1831, 16
      %v2076 = vrot.slane %v2074, 5
      %v2077 = vsel %vm1226, %v2072, %v2076
      %v2079 = vshrl.u32 %v1810, 16
      %v2081 = vrot.slane %v2079, 4
      %v2082 = vshll.u32 %v1810, 16
      %v2084 = vrot.slane %v2082, 5
      %v2085 = vor.u32 %v2081, %v2084
      %v2086 = vrot.slane %v2085, 4
      %v2088 = vshll.u32 %v1811, 16
      %v2090 = vrot.slane %v2088, 5
      %v2091 = vsel %vm1226, %v2086, %v2090
      %v2092 = vshrl.u32 %v1811, 16
      %v2094 = vrot.slane %v2092, 4
      %v2095 = vor.u32 %v2094, %v2090
      %v2096 = vrot.slane %v2095, 4
      %v2098 = vshll.u32 %v1832, 16
      %v2100 = vrot.slane %v2098, 5
      %v2101 = vsel %vm1226, %v2096, %v2100
      %v2103 = vshrl.u32 %v1812, 16
      %v2105 = vrot.slane %v2103, 4
      %v2106 = vshll.u32 %v1812, 16
      %v2108 = vrot.slane %v2106, 5
      %v2109 = vor.u32 %v2105, %v2108
      %v2110 = vrot.slane %v2109, 4
      %v2112 = vshll.u32 %v1813, 16
      %v2114 = vrot.slane %v2112, 5
      %v2115 = vsel %vm1226, %v2110, %v2114
      %v2116 = vshrl.u32 %v1813, 16
      %v2118 = vrot.slane %v2116, 4
      %v2119 = vor.u32 %v2118, %v2114
      %v2120 = vrot.slane %v2119, 4
      %v2122 = vshll.u32 %v1833, 16
      %v2124 = vrot.slane %v2122, 5
      %v2125 = vsel %vm1226, %v2120, %v2124
      %v2127 = vshrl.u32 %v1814, 16
      %v2129 = vrot.slane %v2127, 4
      %v2130 = vshll.u32 %v1814, 16
      %v2132 = vrot.slane %v2130, 5
      %v2133 = vor.u32 %v2129, %v2132
      %v2134 = vrot.slane %v2133, 4
      %v2136 = vshll.u32 %v1815, 16
      %v2138 = vrot.slane %v2136, 5
      %v2139 = vsel %vm1226, %v2134, %v2138
      %v2140 = vshrl.u32 %v1815, 16
      %v2142 = vrot.slane %v2140, 4
      %v2143 = vor.u32 %v2142, %v2138
      %v2144 = vrot.slane %v2143, 4
      %v2146 = vshll.u32 %v1834, 16
      %v2148 = vrot.slane %v2146, 5
      %v2149 = vsel %vm1226, %v2144, %v2148
      %v2151 = vshrl.u32 %v1816, 16
      %v2153 = vrot.slane %v2151, 4
      %v2154 = vshll.u32 %v1816, 16
      %v2156 = vrot.slane %v2154, 5
      %v2157 = vor.u32 %v2153, %v2156
      %v2158 = vrot.slane %v2157, 4
      %v2160 = vshll.u32 %v1817, 16
      %v2162 = vrot.slane %v2160, 5
      %v2163 = vsel %vm1226, %v2158, %v2162
      %v2164 = vshrl.u32 %v1817, 16
      %v2166 = vrot.slane %v2164, 4
      %v2167 = vor.u32 %v2166, %v2162
      %v2168 = vrot.slane %v2167, 4
      %v2170 = vshll.u32 %v1835, 16
      %v2172 = vrot.slane %v2170, 5
      %v2173 = vsel %vm1226, %v2168, %v2172
      %v2175 = vshrl.u32 %v1818, 16
      %v2177 = vrot.slane %v2175, 4
      %v2178 = vshll.u32 %v1818, 16
      %v2180 = vrot.slane %v2178, 5
      %v2181 = vor.u32 %v2177, %v2180
      %v2182 = vrot.slane %v2181, 4
      %v2184 = vshll.u32 %v1819, 16
      %v2186 = vrot.slane %v2184, 5
      %v2187 = vsel %vm1226, %v2182, %v2186
      %v2188 = vshrl.u32 %v1819, 16
      %v2190 = vrot.slane %v2188, 4
      %v2191 = vor.u32 %v2190, %v2186
      %v2192 = vrot.slane %v2191, 4
      %v2194 = vshll.u32 %v1836, 16
      %v2196 = vrot.slane %v2194, 5
      %v2197 = vsel %vm1226, %v2192, %v2196
      %v2199 = vshrl.u32 %v1820, 16
      %v2201 = vrot.slane %v2199, 4
      %v2202 = vshll.u32 %v1820, 16
      %v2204 = vrot.slane %v2202, 5
      %v2205 = vor.u32 %v2201, %v2204
      %v2206 = vrot.slane %v2205, 4
      %v2208 = vshll.u32 %v1821, 16
      %v2210 = vrot.slane %v2208, 5
      %v2211 = vsel %vm1226, %v2206, %v2210
      %v2212 = vshrl.u32 %v1821, 16
      %v2214 = vrot.slane %v2212, 4
      %v2215 = vor.u32 %v2214, %v2210
      %v2216 = vrot.slane %v2215, 4
      %v2218 = vshll.u32 %v1837, 16
      %v2220 = vrot.slane %v2218, 5
      %v2221 = vsel %vm1226, %v2216, %v2220
      %v2222 = vld [vmem:[%s1058] sm:$0xe]
      %v2223 = vld [vmem:[%s1058 + $0xc] sm:$0xe]
      %v2224 = vld [vmem:[%s1058 + $0x18] sm:$0xe]
      %v2225 = vld [vmem:[%s1058 + $0x24] sm:$0xe]
      %v2226 = vld [vmem:[%s1058 + $0x30] sm:$0xe]
      %v2227 = vld [vmem:[%s1058 + $0x3c] sm:$0xe]
      %v2228 = vld [vmem:[%s1058 + $0x48] sm:$0xe]
      %v2229 = vld [vmem:[%s1058 + $0x54] sm:$0xe]
      %v2230 = vld [vmem:[%s1058 + $0x60] sm:$0xe]
      %v2231 = vld [vmem:[%s1058 + $0x6c] sm:$0xe]
      %v2232 = vld [vmem:[%s1058 + $0x78] sm:$0xe]
      %v2233 = vld [vmem:[%s1058 + $0x84] sm:$0xe]
      %v2234 = vld [vmem:[%s1058 + $0x90] sm:$0xe]
      %v2235 = vld [vmem:[%s1058 + $0x9c] sm:$0xe]
      %v2236 = vld [vmem:[%s1058 + $0xa8] sm:$0xe]
      %v2237 = vld [vmem:[%s1058 + $0xb4] sm:$0xe]
      %v2286 = vrot.slane %v2222, 5
      %v2287 = vrot.slane %v2286, 4
      %v2288 = vrot.slane %v1791, 5
      %v2289 = vsel %vm1677, %v2287, %v2288
      %v2290 = vrot.slane %v2288, 4
      %v2291 = vrot.slane %v1822, 5
      %v2292 = vsel %vm1677, %v2290, %v2291
      %v2293 = vrot.slane %v2223, 5
      %v2294 = vrot.slane %v2293, 4
      %v2295 = vrot.slane %v1793, 5
      %v2296 = vsel %vm1677, %v2294, %v2295
      %v2297 = vrot.slane %v2295, 4
      %v2298 = vrot.slane %v1823, 5
      %v2299 = vsel %vm1677, %v2297, %v2298
      %v2300 = vrot.slane %v2224, 5
      %v2301 = vrot.slane %v2300, 4
      %v2302 = vrot.slane %v1795, 5
      %v2303 = vsel %vm1677, %v2301, %v2302
      %v2304 = vrot.slane %v2302, 4
      %v2305 = vrot.slane %v1824, 5
      %v2306 = vsel %vm1677, %v2304, %v2305
      %v2307 = vrot.slane %v2225, 5
      %v2308 = vrot.slane %v2307, 4
      %v2309 = vrot.slane %v1797, 5
      %v2310 = vsel %vm1677, %v2308, %v2309
      %v2311 = vrot.slane %v2309, 4
      %v2312 = vrot.slane %v1825, 5
      %v2313 = vsel %vm1677, %v2311, %v2312
      %v2314 = vrot.slane %v2226, 5
      %v2315 = vrot.slane %v2314, 4
      %v2316 = vrot.slane %v1799, 5
      %v2317 = vsel %vm1677, %v2315, %v2316
      %v2318 = vrot.slane %v2316, 4
      %v2319 = vrot.slane %v1826, 5
      %v2320 = vsel %vm1677, %v2318, %v2319
      %v2321 = vrot.slane %v2227, 5
      %v2322 = vrot.slane %v2321, 4
      %v2323 = vrot.slane %v1801, 5
      %v2324 = vsel %vm1677, %v2322, %v2323
      %v2325 = vrot.slane %v2323, 4
      %v2326 = vrot.slane %v1827, 5
      %v2327 = vsel %vm1677, %v2325, %v2326
      %v2328 = vrot.slane %v2228, 5
      %v2329 = vrot.slane %v2328, 4
      %v2330 = vrot.slane %v1803, 5
      %v2331 = vsel %vm1677, %v2329, %v2330
      %v2332 = vrot.slane %v2330, 4
      %v2333 = vrot.slane %v1828, 5
      %v2334 = vsel %vm1677, %v2332, %v2333
      %v2335 = vrot.slane %v2229, 5
      %v2336 = vrot.slane %v2335, 4
      %v2337 = vrot.slane %v1805, 5
      %v2338 = vsel %vm1677, %v2336, %v2337
      %v2339 = vrot.slane %v2337, 4
      %v2340 = vrot.slane %v1829, 5
      %v2341 = vsel %vm1677, %v2339, %v2340
      %v2342 = vrot.slane %v2230, 5
      %v2343 = vrot.slane %v2342, 4
      %v2344 = vrot.slane %v1807, 5
      %v2345 = vsel %vm1677, %v2343, %v2344
      %v2346 = vrot.slane %v2344, 4
      %v2347 = vrot.slane %v1830, 5
      %v2348 = vsel %vm1677, %v2346, %v2347
      %v2349 = vrot.slane %v2231, 5
      %v2350 = vrot.slane %v2349, 4
      %v2351 = vrot.slane %v1809, 5
      %v2352 = vsel %vm1677, %v2350, %v2351
      %v2353 = vrot.slane %v2351, 4
      %v2354 = vrot.slane %v1831, 5
      %v2355 = vsel %vm1677, %v2353, %v2354
      %v2356 = vrot.slane %v2232, 5
      %v2357 = vrot.slane %v2356, 4
      %v2358 = vrot.slane %v1811, 5
      %v2359 = vsel %vm1677, %v2357, %v2358
      %v2360 = vrot.slane %v2358, 4
      %v2361 = vrot.slane %v1832, 5
      %v2362 = vsel %vm1677, %v2360, %v2361
      %v2363 = vrot.slane %v2233, 5
      %v2364 = vrot.slane %v2363, 4
      %v2365 = vrot.slane %v1813, 5
      %v2366 = vsel %vm1677, %v2364, %v2365
      %v2367 = vrot.slane %v2365, 4
      %v2368 = vrot.slane %v1833, 5
      %v2369 = vsel %vm1677, %v2367, %v2368
      %v2370 = vrot.slane %v2234, 5
      %v2371 = vrot.slane %v2370, 4
      %v2372 = vrot.slane %v1815, 5
      %v2373 = vsel %vm1677, %v2371, %v2372
      %v2374 = vrot.slane %v2372, 4
      %v2375 = vrot.slane %v1834, 5
      %v2376 = vsel %vm1677, %v2374, %v2375
      %v2377 = vrot.slane %v2235, 5
      %v2378 = vrot.slane %v2377, 4
      %v2379 = vrot.slane %v1817, 5
      %v2380 = vsel %vm1677, %v2378, %v2379
      %v2381 = vrot.slane %v2379, 4
      %v2382 = vrot.slane %v1835, 5
      %v2383 = vsel %vm1677, %v2381, %v2382
      %v2384 = vrot.slane %v2236, 5
      %v2385 = vrot.slane %v2384, 4
      %v2386 = vrot.slane %v1819, 5
      %v2387 = vsel %vm1677, %v2385, %v2386
      %v2388 = vrot.slane %v2386, 4
      %v2389 = vrot.slane %v1836, 5
      %v2390 = vsel %vm1677, %v2388, %v2389
      %v2391 = vrot.slane %v2237, 5
      %v2392 = vrot.slane %v2391, 4
      %v2393 = vrot.slane %v1821, 5
      %v2394 = vsel %vm1677, %v2392, %v2393
      %v2395 = vrot.slane %v2393, 4
      %v2396 = vrot.slane %v1837, 5
      %v2397 = vsel %vm1677, %v2395, %v2396
      %s2398 = scalar_lea.vmem [#allocation2], 24
      %v2399 = vld [vmem:[%s2398] sm:$0xf]
      %v2400 = vld [vmem:[%s2398 + $0x4] sm:$0xf]
      %v2401 = vld [vmem:[%s2398 + $0xc] sm:$0xf]
      %v2402 = vld [vmem:[%s2398 + $0x10] sm:$0xf]
      %v2403 = vld [vmem:[%s2398 + $0x18] sm:$0xf]
      %v2404 = vld [vmem:[%s2398 + $0x1c] sm:$0xf]
      %v2405 = vld [vmem:[%s2398 + $0x24] sm:$0xf]
      %v2406 = vld [vmem:[%s2398 + $0x28] sm:$0xf]
      %v2407 = vld [vmem:[%s2398 + $0x30] sm:$0xf]
      %v2408 = vld [vmem:[%s2398 + $0x34] sm:$0xf]
      %v2409 = vld [vmem:[%s2398 + $0x3c] sm:$0xf]
      %v2410 = vld [vmem:[%s2398 + $0x40] sm:$0xf]
      %v2411 = vld [vmem:[%s2398 + $0x48] sm:$0xf]
      %v2412 = vld [vmem:[%s2398 + $0x4c] sm:$0xf]
      %v2413 = vld [vmem:[%s2398 + $0x54] sm:$0xf]
      %v2414 = vld [vmem:[%s2398 + $0x58] sm:$0xf]
      %v2415 = vld [vmem:[%s2398 + $0x60] sm:$0xf]
      %v2416 = vld [vmem:[%s2398 + $0x64] sm:$0xf]
      %v2417 = vld [vmem:[%s2398 + $0x6c] sm:$0xf]
      %v2418 = vld [vmem:[%s2398 + $0x70] sm:$0xf]
      %v2419 = vld [vmem:[%s2398 + $0x78] sm:$0xf]
      %v2420 = vld [vmem:[%s2398 + $0x7c] sm:$0xf]
      %v2421 = vld [vmem:[%s2398 + $0x84] sm:$0xf]
      %v2422 = vld [vmem:[%s2398 + $0x88] sm:$0xf]
      %v2423 = vld [vmem:[%s2398 + $0x90] sm:$0xf]
      %v2424 = vld [vmem:[%s2398 + $0x94] sm:$0xf]
      %v2425 = vld [vmem:[%s2398 + $0x9c] sm:$0xf]
      %v2426 = vld [vmem:[%s2398 + $0xa0] sm:$0xf]
      %v2427 = vld [vmem:[%s2398 + $0xa8] sm:$0xf]
      %v2428 = vld [vmem:[%s2398 + $0xac] sm:$0xf]
      %v2429 = vld [vmem:[%s2398 + $0xb4] sm:$0xf]
      %v2430 = vld [vmem:[%s2398 + $0xb8] sm:$0xf]
      %v2431 = vld [vmem:[%s2398 + $0x8] sm:$0x1]
      %v2432 = vld [vmem:[%s2398 + $0x14] sm:$0x1]
      %v2433 = vld [vmem:[%s2398 + $0x20] sm:$0x1]
      %v2434 = vld [vmem:[%s2398 + $0x2c] sm:$0x1]
      %v2435 = vld [vmem:[%s2398 + $0x38] sm:$0x1]
      %v2436 = vld [vmem:[%s2398 + $0x44] sm:$0x1]
      %v2437 = vld [vmem:[%s2398 + $0x50] sm:$0x1]
      %v2438 = vld [vmem:[%s2398 + $0x5c] sm:$0x1]
      %v2439 = vld [vmem:[%s2398 + $0x68] sm:$0x1]
      %v2440 = vld [vmem:[%s2398 + $0x74] sm:$0x1]
      %v2441 = vld [vmem:[%s2398 + $0x80] sm:$0x1]
      %v2442 = vld [vmem:[%s2398 + $0x8c] sm:$0x1]
      %v2443 = vld [vmem:[%s2398 + $0x98] sm:$0x1]
      %v2444 = vld [vmem:[%s2398 + $0xa4] sm:$0x1]
      %v2445 = vld [vmem:[%s2398 + $0xb0] sm:$0x1]
      %v2446 = vld [vmem:[%s2398 + $0xbc] sm:$0x1]
      %v2448 = vshrl.u32 %v2399, 16
      %v2450 = vrot.slane %v2448, 4
      %v2451 = vshll.u32 %v2399, 16
      %v2453 = vrot.slane %v2451, 5
      %v2454 = vor.u32 %v2450, %v2453
      %v2455 = vrot.slane %v2454, 4
      %v2457 = vshll.u32 %v2400, 16
      %v2459 = vrot.slane %v2457, 5
      %v2460 = vsel %vm1226, %v2455, %v2459
      %v2461 = vshrl.u32 %v2400, 16
      %v2463 = vrot.slane %v2461, 4
      %v2464 = vor.u32 %v2463, %v2459
      %v2465 = vrot.slane %v2464, 4
      %v2467 = vshll.u32 %v2431, 16
      %v2469 = vrot.slane %v2467, 5
      %v2470 = vsel %vm1226, %v2465, %v2469
      %v2472 = vshrl.u32 %v2401, 16
      %v2474 = vrot.slane %v2472, 4
      %v2475 = vshll.u32 %v2401, 16
      %v2477 = vrot.slane %v2475, 5
      %v2478 = vor.u32 %v2474, %v2477
      %v2479 = vrot.slane %v2478, 4
      %v2481 = vshll.u32 %v2402, 16
      %v2483 = vrot.slane %v2481, 5
      %v2484 = vsel %vm1226, %v2479, %v2483
      %v2485 = vshrl.u32 %v2402, 16
      %v2487 = vrot.slane %v2485, 4
      %v2488 = vor.u32 %v2487, %v2483
      %v2489 = vrot.slane %v2488, 4
      %v2491 = vshll.u32 %v2432, 16
      %v2493 = vrot.slane %v2491, 5
      %v2494 = vsel %vm1226, %v2489, %v2493
      %v2496 = vshrl.u32 %v2403, 16
      %v2498 = vrot.slane %v2496, 4
      %v2499 = vshll.u32 %v2403, 16
      %v2501 = vrot.slane %v2499, 5
      %v2502 = vor.u32 %v2498, %v2501
      %v2503 = vrot.slane %v2502, 4
      %v2505 = vshll.u32 %v2404, 16
      %v2507 = vrot.slane %v2505, 5
      %v2508 = vsel %vm1226, %v2503, %v2507
      %v2509 = vshrl.u32 %v2404, 16
      %v2511 = vrot.slane %v2509, 4
      %v2512 = vor.u32 %v2511, %v2507
      %v2513 = vrot.slane %v2512, 4
      %v2515 = vshll.u32 %v2433, 16
      %v2517 = vrot.slane %v2515, 5
      %v2518 = vsel %vm1226, %v2513, %v2517
      %v2520 = vshrl.u32 %v2405, 16
      %v2522 = vrot.slane %v2520, 4
      %v2523 = vshll.u32 %v2405, 16
      %v2525 = vrot.slane %v2523, 5
      %v2526 = vor.u32 %v2522, %v2525
      %v2527 = vrot.slane %v2526, 4
      %v2529 = vshll.u32 %v2406, 16
      %v2531 = vrot.slane %v2529, 5
      %v2532 = vsel %vm1226, %v2527, %v2531
      %v2533 = vshrl.u32 %v2406, 16
      %v2535 = vrot.slane %v2533, 4
      %v2536 = vor.u32 %v2535, %v2531
      %v2537 = vrot.slane %v2536, 4
      %v2539 = vshll.u32 %v2434, 16
      %v2541 = vrot.slane %v2539, 5
      %v2542 = vsel %vm1226, %v2537, %v2541
      %v2544 = vshrl.u32 %v2407, 16
      %v2546 = vrot.slane %v2544, 4
      %v2547 = vshll.u32 %v2407, 16
      %v2549 = vrot.slane %v2547, 5
      %v2550 = vor.u32 %v2546, %v2549
      %v2551 = vrot.slane %v2550, 4
      %v2553 = vshll.u32 %v2408, 16
      %v2555 = vrot.slane %v2553, 5
      %v2556 = vsel %vm1226, %v2551, %v2555
      %v2557 = vshrl.u32 %v2408, 16
      %v2559 = vrot.slane %v2557, 4
      %v2560 = vor.u32 %v2559, %v2555
      %v2561 = vrot.slane %v2560, 4
      %v2563 = vshll.u32 %v2435, 16
      %v2565 = vrot.slane %v2563, 5
      %v2566 = vsel %vm1226, %v2561, %v2565
      %v2568 = vshrl.u32 %v2409, 16
      %v2570 = vrot.slane %v2568, 4
      %v2571 = vshll.u32 %v2409, 16
      %v2573 = vrot.slane %v2571, 5
      %v2574 = vor.u32 %v2570, %v2573
      %v2575 = vrot.slane %v2574, 4
      %v2577 = vshll.u32 %v2410, 16
      %v2579 = vrot.slane %v2577, 5
      %v2580 = vsel %vm1226, %v2575, %v2579
      %v2581 = vshrl.u32 %v2410, 16
      %v2583 = vrot.slane %v2581, 4
      %v2584 = vor.u32 %v2583, %v2579
      %v2585 = vrot.slane %v2584, 4
      %v2587 = vshll.u32 %v2436, 16
      %v2589 = vrot.slane %v2587, 5
      %v2590 = vsel %vm1226, %v2585, %v2589
      %v2592 = vshrl.u32 %v2411, 16
      %v2594 = vrot.slane %v2592, 4
      %v2595 = vshll.u32 %v2411, 16
      %v2597 = vrot.slane %v2595, 5
      %v2598 = vor.u32 %v2594, %v2597
      %v2599 = vrot.slane %v2598, 4
      %v2601 = vshll.u32 %v2412, 16
      %v2603 = vrot.slane %v2601, 5
      %v2604 = vsel %vm1226, %v2599, %v2603
      %v2605 = vshrl.u32 %v2412, 16
      %v2607 = vrot.slane %v2605, 4
      %v2608 = vor.u32 %v2607, %v2603
      %v2609 = vrot.slane %v2608, 4
      %v2611 = vshll.u32 %v2437, 16
      %v2613 = vrot.slane %v2611, 5
      %v2614 = vsel %vm1226, %v2609, %v2613
      %v2616 = vshrl.u32 %v2413, 16
      %v2618 = vrot.slane %v2616, 4
      %v2619 = vshll.u32 %v2413, 16
      %v2621 = vrot.slane %v2619, 5
      %v2622 = vor.u32 %v2618, %v2621
      %v2623 = vrot.slane %v2622, 4
      %v2625 = vshll.u32 %v2414, 16
      %v2627 = vrot.slane %v2625, 5
      %v2628 = vsel %vm1226, %v2623, %v2627
      %v2629 = vshrl.u32 %v2414, 16
      %v2631 = vrot.slane %v2629, 4
      %v2632 = vor.u32 %v2631, %v2627
      %v2633 = vrot.slane %v2632, 4
      %v2635 = vshll.u32 %v2438, 16
      %v2637 = vrot.slane %v2635, 5
      %v2638 = vsel %vm1226, %v2633, %v2637
      %v2640 = vshrl.u32 %v2415, 16
      %v2642 = vrot.slane %v2640, 4
      %v2643 = vshll.u32 %v2415, 16
      %v2645 = vrot.slane %v2643, 5
      %v2646 = vor.u32 %v2642, %v2645
      %v2647 = vrot.slane %v2646, 4
      %v2649 = vshll.u32 %v2416, 16
      %v2651 = vrot.slane %v2649, 5
      %v2652 = vsel %vm1226, %v2647, %v2651
      %v2653 = vshrl.u32 %v2416, 16
      %v2655 = vrot.slane %v2653, 4
      %v2656 = vor.u32 %v2655, %v2651
      %v2657 = vrot.slane %v2656, 4
      %v2659 = vshll.u32 %v2439, 16
      %v2661 = vrot.slane %v2659, 5
      %v2662 = vsel %vm1226, %v2657, %v2661
      %v2664 = vshrl.u32 %v2417, 16
      %v2666 = vrot.slane %v2664, 4
      %v2667 = vshll.u32 %v2417, 16
      %v2669 = vrot.slane %v2667, 5
      %v2670 = vor.u32 %v2666, %v2669
      %v2671 = vrot.slane %v2670, 4
      %v2673 = vshll.u32 %v2418, 16
      %v2675 = vrot.slane %v2673, 5
      %v2676 = vsel %vm1226, %v2671, %v2675
      %v2677 = vshrl.u32 %v2418, 16
      %v2679 = vrot.slane %v2677, 4
      %v2680 = vor.u32 %v2679, %v2675
      %v2681 = vrot.slane %v2680, 4
      %v2683 = vshll.u32 %v2440, 16
      %v2685 = vrot.slane %v2683, 5
      %v2686 = vsel %vm1226, %v2681, %v2685
      %v2688 = vshrl.u32 %v2419, 16
      %v2690 = vrot.slane %v2688, 4
      %v2691 = vshll.u32 %v2419, 16
      %v2693 = vrot.slane %v2691, 5
      %v2694 = vor.u32 %v2690, %v2693
      %v2695 = vrot.slane %v2694, 4
      %v2697 = vshll.u32 %v2420, 16
      %v2699 = vrot.slane %v2697, 5
      %v2700 = vsel %vm1226, %v2695, %v2699
      %v2701 = vshrl.u32 %v2420, 16
      %v2703 = vrot.slane %v2701, 4
      %v2704 = vor.u32 %v2703, %v2699
      %v2705 = vrot.slane %v2704, 4
      %v2707 = vshll.u32 %v2441, 16
      %v2709 = vrot.slane %v2707, 5
      %v2710 = vsel %vm1226, %v2705, %v2709
      %v2712 = vshrl.u32 %v2421, 16
      %v2714 = vrot.slane %v2712, 4
      %v2715 = vshll.u32 %v2421, 16
      %v2717 = vrot.slane %v2715, 5
      %v2718 = vor.u32 %v2714, %v2717
      %v2719 = vrot.slane %v2718, 4
      %v2721 = vshll.u32 %v2422, 16
      %v2723 = vrot.slane %v2721, 5
      %v2724 = vsel %vm1226, %v2719, %v2723
      %v2725 = vshrl.u32 %v2422, 16
      %v2727 = vrot.slane %v2725, 4
      %v2728 = vor.u32 %v2727, %v2723
      %v2729 = vrot.slane %v2728, 4
      %v2731 = vshll.u32 %v2442, 16
      %v2733 = vrot.slane %v2731, 5
      %v2734 = vsel %vm1226, %v2729, %v2733
      %v2736 = vshrl.u32 %v2423, 16
      %v2738 = vrot.slane %v2736, 4
      %v2739 = vshll.u32 %v2423, 16
      %v2741 = vrot.slane %v2739, 5
      %v2742 = vor.u32 %v2738, %v2741
      %v2743 = vrot.slane %v2742, 4
      %v2745 = vshll.u32 %v2424, 16
      %v2747 = vrot.slane %v2745, 5
      %v2748 = vsel %vm1226, %v2743, %v2747
      %v2749 = vshrl.u32 %v2424, 16
      %v2751 = vrot.slane %v2749, 4
      %v2752 = vor.u32 %v2751, %v2747
      %v2753 = vrot.slane %v2752, 4
      %v2755 = vshll.u32 %v2443, 16
      %v2757 = vrot.slane %v2755, 5
      %v2758 = vsel %vm1226, %v2753, %v2757
      %v2760 = vshrl.u32 %v2425, 16
      %v2762 = vrot.slane %v2760, 4
      %v2763 = vshll.u32 %v2425, 16
      %v2765 = vrot.slane %v2763, 5
      %v2766 = vor.u32 %v2762, %v2765
      %v2767 = vrot.slane %v2766, 4
      %v2769 = vshll.u32 %v2426, 16
      %v2771 = vrot.slane %v2769, 5
      %v2772 = vsel %vm1226, %v2767, %v2771
      %v2773 = vshrl.u32 %v2426, 16
      %v2775 = vrot.slane %v2773, 4
      %v2776 = vor.u32 %v2775, %v2771
      %v2777 = vrot.slane %v2776, 4
      %v2779 = vshll.u32 %v2444, 16
      %v2781 = vrot.slane %v2779, 5
      %v2782 = vsel %vm1226, %v2777, %v2781
      %v2784 = vshrl.u32 %v2427, 16
      %v2786 = vrot.slane %v2784, 4
      %v2787 = vshll.u32 %v2427, 16
      %v2789 = vrot.slane %v2787, 5
      %v2790 = vor.u32 %v2786, %v2789
      %v2791 = vrot.slane %v2790, 4
      %v2793 = vshll.u32 %v2428, 16
      %v2795 = vrot.slane %v2793, 5
      %v2796 = vsel %vm1226, %v2791, %v2795
      %v2797 = vshrl.u32 %v2428, 16
      %v2799 = vrot.slane %v2797, 4
      %v2800 = vor.u32 %v2799, %v2795
      %v2801 = vrot.slane %v2800, 4
      %v2803 = vshll.u32 %v2445, 16
      %v2805 = vrot.slane %v2803, 5
      %v2806 = vsel %vm1226, %v2801, %v2805
      %v2808 = vshrl.u32 %v2429, 16
      %v2810 = vrot.slane %v2808, 4
      %v2811 = vshll.u32 %v2429, 16
      %v2813 = vrot.slane %v2811, 5
      %v2814 = vor.u32 %v2810, %v2813
      %v2815 = vrot.slane %v2814, 4
      %v2817 = vshll.u32 %v2430, 16
      %v2819 = vrot.slane %v2817, 5
      %v2820 = vsel %vm1226, %v2815, %v2819
      %v2821 = vshrl.u32 %v2430, 16
      %v2823 = vrot.slane %v2821, 4
      %v2824 = vor.u32 %v2823, %v2819
      %v2825 = vrot.slane %v2824, 4
      %v2827 = vshll.u32 %v2446, 16
      %v2829 = vrot.slane %v2827, 5
      %v2830 = vsel %vm1226, %v2825, %v2829
      %v2831 = vld [vmem:[%s2398] sm:$0xe]
      %v2832 = vld [vmem:[%s2398 + $0xc] sm:$0xe]
      %v2833 = vld [vmem:[%s2398 + $0x18] sm:$0xe]
      %v2834 = vld [vmem:[%s2398 + $0x24] sm:$0xe]
      %v2835 = vld [vmem:[%s2398 + $0x30] sm:$0xe]
      %v2836 = vld [vmem:[%s2398 + $0x3c] sm:$0xe]
      %v2837 = vld [vmem:[%s2398 + $0x48] sm:$0xe]
      %v2838 = vld [vmem:[%s2398 + $0x54] sm:$0xe]
      %v2839 = vld [vmem:[%s2398 + $0x60] sm:$0xe]
      %v2840 = vld [vmem:[%s2398 + $0x6c] sm:$0xe]
      %v2841 = vld [vmem:[%s2398 + $0x78] sm:$0xe]
      %v2842 = vld [vmem:[%s2398 + $0x84] sm:$0xe]
      %v2843 = vld [vmem:[%s2398 + $0x90] sm:$0xe]
      %v2844 = vld [vmem:[%s2398 + $0x9c] sm:$0xe]
      %v2845 = vld [vmem:[%s2398 + $0xa8] sm:$0xe]
      %v2846 = vld [vmem:[%s2398 + $0xb4] sm:$0xe]
      %v2895 = vrot.slane %v2831, 5
      %v2896 = vrot.slane %v2895, 4
      %v2897 = vrot.slane %v2400, 5
      %v2898 = vsel %vm1677, %v2896, %v2897
      %v2899 = vrot.slane %v2897, 4
      %v2900 = vrot.slane %v2431, 5
      %v2901 = vsel %vm1677, %v2899, %v2900
      %v2902 = vrot.slane %v2832, 5
      %v2903 = vrot.slane %v2902, 4
      %v2904 = vrot.slane %v2402, 5
      %v2905 = vsel %vm1677, %v2903, %v2904
      %v2906 = vrot.slane %v2904, 4
      %v2907 = vrot.slane %v2432, 5
      %v2908 = vsel %vm1677, %v2906, %v2907
      %v2909 = vrot.slane %v2833, 5
      %v2910 = vrot.slane %v2909, 4
      %v2911 = vrot.slane %v2404, 5
      %v2912 = vsel %vm1677, %v2910, %v2911
      %v2913 = vrot.slane %v2911, 4
      %v2914 = vrot.slane %v2433, 5
      %v2915 = vsel %vm1677, %v2913, %v2914
      %v2916 = vrot.slane %v2834, 5
      %v2917 = vrot.slane %v2916, 4
      %v2918 = vrot.slane %v2406, 5
      %v2919 = vsel %vm1677, %v2917, %v2918
      %v2920 = vrot.slane %v2918, 4
      %v2921 = vrot.slane %v2434, 5
      %v2922 = vsel %vm1677, %v2920, %v2921
      %v2923 = vrot.slane %v2835, 5
      %v2924 = vrot.slane %v2923, 4
      %v2925 = vrot.slane %v2408, 5
      %v2926 = vsel %vm1677, %v2924, %v2925
      %v2927 = vrot.slane %v2925, 4
      %v2928 = vrot.slane %v2435, 5
      %v2929 = vsel %vm1677, %v2927, %v2928
      %v2930 = vrot.slane %v2836, 5
      %v2931 = vrot.slane %v2930, 4
      %v2932 = vrot.slane %v2410, 5
      %v2933 = vsel %vm1677, %v2931, %v2932
      %v2934 = vrot.slane %v2932, 4
      %v2935 = vrot.slane %v2436, 5
      %v2936 = vsel %vm1677, %v2934, %v2935
      %v2937 = vrot.slane %v2837, 5
      %v2938 = vrot.slane %v2937, 4
      %v2939 = vrot.slane %v2412, 5
      %v2940 = vsel %vm1677, %v2938, %v2939
      %v2941 = vrot.slane %v2939, 4
      %v2942 = vrot.slane %v2437, 5
      %v2943 = vsel %vm1677, %v2941, %v2942
      %v2944 = vrot.slane %v2838, 5
      %v2945 = vrot.slane %v2944, 4
      %v2946 = vrot.slane %v2414, 5
      %v2947 = vsel %vm1677, %v2945, %v2946
      %v2948 = vrot.slane %v2946, 4
      %v2949 = vrot.slane %v2438, 5
      %v2950 = vsel %vm1677, %v2948, %v2949
      %v2951 = vrot.slane %v2839, 5
      %v2952 = vrot.slane %v2951, 4
      %v2953 = vrot.slane %v2416, 5
      %v2954 = vsel %vm1677, %v2952, %v2953
      %v2955 = vrot.slane %v2953, 4
      %v2956 = vrot.slane %v2439, 5
      %v2957 = vsel %vm1677, %v2955, %v2956
      %v2958 = vrot.slane %v2840, 5
      %v2959 = vrot.slane %v2958, 4
      %v2960 = vrot.slane %v2418, 5
      %v2961 = vsel %vm1677, %v2959, %v2960
      %v2962 = vrot.slane %v2960, 4
      %v2963 = vrot.slane %v2440, 5
      %v2964 = vsel %vm1677, %v2962, %v2963
      %v2965 = vrot.slane %v2841, 5
      %v2966 = vrot.slane %v2965, 4
      %v2967 = vrot.slane %v2420, 5
      %v2968 = vsel %vm1677, %v2966, %v2967
      %v2969 = vrot.slane %v2967, 4
      %v2970 = vrot.slane %v2441, 5
      %v2971 = vsel %vm1677, %v2969, %v2970
      %v2972 = vrot.slane %v2842, 5
      %v2973 = vrot.slane %v2972, 4
      %v2974 = vrot.slane %v2422, 5
      %v2975 = vsel %vm1677, %v2973, %v2974
      %v2976 = vrot.slane %v2974, 4
      %v2977 = vrot.slane %v2442, 5
      %v2978 = vsel %vm1677, %v2976, %v2977
      %v2979 = vrot.slane %v2843, 5
      %v2980 = vrot.slane %v2979, 4
      %v2981 = vrot.slane %v2424, 5
      %v2982 = vsel %vm1677, %v2980, %v2981
      %v2983 = vrot.slane %v2981, 4
      %v2984 = vrot.slane %v2443, 5
      %v2985 = vsel %vm1677, %v2983, %v2984
      %v2986 = vrot.slane %v2844, 5
      %v2987 = vrot.slane %v2986, 4
      %v2988 = vrot.slane %v2426, 5
      %v2989 = vsel %vm1677, %v2987, %v2988
      %v2990 = vrot.slane %v2988, 4
      %v2991 = vrot.slane %v2444, 5
      %v2992 = vsel %vm1677, %v2990, %v2991
      %v2993 = vrot.slane %v2845, 5
      %v2994 = vrot.slane %v2993, 4
      %v2995 = vrot.slane %v2428, 5
      %v2996 = vsel %vm1677, %v2994, %v2995
      %v2997 = vrot.slane %v2995, 4
      %v2998 = vrot.slane %v2445, 5
      %v2999 = vsel %vm1677, %v2997, %v2998
      %v3000 = vrot.slane %v2846, 5
      %v3001 = vrot.slane %v3000, 4
      %v3002 = vrot.slane %v2430, 5
      %v3003 = vsel %vm1677, %v3001, %v3002
      %v3004 = vrot.slane %v3002, 4
      %v3005 = vrot.slane %v2446, 5
      %v3006 = vsel %vm1677, %v3004, %v3005
      %v3023 = vunpack.c.l.b16 %v1176
      %v3024 = vunpack.c.l.b16 %v1177
      %v3025 = vunpack.c.l.b16 %v1178
      %v3026 = vunpack.c.l.b16 %v1179
      %v3027 = vunpack.c.l.b16 %v1180
      %v3028 = vunpack.c.l.b16 %v1181
      %v3029 = vunpack.c.l.b16 %v1182
      %v3030 = vunpack.c.l.b16 %v1183
      %v3031 = vunpack.c.l.b16 %v1184
      %v3032 = vunpack.c.l.b16 %v1185
      %v3033 = vunpack.c.l.b16 %v1186
      %v3034 = vunpack.c.l.b16 %v1187
      %v3035 = vunpack.c.l.b16 %v1188
      %v3036 = vunpack.c.l.b16 %v1189
      %v3037 = vunpack.c.l.b16 %v1190
      %v3038 = vunpack.c.l.b16 %v1191
      %v3039 = vunpack.c.l.b16 %v1192
      %v3040 = vunpack.c.l.b16 %v1193
      %v3041 = vunpack.c.l.b16 %v1194
      %v3042 = vunpack.c.l.b16 %v1195
      %v3043 = vunpack.c.l.b16 %v1196
      %v3044 = vunpack.c.l.b16 %v1197
      %v3045 = vunpack.c.l.b16 %v1198
      %v3046 = vunpack.c.l.b16 %v1199
      %v3047 = vunpack.c.l.b16 %v1200
      %v3048 = vunpack.c.l.b16 %v1201
      %v3049 = vunpack.c.l.b16 %v1202
      %v3050 = vunpack.c.l.b16 %v1203
      %v3051 = vunpack.c.l.b16 %v1204
      %v3052 = vunpack.c.l.b16 %v1205
      %v3053 = vunpack.c.l.b16 %v1206
      %v3054 = vunpack.c.l.b16 %v1207
      %v3055 = vpack.c.b16 %v3024, %v3023
      %v3056 = vpack.c.b16 %v3026, %v3025
      %v3057 = vpack.c.b16 %v3028, %v3027
      %v3058 = vpack.c.b16 %v3030, %v3029
      %v3059 = vpack.c.b16 %v3032, %v3031
      %v3060 = vpack.c.b16 %v3034, %v3033
      %v3061 = vpack.c.b16 %v3036, %v3035
      %v3062 = vpack.c.b16 %v3038, %v3037
      %v3063 = vpack.c.b16 %v3040, %v3039
      %v3064 = vpack.c.b16 %v3042, %v3041
      %v3065 = vpack.c.b16 %v3044, %v3043
      %v3066 = vpack.c.b16 %v3046, %v3045
      %v3067 = vpack.c.b16 %v3048, %v3047
      %v3068 = vpack.c.b16 %v3050, %v3049
      %v3069 = vpack.c.b16 %v3052, %v3051
      %v3070 = vpack.c.b16 %v3054, %v3053
      %v3087 = vunpack.c.l.b16 %v1240
      %v3088 = vunpack.c.l.b16 %v1250
      %v3089 = vunpack.c.l.b16 %v1264
      %v3090 = vunpack.c.l.b16 %v1274
      %v3091 = vunpack.c.l.b16 %v1288
      %v3092 = vunpack.c.l.b16 %v1298
      %v3093 = vunpack.c.l.b16 %v1312
      %v3094 = vunpack.c.l.b16 %v1322
      %v3095 = vunpack.c.l.b16 %v1336
      %v3096 = vunpack.c.l.b16 %v1346
      %v3097 = vunpack.c.l.b16 %v1360
      %v3098 = vunpack.c.l.b16 %v1370
      %v3099 = vunpack.c.l.b16 %v1384
      %v3100 = vunpack.c.l.b16 %v1394
      %v3101 = vunpack.c.l.b16 %v1408
      %v3102 = vunpack.c.l.b16 %v1418
      %v3103 = vunpack.c.l.b16 %v1432
      %v3104 = vunpack.c.l.b16 %v1442
      %v3105 = vunpack.c.l.b16 %v1456
      %v3106 = vunpack.c.l.b16 %v1466
      %v3107 = vunpack.c.l.b16 %v1480
      %v3108 = vunpack.c.l.b16 %v1490
      %v3109 = vunpack.c.l.b16 %v1504
      %v3110 = vunpack.c.l.b16 %v1514
      %v3111 = vunpack.c.l.b16 %v1528
      %v3112 = vunpack.c.l.b16 %v1538
      %v3113 = vunpack.c.l.b16 %v1552
      %v3114 = vunpack.c.l.b16 %v1562
      %v3115 = vunpack.c.l.b16 %v1576
      %v3116 = vunpack.c.l.b16 %v1586
      %v3117 = vunpack.c.l.b16 %v1600
      %v3118 = vunpack.c.l.b16 %v1610
      %v3119 = vpack.c.b16 %v3088, %v3087
      %v3120 = vpack.c.b16 %v3090, %v3089
      %v3121 = vpack.c.b16 %v3092, %v3091
      %v3122 = vpack.c.b16 %v3094, %v3093
      %v3123 = vpack.c.b16 %v3096, %v3095
      %v3124 = vpack.c.b16 %v3098, %v3097
      %v3125 = vpack.c.b16 %v3100, %v3099
      %v3126 = vpack.c.b16 %v3102, %v3101
      %v3127 = vpack.c.b16 %v3104, %v3103
      %v3128 = vpack.c.b16 %v3106, %v3105
      %v3129 = vpack.c.b16 %v3108, %v3107
      %v3130 = vpack.c.b16 %v3110, %v3109
      %v3131 = vpack.c.b16 %v3112, %v3111
      %v3132 = vpack.c.b16 %v3114, %v3113
      %v3133 = vpack.c.b16 %v3116, %v3115
      %v3134 = vpack.c.b16 %v3118, %v3117
      %v3151 = vunpack.c.l.b16 %v1681
      %v3152 = vunpack.c.l.b16 %v1684
      %v3153 = vunpack.c.l.b16 %v1688
      %v3154 = vunpack.c.l.b16 %v1691
      %v3155 = vunpack.c.l.b16 %v1695
      %v3156 = vunpack.c.l.b16 %v1698
      %v3157 = vunpack.c.l.b16 %v1702
      %v3158 = vunpack.c.l.b16 %v1705
      %v3159 = vunpack.c.l.b16 %v1709
      %v3160 = vunpack.c.l.b16 %v1712
      %v3161 = vunpack.c.l.b16 %v1716
      %v3162 = vunpack.c.l.b16 %v1719
      %v3163 = vunpack.c.l.b16 %v1723
      %v3164 = vunpack.c.l.b16 %v1726
      %v3165 = vunpack.c.l.b16 %v1730
      %v3166 = vunpack.c.l.b16 %v1733
      %v3167 = vunpack.c.l.b16 %v1737
      %v3168 = vunpack.c.l.b16 %v1740
      %v3169 = vunpack.c.l.b16 %v1744
      %v3170 = vunpack.c.l.b16 %v1747
      %v3171 = vunpack.c.l.b16 %v1751
      %v3172 = vunpack.c.l.b16 %v1754
      %v3173 = vunpack.c.l.b16 %v1758
      %v3174 = vunpack.c.l.b16 %v1761
      %v3175 = vunpack.c.l.b16 %v1765
      %v3176 = vunpack.c.l.b16 %v1768
      %v3177 = vunpack.c.l.b16 %v1772
      %v3178 = vunpack.c.l.b16 %v1775
      %v3179 = vunpack.c.l.b16 %v1779
      %v3180 = vunpack.c.l.b16 %v1782
      %v3181 = vunpack.c.l.b16 %v1786
      %v3182 = vunpack.c.l.b16 %v1789
      %v3183 = vpack.c.b16 %v3152, %v3151
      %v3184 = vpack.c.b16 %v3154, %v3153
      %v3185 = vpack.c.b16 %v3156, %v3155
      %v3186 = vpack.c.b16 %v3158, %v3157
      %v3187 = vpack.c.b16 %v3160, %v3159
      %v3188 = vpack.c.b16 %v3162, %v3161
      %v3189 = vpack.c.b16 %v3164, %v3163
      %v3190 = vpack.c.b16 %v3166, %v3165
      %v3191 = vpack.c.b16 %v3168, %v3167
      %v3192 = vpack.c.b16 %v3170, %v3169
      %v3193 = vpack.c.b16 %v3172, %v3171
      %v3194 = vpack.c.b16 %v3174, %v3173
      %v3195 = vpack.c.b16 %v3176, %v3175
      %v3196 = vpack.c.b16 %v3178, %v3177
      %v3197 = vpack.c.b16 %v3180, %v3179
      %v3198 = vpack.c.b16 %v3182, %v3181
      %v3231 = vunpack.c.l.b16 %v1790
      %v3232 = vunpack.c.l.b16 %v1791
      %v3233 = vunpack.c.l.b16 %v1792
      %v3234 = vunpack.c.l.b16 %v1793
      %v3235 = vunpack.c.l.b16 %v1794
      %v3236 = vunpack.c.l.b16 %v1795
      %v3237 = vunpack.c.l.b16 %v1796
      %v3238 = vunpack.c.l.b16 %v1797
      %v3239 = vunpack.c.l.b16 %v1798
      %v3240 = vunpack.c.l.b16 %v1799
      %v3241 = vunpack.c.l.b16 %v1800
      %v3242 = vunpack.c.l.b16 %v1801
      %v3243 = vunpack.c.l.b16 %v1802
      %v3244 = vunpack.c.l.b16 %v1803
      %v3245 = vunpack.c.l.b16 %v1804
      %v3246 = vunpack.c.l.b16 %v1805
      %v3247 = vunpack.c.l.b16 %v1806
      %v3248 = vunpack.c.l.b16 %v1807
      %v3249 = vunpack.c.l.b16 %v1808
      %v3250 = vunpack.c.l.b16 %v1809
      %v3251 = vunpack.c.l.b16 %v1810
      %v3252 = vunpack.c.l.b16 %v1811
      %v3253 = vunpack.c.l.b16 %v1812
      %v3254 = vunpack.c.l.b16 %v1813
      %v3255 = vunpack.c.l.b16 %v1814
      %v3256 = vunpack.c.l.b16 %v1815
      %v3257 = vunpack.c.l.b16 %v1816
      %v3258 = vunpack.c.l.b16 %v1817
      %v3259 = vunpack.c.l.b16 %v1818
      %v3260 = vunpack.c.l.b16 %v1819
      %v3261 = vunpack.c.l.b16 %v1820
      %v3262 = vunpack.c.l.b16 %v1821
      %v3263 = vpack.c.b16 %v3232, %v3231
      %v3264 = vpack.c.b16 %v3234, %v3233
      %v3265 = vpack.c.b16 %v3236, %v3235
      %v3266 = vpack.c.b16 %v3238, %v3237
      %v3267 = vpack.c.b16 %v3240, %v3239
      %v3268 = vpack.c.b16 %v3242, %v3241
      %v3269 = vpack.c.b16 %v3244, %v3243
      %v3270 = vpack.c.b16 %v3246, %v3245
      %v3271 = vpack.c.b16 %v3248, %v3247
      %v3272 = vpack.c.b16 %v3250, %v3249
      %v3273 = vpack.c.b16 %v3252, %v3251
      %v3274 = vpack.c.b16 %v3254, %v3253
      %v3275 = vpack.c.b16 %v3256, %v3255
      %v3276 = vpack.c.b16 %v3258, %v3257
      %v3277 = vpack.c.b16 %v3260, %v3259
      %v3278 = vpack.c.b16 %v3262, %v3261
      %v3295 = vunpack.c.l.b16 %v1851
      %v3296 = vunpack.c.l.b16 %v1861
      %v3297 = vunpack.c.l.b16 %v1875
      %v3298 = vunpack.c.l.b16 %v1885
      %v3299 = vunpack.c.l.b16 %v1899
      %v3300 = vunpack.c.l.b16 %v1909
      %v3301 = vunpack.c.l.b16 %v1923
      %v3302 = vunpack.c.l.b16 %v1933
      %v3303 = vunpack.c.l.b16 %v1947
      %v3304 = vunpack.c.l.b16 %v1957
      %v3305 = vunpack.c.l.b16 %v1971
      %v3306 = vunpack.c.l.b16 %v1981
      %v3307 = vunpack.c.l.b16 %v1995
      %v3308 = vunpack.c.l.b16 %v2005
      %v3309 = vunpack.c.l.b16 %v2019
      %v3310 = vunpack.c.l.b16 %v2029
      %v3311 = vunpack.c.l.b16 %v2043
      %v3312 = vunpack.c.l.b16 %v2053
      %v3313 = vunpack.c.l.b16 %v2067
      %v3314 = vunpack.c.l.b16 %v2077
      %v3315 = vunpack.c.l.b16 %v2091
      %v3316 = vunpack.c.l.b16 %v2101
      %v3317 = vunpack.c.l.b16 %v2115
      %v3318 = vunpack.c.l.b16 %v2125
      %v3319 = vunpack.c.l.b16 %v2139
      %v3320 = vunpack.c.l.b16 %v2149
      %v3321 = vunpack.c.l.b16 %v2163
      %v3322 = vunpack.c.l.b16 %v2173
      %v3323 = vunpack.c.l.b16 %v2187
      %v3324 = vunpack.c.l.b16 %v2197
      %v3325 = vunpack.c.l.b16 %v2211
      %v3326 = vunpack.c.l.b16 %v2221
      %v3327 = vpack.c.b16 %v3296, %v3295
      %v3328 = vpack.c.b16 %v3298, %v3297
      %v3329 = vpack.c.b16 %v3300, %v3299
      %v3330 = vpack.c.b16 %v3302, %v3301
      %v3331 = vpack.c.b16 %v3304, %v3303
      %v3332 = vpack.c.b16 %v3306, %v3305
      %v3333 = vpack.c.b16 %v3308, %v3307
      %v3334 = vpack.c.b16 %v3310, %v3309
      %v3335 = vpack.c.b16 %v3312, %v3311
      %v3336 = vpack.c.b16 %v3314, %v3313
      %v3337 = vpack.c.b16 %v3316, %v3315
      %v3338 = vpack.c.b16 %v3318, %v3317
      %v3339 = vpack.c.b16 %v3320, %v3319
      %v3340 = vpack.c.b16 %v3322, %v3321
      %v3341 = vpack.c.b16 %v3324, %v3323
      %v3342 = vpack.c.b16 %v3326, %v3325
      %v3359 = vunpack.c.l.b16 %v2289
      %v3360 = vunpack.c.l.b16 %v2292
      %v3361 = vunpack.c.l.b16 %v2296
      %v3362 = vunpack.c.l.b16 %v2299
      %v3363 = vunpack.c.l.b16 %v2303
      %v3364 = vunpack.c.l.b16 %v2306
      %v3365 = vunpack.c.l.b16 %v2310
      %v3366 = vunpack.c.l.b16 %v2313
      %v3367 = vunpack.c.l.b16 %v2317
      %v3368 = vunpack.c.l.b16 %v2320
      %v3369 = vunpack.c.l.b16 %v2324
      %v3370 = vunpack.c.l.b16 %v2327
      %v3371 = vunpack.c.l.b16 %v2331
      %v3372 = vunpack.c.l.b16 %v2334
      %v3373 = vunpack.c.l.b16 %v2338
      %v3374 = vunpack.c.l.b16 %v2341
      %v3375 = vunpack.c.l.b16 %v2345
      %v3376 = vunpack.c.l.b16 %v2348
      %v3377 = vunpack.c.l.b16 %v2352
      %v3378 = vunpack.c.l.b16 %v2355
      %v3379 = vunpack.c.l.b16 %v2359
      %v3380 = vunpack.c.l.b16 %v2362
      %v3381 = vunpack.c.l.b16 %v2366
      %v3382 = vunpack.c.l.b16 %v2369
      %v3383 = vunpack.c.l.b16 %v2373
      %v3384 = vunpack.c.l.b16 %v2376
      %v3385 = vunpack.c.l.b16 %v2380
      %v3386 = vunpack.c.l.b16 %v2383
      %v3387 = vunpack.c.l.b16 %v2387
      %v3388 = vunpack.c.l.b16 %v2390
      %v3389 = vunpack.c.l.b16 %v2394
      %v3390 = vunpack.c.l.b16 %v2397
      %v3391 = vpack.c.b16 %v3360, %v3359
      %v3392 = vpack.c.b16 %v3362, %v3361
      %v3393 = vpack.c.b16 %v3364, %v3363
      %v3394 = vpack.c.b16 %v3366, %v3365
      %v3395 = vpack.c.b16 %v3368, %v3367
      %v3396 = vpack.c.b16 %v3370, %v3369
      %v3397 = vpack.c.b16 %v3372, %v3371
      %v3398 = vpack.c.b16 %v3374, %v3373
      %v3399 = vpack.c.b16 %v3376, %v3375
      %v3400 = vpack.c.b16 %v3378, %v3377
      %v3401 = vpack.c.b16 %v3380, %v3379
      %v3402 = vpack.c.b16 %v3382, %v3381
      %v3403 = vpack.c.b16 %v3384, %v3383
      %v3404 = vpack.c.b16 %v3386, %v3385
      %v3405 = vpack.c.b16 %v3388, %v3387
      %v3406 = vpack.c.b16 %v3390, %v3389
      %v3439 = vunpack.c.l.b16 %v2399
      %v3440 = vunpack.c.l.b16 %v2400
      %v3441 = vunpack.c.l.b16 %v2401
      %v3442 = vunpack.c.l.b16 %v2402
      %v3443 = vunpack.c.l.b16 %v2403
      %v3444 = vunpack.c.l.b16 %v2404
      %v3445 = vunpack.c.l.b16 %v2405
      %v3446 = vunpack.c.l.b16 %v2406
      %v3447 = vunpack.c.l.b16 %v2407
      %v3448 = vunpack.c.l.b16 %v2408
      %v3449 = vunpack.c.l.b16 %v2409
      %v3450 = vunpack.c.l.b16 %v2410
      %v3451 = vunpack.c.l.b16 %v2411
      %v3452 = vunpack.c.l.b16 %v2412
      %v3453 = vunpack.c.l.b16 %v2413
      %v3454 = vunpack.c.l.b16 %v2414
      %v3455 = vunpack.c.l.b16 %v2415
      %v3456 = vunpack.c.l.b16 %v2416
      %v3457 = vunpack.c.l.b16 %v2417
      %v3458 = vunpack.c.l.b16 %v2418
      %v3459 = vunpack.c.l.b16 %v2419
      %v3460 = vunpack.c.l.b16 %v2420
      %v3461 = vunpack.c.l.b16 %v2421
      %v3462 = vunpack.c.l.b16 %v2422
      %v3463 = vunpack.c.l.b16 %v2423
      %v3464 = vunpack.c.l.b16 %v2424
      %v3465 = vunpack.c.l.b16 %v2425
      %v3466 = vunpack.c.l.b16 %v2426
      %v3467 = vunpack.c.l.b16 %v2427
      %v3468 = vunpack.c.l.b16 %v2428
      %v3469 = vunpack.c.l.b16 %v2429
      %v3470 = vunpack.c.l.b16 %v2430
      %v3471 = vpack.c.b16 %v3440, %v3439
      %v3472 = vpack.c.b16 %v3442, %v3441
      %v3473 = vpack.c.b16 %v3444, %v3443
      %v3474 = vpack.c.b16 %v3446, %v3445
      %v3475 = vpack.c.b16 %v3448, %v3447
      %v3476 = vpack.c.b16 %v3450, %v3449
      %v3477 = vpack.c.b16 %v3452, %v3451
      %v3478 = vpack.c.b16 %v3454, %v3453
      %v3479 = vpack.c.b16 %v3456, %v3455
      %v3480 = vpack.c.b16 %v3458, %v3457
      %v3481 = vpack.c.b16 %v3460, %v3459
      %v3482 = vpack.c.b16 %v3462, %v3461
      %v3483 = vpack.c.b16 %v3464, %v3463
      %v3484 = vpack.c.b16 %v3466, %v3465
      %v3485 = vpack.c.b16 %v3468, %v3467
      %v3486 = vpack.c.b16 %v3470, %v3469
      %v3503 = vunpack.c.l.b16 %v2460
      %v3504 = vunpack.c.l.b16 %v2470
      %v3505 = vunpack.c.l.b16 %v2484
      %v3506 = vunpack.c.l.b16 %v2494
      %v3507 = vunpack.c.l.b16 %v2508
      %v3508 = vunpack.c.l.b16 %v2518
      %v3509 = vunpack.c.l.b16 %v2532
      %v3510 = vunpack.c.l.b16 %v2542
      %v3511 = vunpack.c.l.b16 %v2556
      %v3512 = vunpack.c.l.b16 %v2566
      %v3513 = vunpack.c.l.b16 %v2580
      %v3514 = vunpack.c.l.b16 %v2590
      %v3515 = vunpack.c.l.b16 %v2604
      %v3516 = vunpack.c.l.b16 %v2614
      %v3517 = vunpack.c.l.b16 %v2628
      %v3518 = vunpack.c.l.b16 %v2638
      %v3519 = vunpack.c.l.b16 %v2652
      %v3520 = vunpack.c.l.b16 %v2662
      %v3521 = vunpack.c.l.b16 %v2676
      %v3522 = vunpack.c.l.b16 %v2686
      %v3523 = vunpack.c.l.b16 %v2700
      %v3524 = vunpack.c.l.b16 %v2710
      %v3525 = vunpack.c.l.b16 %v2724
      %v3526 = vunpack.c.l.b16 %v2734
      %v3527 = vunpack.c.l.b16 %v2748
      %v3528 = vunpack.c.l.b16 %v2758
      %v3529 = vunpack.c.l.b16 %v2772
      %v3530 = vunpack.c.l.b16 %v2782
      %v3531 = vunpack.c.l.b16 %v2796
      %v3532 = vunpack.c.l.b16 %v2806
      %v3533 = vunpack.c.l.b16 %v2820
      %v3534 = vunpack.c.l.b16 %v2830
      %v3535 = vpack.c.b16 %v3504, %v3503
      %v3536 = vpack.c.b16 %v3506, %v3505
      %v3537 = vpack.c.b16 %v3508, %v3507
      %v3538 = vpack.c.b16 %v3510, %v3509
      %v3539 = vpack.c.b16 %v3512, %v3511
      %v3540 = vpack.c.b16 %v3514, %v3513
      %v3541 = vpack.c.b16 %v3516, %v3515
      %v3542 = vpack.c.b16 %v3518, %v3517
      %v3543 = vpack.c.b16 %v3520, %v3519
      %v3544 = vpack.c.b16 %v3522, %v3521
      %v3545 = vpack.c.b16 %v3524, %v3523
      %v3546 = vpack.c.b16 %v3526, %v3525
      %v3547 = vpack.c.b16 %v3528, %v3527
      %v3548 = vpack.c.b16 %v3530, %v3529
      %v3549 = vpack.c.b16 %v3532, %v3531
      %v3550 = vpack.c.b16 %v3534, %v3533
      %v3567 = vunpack.c.l.b16 %v2898
      %v3568 = vunpack.c.l.b16 %v2901
      %v3569 = vunpack.c.l.b16 %v2905
      %v3570 = vunpack.c.l.b16 %v2908
      %v3571 = vunpack.c.l.b16 %v2912
      %v3572 = vunpack.c.l.b16 %v2915
      %v3573 = vunpack.c.l.b16 %v2919
      %v3574 = vunpack.c.l.b16 %v2922
      %v3575 = vunpack.c.l.b16 %v2926
      %v3576 = vunpack.c.l.b16 %v2929
      %v3577 = vunpack.c.l.b16 %v2933
      %v3578 = vunpack.c.l.b16 %v2936
      %v3579 = vunpack.c.l.b16 %v2940
      %v3580 = vunpack.c.l.b16 %v2943
      %v3581 = vunpack.c.l.b16 %v2947
      %v3582 = vunpack.c.l.b16 %v2950
      %v3583 = vunpack.c.l.b16 %v2954
      %v3584 = vunpack.c.l.b16 %v2957
      %v3585 = vunpack.c.l.b16 %v2961
      %v3586 = vunpack.c.l.b16 %v2964
      %v3587 = vunpack.c.l.b16 %v2968
      %v3588 = vunpack.c.l.b16 %v2971
      %v3589 = vunpack.c.l.b16 %v2975
      %v3590 = vunpack.c.l.b16 %v2978
      %v3591 = vunpack.c.l.b16 %v2982
      %v3592 = vunpack.c.l.b16 %v2985
      %v3593 = vunpack.c.l.b16 %v2989
      %v3594 = vunpack.c.l.b16 %v2992
      %v3595 = vunpack.c.l.b16 %v2996
      %v3596 = vunpack.c.l.b16 %v2999
      %v3597 = vunpack.c.l.b16 %v3003
      %v3598 = vunpack.c.l.b16 %v3006
      %v3599 = vpack.c.b16 %v3568, %v3567
      %v3600 = vpack.c.b16 %v3570, %v3569
      %v3601 = vpack.c.b16 %v3572, %v3571
      %v3602 = vpack.c.b16 %v3574, %v3573
      %v3603 = vpack.c.b16 %v3576, %v3575
      %v3604 = vpack.c.b16 %v3578, %v3577
      %v3605 = vpack.c.b16 %v3580, %v3579
      %v3606 = vpack.c.b16 %v3582, %v3581
      %v3607 = vpack.c.b16 %v3584, %v3583
      %v3608 = vpack.c.b16 %v3586, %v3585
      %v3609 = vpack.c.b16 %v3588, %v3587
      %v3610 = vpack.c.b16 %v3590, %v3589
      %v3611 = vpack.c.b16 %v3592, %v3591
      %v3612 = vpack.c.b16 %v3594, %v3593
      %v3613 = vpack.c.b16 %v3596, %v3595
      %v3614 = vpack.c.b16 %v3598, %v3597
      %v3631 = vld [vmem:[%s3] sm:$0xf]
      %v3632 = vld [vmem:[%s3 + $0x4] sm:$0xf]
      %v3633 = vld [vmem:[%s3 + $0x8] sm:$0xf]
      %v3634 = vld [vmem:[%s3 + $0xc] sm:$0xf]
      %v3635 = vld [vmem:[%s3 + $0x10] sm:$0xf]
      %v3636 = vld [vmem:[%s3 + $0x14] sm:$0xf]
      %v3637 = vld [vmem:[%s3 + $0x18] sm:$0xf]
      %v3638 = vld [vmem:[%s3 + $0x1c] sm:$0xf]
      %v3639 = vld [vmem:[%s3 + $0x20] sm:$0xf]
      %v3640 = vld [vmem:[%s3 + $0x24] sm:$0xf]
      %v3641 = vld [vmem:[%s3 + $0x28] sm:$0xf]
      %v3642 = vld [vmem:[%s3 + $0x2c] sm:$0xf]
      %v3643 = vld [vmem:[%s3 + $0x30] sm:$0xf]
      %v3644 = vld [vmem:[%s3 + $0x34] sm:$0xf]
      %v3645 = vld [vmem:[%s3 + $0x38] sm:$0xf]
      %v3646 = vld [vmem:[%s3 + $0x3c] sm:$0xf]
      %v3647 = vld [vmem:[%s3 + $0x40] sm:$0xf]
      %v3648 = vld [vmem:[%s3 + $0x44] sm:$0xf]
      %v3649 = vld [vmem:[%s3 + $0x48] sm:$0xf]
      %v3650 = vld [vmem:[%s3 + $0x4c] sm:$0xf]
      %v3651 = vld [vmem:[%s3 + $0x50] sm:$0xf]
      %v3652 = vld [vmem:[%s3 + $0x54] sm:$0xf]
      %v3653 = vld [vmem:[%s3 + $0x58] sm:$0xf]
      %v3654 = vld [vmem:[%s3 + $0x5c] sm:$0xf]
      %v3655 = vld [vmem:[%s3 + $0x60] sm:$0xf]
      %v3656 = vld [vmem:[%s3 + $0x64] sm:$0xf]
      %v3657 = vld [vmem:[%s3 + $0x68] sm:$0xf]
      %v3658 = vld [vmem:[%s3 + $0x6c] sm:$0xf]
      %v3659 = vld [vmem:[%s3 + $0x70] sm:$0xf]
      %v3660 = vld [vmem:[%s3 + $0x74] sm:$0xf]
      %v3661 = vld [vmem:[%s3 + $0x78] sm:$0xf]
      %v3662 = vld [vmem:[%s3 + $0x7c] sm:$0xf]
      %v3663 = vld [vmem:[%s3 + $0x80] sm:$0xf]
      %v3664 = vld [vmem:[%s3 + $0x84] sm:$0xf]
      %v3665 = vld [vmem:[%s3 + $0x88] sm:$0xf]
      %v3666 = vld [vmem:[%s3 + $0x8c] sm:$0xf]
      %v3667 = vld [vmem:[%s3 + $0x90] sm:$0xf]
      %v3668 = vld [vmem:[%s3 + $0x94] sm:$0xf]
      %v3669 = vld [vmem:[%s3 + $0x98] sm:$0xf]
      %v3670 = vld [vmem:[%s3 + $0x9c] sm:$0xf]
      %v3671 = vld [vmem:[%s3 + $0xa0] sm:$0xf]
      %v3672 = vld [vmem:[%s3 + $0xa4] sm:$0xf]
      %v3673 = vld [vmem:[%s3 + $0xa8] sm:$0xf]
      %v3674 = vld [vmem:[%s3 + $0xac] sm:$0xf]
      %v3675 = vld [vmem:[%s3 + $0xb0] sm:$0xf]
      %v3676 = vld [vmem:[%s3 + $0xb4] sm:$0xf]
      %v3677 = vld [vmem:[%s3 + $0xb8] sm:$0xf]
      %v3678 = vld [vmem:[%s3 + $0xbc] sm:$0xf]
      %v3679 = vld [vmem:[%s3 + $0xc0] sm:$0xf]
      %v3680 = vld [vmem:[%s3 + $0xc4] sm:$0xf]
      %v3681 = vld [vmem:[%s3 + $0xc8] sm:$0xf]
      %v3682 = vld [vmem:[%s3 + $0xcc] sm:$0xf]
      %v3683 = vld [vmem:[%s3 + $0xd0] sm:$0xf]
      %v3684 = vld [vmem:[%s3 + $0xd4] sm:$0xf]
      %v3685 = vld [vmem:[%s3 + $0xd8] sm:$0xf]
      %v3686 = vld [vmem:[%s3 + $0xdc] sm:$0xf]
      %v3687 = vld [vmem:[%s3 + $0xe0] sm:$0xf]
      %v3688 = vld [vmem:[%s3 + $0xe4] sm:$0xf]
      %v3689 = vld [vmem:[%s3 + $0xe8] sm:$0xf]
      %v3690 = vld [vmem:[%s3 + $0xec] sm:$0xf]
      %v3691 = vld [vmem:[%s3 + $0xf0] sm:$0xf]
      %v3692 = vld [vmem:[%s3 + $0xf4] sm:$0xf]
      %v3693 = vld [vmem:[%s3 + $0xf8] sm:$0xf]
      %v3694 = vld [vmem:[%s3 + $0xfc] sm:$0xf]
      %v3695 = vld [vmem:[%s3 + $0x100] sm:$0xf]
      %v3696 = vld [vmem:[%s3 + $0x104] sm:$0xf]
      %v3697 = vld [vmem:[%s3 + $0x108] sm:$0xf]
      %v3698 = vld [vmem:[%s3 + $0x10c] sm:$0xf]
      %v3699 = vld [vmem:[%s3 + $0x110] sm:$0xf]
      %v3700 = vld [vmem:[%s3 + $0x114] sm:$0xf]
      %v3701 = vld [vmem:[%s3 + $0x118] sm:$0xf]
      %v3702 = vld [vmem:[%s3 + $0x11c] sm:$0xf]
      %v3703 = vld [vmem:[%s3 + $0x120] sm:$0xf]
      %v3704 = vld [vmem:[%s3 + $0x124] sm:$0xf]
      %v3705 = vld [vmem:[%s3 + $0x128] sm:$0xf]
      %v3706 = vld [vmem:[%s3 + $0x12c] sm:$0xf]
      %v3707 = vld [vmem:[%s3 + $0x130] sm:$0xf]
      %v3708 = vld [vmem:[%s3 + $0x134] sm:$0xf]
      %v3709 = vld [vmem:[%s3 + $0x138] sm:$0xf]
      %v3710 = vld [vmem:[%s3 + $0x13c] sm:$0xf]
      %v3711 = vld [vmem:[%s3 + $0x140] sm:$0xf]
      %v3712 = vld [vmem:[%s3 + $0x144] sm:$0xf]
      %v3713 = vld [vmem:[%s3 + $0x148] sm:$0xf]
      %v3714 = vld [vmem:[%s3 + $0x14c] sm:$0xf]
      %v3715 = vld [vmem:[%s3 + $0x150] sm:$0xf]
      %v3716 = vld [vmem:[%s3 + $0x154] sm:$0xf]
      %v3717 = vld [vmem:[%s3 + $0x158] sm:$0xf]
      %v3718 = vld [vmem:[%s3 + $0x15c] sm:$0xf]
      %v3719 = vld [vmem:[%s3 + $0x160] sm:$0xf]
      %v3720 = vld [vmem:[%s3 + $0x164] sm:$0xf]
      %v3721 = vld [vmem:[%s3 + $0x168] sm:$0xf]
      %v3722 = vld [vmem:[%s3 + $0x16c] sm:$0xf]
      %v3723 = vld [vmem:[%s3 + $0x170] sm:$0xf]
      %v3724 = vld [vmem:[%s3 + $0x174] sm:$0xf]
      %v3725 = vld [vmem:[%s3 + $0x178] sm:$0xf]
      %v3726 = vld [vmem:[%s3 + $0x17c] sm:$0xf]
      %v3727 = vld [vmem:[%s3 + $0x180] sm:$0xf]
      %v3728 = vld [vmem:[%s3 + $0x184] sm:$0xf]
      %v3729 = vld [vmem:[%s3 + $0x188] sm:$0xf]
      %v3730 = vld [vmem:[%s3 + $0x18c] sm:$0xf]
      %v3731 = vld [vmem:[%s3 + $0x190] sm:$0xf]
      %v3732 = vld [vmem:[%s3 + $0x194] sm:$0xf]
      %v3733 = vld [vmem:[%s3 + $0x198] sm:$0xf]
      %v3734 = vld [vmem:[%s3 + $0x19c] sm:$0xf]
      %v3735 = vld [vmem:[%s3 + $0x1a0] sm:$0xf]
      %v3736 = vld [vmem:[%s3 + $0x1a4] sm:$0xf]
      %v3737 = vld [vmem:[%s3 + $0x1a8] sm:$0xf]
      %v3738 = vld [vmem:[%s3 + $0x1ac] sm:$0xf]
      %v3739 = vld [vmem:[%s3 + $0x1b0] sm:$0xf]
      %v3740 = vld [vmem:[%s3 + $0x1b4] sm:$0xf]
      %v3741 = vld [vmem:[%s3 + $0x1b8] sm:$0xf]
      %v3742 = vld [vmem:[%s3 + $0x1bc] sm:$0xf]
      %v3743 = vld [vmem:[%s3 + $0x1c0] sm:$0xf]
      %v3744 = vld [vmem:[%s3 + $0x1c4] sm:$0xf]
      %v3745 = vld [vmem:[%s3 + $0x1c8] sm:$0xf]
      %v3746 = vld [vmem:[%s3 + $0x1cc] sm:$0xf]
      %v3747 = vld [vmem:[%s3 + $0x1d0] sm:$0xf]
      %v3748 = vld [vmem:[%s3 + $0x1d4] sm:$0xf]
      %v3749 = vld [vmem:[%s3 + $0x1d8] sm:$0xf]
      %v3750 = vld [vmem:[%s3 + $0x1dc] sm:$0xf]
      %v3751 = vld [vmem:[%s3 + $0x1e0] sm:$0xf]
      %v3752 = vld [vmem:[%s3 + $0x1e4] sm:$0xf]
      %v3753 = vld [vmem:[%s3 + $0x1e8] sm:$0xf]
      %v3754 = vld [vmem:[%s3 + $0x1ec] sm:$0xf]
      %v3755 = vld [vmem:[%s3 + $0x1f0] sm:$0xf]
      %v3756 = vld [vmem:[%s3 + $0x1f4] sm:$0xf]
      %v3757 = vld [vmem:[%s3 + $0x1f8] sm:$0xf]
      %v3758 = vld [vmem:[%s3 + $0x1fc] sm:$0xf]
      %v3759 = vld [vmem:[%s3 + $0x200] sm:$0xf]
      %v3760 = vld [vmem:[%s3 + $0x204] sm:$0xf]
      %v3761 = vld [vmem:[%s3 + $0x208] sm:$0xf]
      %v3762 = vld [vmem:[%s3 + $0x20c] sm:$0xf]
      %v3763 = vld [vmem:[%s3 + $0x210] sm:$0xf]
      %v3764 = vld [vmem:[%s3 + $0x214] sm:$0xf]
      %v3765 = vld [vmem:[%s3 + $0x218] sm:$0xf]
      %v3766 = vld [vmem:[%s3 + $0x21c] sm:$0xf]
      %v3767 = vld [vmem:[%s3 + $0x220] sm:$0xf]
      %v3768 = vld [vmem:[%s3 + $0x224] sm:$0xf]
      %v3769 = vld [vmem:[%s3 + $0x228] sm:$0xf]
      %v3770 = vld [vmem:[%s3 + $0x22c] sm:$0xf]
      %v3771 = vld [vmem:[%s3 + $0x230] sm:$0xf]
      %v3772 = vld [vmem:[%s3 + $0x234] sm:$0xf]
      %v3773 = vld [vmem:[%s3 + $0x238] sm:$0xf]
      %v3774 = vld [vmem:[%s3 + $0x23c] sm:$0xf]
      %v3775 = vld [vmem:[%s4] sm:$0x1]
      %v3777 = vlaneseq
      %v3778 = vshrl.u32 %v3777, 7
      %v3779 = vsub.s32 0, %v3778
      %v3780 = vrot.slane %v3775, %v3779
      %v3926 = vunpack.c.l.b16 %v3631
      %v3927 = vunpack.c.l.b16 %v3632
      %v3928 = vunpack.c.l.b16 %v3633
      %v3929 = vunpack.c.l.b16 %v3634
      %v3930 = vunpack.c.l.b16 %v3635
      %v3931 = vunpack.c.l.b16 %v3636
      %v3932 = vunpack.c.l.b16 %v3637
      %v3933 = vunpack.c.l.b16 %v3638
      %v3934 = vunpack.c.l.b16 %v3639
      %v3935 = vunpack.c.l.b16 %v3640
      %v3936 = vunpack.c.l.b16 %v3641
      %v3937 = vunpack.c.l.b16 %v3642
      %v3938 = vunpack.c.l.b16 %v3643
      %v3939 = vunpack.c.l.b16 %v3644
      %v3940 = vunpack.c.l.b16 %v3645
      %v3941 = vunpack.c.l.b16 %v3646
      %v3942 = vunpack.c.l.b16 %v3647
      %v3943 = vunpack.c.l.b16 %v3648
      %v3944 = vunpack.c.l.b16 %v3649
      %v3945 = vunpack.c.l.b16 %v3650
      %v3946 = vunpack.c.l.b16 %v3651
      %v3947 = vunpack.c.l.b16 %v3652
      %v3948 = vunpack.c.l.b16 %v3653
      %v3949 = vunpack.c.l.b16 %v3654
      %v3950 = vunpack.c.l.b16 %v3655
      %v3951 = vunpack.c.l.b16 %v3656
      %v3952 = vunpack.c.l.b16 %v3657
      %v3953 = vunpack.c.l.b16 %v3658
      %v3954 = vunpack.c.l.b16 %v3659
      %v3955 = vunpack.c.l.b16 %v3660
      %v3956 = vunpack.c.l.b16 %v3661
      %v3957 = vunpack.c.l.b16 %v3662
      %v3958 = vunpack.c.l.b16 %v3663
      %v3959 = vunpack.c.l.b16 %v3664
      %v3960 = vunpack.c.l.b16 %v3665
      %v3961 = vunpack.c.l.b16 %v3666
      %v3962 = vunpack.c.l.b16 %v3667
      %v3963 = vunpack.c.l.b16 %v3668
      %v3964 = vunpack.c.l.b16 %v3669
      %v3965 = vunpack.c.l.b16 %v3670
      %v3966 = vunpack.c.l.b16 %v3671
      %v3967 = vunpack.c.l.b16 %v3672
      %v3968 = vunpack.c.l.b16 %v3673
      %v3969 = vunpack.c.l.b16 %v3674
      %v3970 = vunpack.c.l.b16 %v3675
      %v3971 = vunpack.c.l.b16 %v3676
      %v3972 = vunpack.c.l.b16 %v3677
      %v3973 = vunpack.c.l.b16 %v3678
      %v3974 = vunpack.c.l.b16 %v3679
      %v3975 = vunpack.c.l.b16 %v3680
      %v3976 = vunpack.c.l.b16 %v3681
      %v3977 = vunpack.c.l.b16 %v3682
      %v3978 = vunpack.c.l.b16 %v3683
      %v3979 = vunpack.c.l.b16 %v3684
      %v3980 = vunpack.c.l.b16 %v3685
      %v3981 = vunpack.c.l.b16 %v3686
      %v3982 = vunpack.c.l.b16 %v3687
      %v3983 = vunpack.c.l.b16 %v3688
      %v3984 = vunpack.c.l.b16 %v3689
      %v3985 = vunpack.c.l.b16 %v3690
      %v3986 = vunpack.c.l.b16 %v3691
      %v3987 = vunpack.c.l.b16 %v3692
      %v3988 = vunpack.c.l.b16 %v3693
      %v3989 = vunpack.c.l.b16 %v3694
      %v3990 = vunpack.c.l.b16 %v3695
      %v3991 = vunpack.c.l.b16 %v3696
      %v3992 = vunpack.c.l.b16 %v3697
      %v3993 = vunpack.c.l.b16 %v3698
      %v3994 = vunpack.c.l.b16 %v3699
      %v3995 = vunpack.c.l.b16 %v3700
      %v3996 = vunpack.c.l.b16 %v3701
      %v3997 = vunpack.c.l.b16 %v3702
      %v3998 = vunpack.c.l.b16 %v3703
      %v3999 = vunpack.c.l.b16 %v3704
      %v4000 = vunpack.c.l.b16 %v3705
      %v4001 = vunpack.c.l.b16 %v3706
      %v4002 = vunpack.c.l.b16 %v3707
      %v4003 = vunpack.c.l.b16 %v3708
      %v4004 = vunpack.c.l.b16 %v3709
      %v4005 = vunpack.c.l.b16 %v3710
      %v4006 = vunpack.c.l.b16 %v3711
      %v4007 = vunpack.c.l.b16 %v3712
      %v4008 = vunpack.c.l.b16 %v3713
      %v4009 = vunpack.c.l.b16 %v3714
      %v4010 = vunpack.c.l.b16 %v3715
      %v4011 = vunpack.c.l.b16 %v3716
      %v4012 = vunpack.c.l.b16 %v3717
      %v4013 = vunpack.c.l.b16 %v3718
      %v4014 = vunpack.c.l.b16 %v3719
      %v4015 = vunpack.c.l.b16 %v3720
      %v4016 = vunpack.c.l.b16 %v3721
      %v4017 = vunpack.c.l.b16 %v3722
      %v4018 = vunpack.c.l.b16 %v3723
      %v4019 = vunpack.c.l.b16 %v3724
      %v4020 = vunpack.c.l.b16 %v3725
      %v4021 = vunpack.c.l.b16 %v3726
      %v4022 = vunpack.c.l.b16 %v3727
      %v4023 = vunpack.c.l.b16 %v3728
      %v4024 = vunpack.c.l.b16 %v3729
      %v4025 = vunpack.c.l.b16 %v3730
      %v4026 = vunpack.c.l.b16 %v3731
      %v4027 = vunpack.c.l.b16 %v3732
      %v4028 = vunpack.c.l.b16 %v3733
      %v4029 = vunpack.c.l.b16 %v3734
      %v4030 = vunpack.c.l.b16 %v3735
      %v4031 = vunpack.c.l.b16 %v3736
      %v4032 = vunpack.c.l.b16 %v3737
      %v4033 = vunpack.c.l.b16 %v3738
      %v4034 = vunpack.c.l.b16 %v3739
      %v4035 = vunpack.c.l.b16 %v3740
      %v4036 = vunpack.c.l.b16 %v3741
      %v4037 = vunpack.c.l.b16 %v3742
      %v4038 = vunpack.c.l.b16 %v3743
      %v4039 = vunpack.c.l.b16 %v3744
      %v4040 = vunpack.c.l.b16 %v3745
      %v4041 = vunpack.c.l.b16 %v3746
      %v4042 = vunpack.c.l.b16 %v3747
      %v4043 = vunpack.c.l.b16 %v3748
      %v4044 = vunpack.c.l.b16 %v3749
      %v4045 = vunpack.c.l.b16 %v3750
      %v4046 = vunpack.c.l.b16 %v3751
      %v4047 = vunpack.c.l.b16 %v3752
      %v4048 = vunpack.c.l.b16 %v3753
      %v4049 = vunpack.c.l.b16 %v3754
      %v4050 = vunpack.c.l.b16 %v3755
      %v4051 = vunpack.c.l.b16 %v3756
      %v4052 = vunpack.c.l.b16 %v3757
      %v4053 = vunpack.c.l.b16 %v3758
      %v4054 = vunpack.c.l.b16 %v3759
      %v4055 = vunpack.c.l.b16 %v3760
      %v4056 = vunpack.c.l.b16 %v3761
      %v4057 = vunpack.c.l.b16 %v3762
      %v4058 = vunpack.c.l.b16 %v3763
      %v4059 = vunpack.c.l.b16 %v3764
      %v4060 = vunpack.c.l.b16 %v3765
      %v4061 = vunpack.c.l.b16 %v3766
      %v4062 = vunpack.c.l.b16 %v3767
      %v4063 = vunpack.c.l.b16 %v3768
      %v4064 = vunpack.c.l.b16 %v3769
      %v4065 = vunpack.c.l.b16 %v3770
      %v4066 = vunpack.c.l.b16 %v3771
      %v4067 = vunpack.c.l.b16 %v3772
      %v4068 = vunpack.c.l.b16 %v3773
      %v4069 = vunpack.c.l.b16 %v3774
      %v4070 = vpack.c.b16 %v3927, %v3926
      %v4071 = vpack.c.b16 %v3929, %v3928
      %v4072 = vpack.c.b16 %v3931, %v3930
      %v4073 = vpack.c.b16 %v3933, %v3932
      %v4074 = vpack.c.b16 %v3935, %v3934
      %v4075 = vpack.c.b16 %v3937, %v3936
      %v4076 = vpack.c.b16 %v3939, %v3938
      %v4077 = vpack.c.b16 %v3941, %v3940
      %v4078 = vpack.c.b16 %v3943, %v3942
      %v4079 = vpack.c.b16 %v3945, %v3944
      %v4080 = vpack.c.b16 %v3947, %v3946
      %v4081 = vpack.c.b16 %v3949, %v3948
      %v4082 = vpack.c.b16 %v3951, %v3950
      %v4083 = vpack.c.b16 %v3953, %v3952
      %v4084 = vpack.c.b16 %v3955, %v3954
      %v4085 = vpack.c.b16 %v3957, %v3956
      %v4086 = vpack.c.b16 %v3959, %v3958
      %v4087 = vpack.c.b16 %v3961, %v3960
      %v4088 = vpack.c.b16 %v3963, %v3962
      %v4089 = vpack.c.b16 %v3965, %v3964
      %v4090 = vpack.c.b16 %v3967, %v3966
      %v4091 = vpack.c.b16 %v3969, %v3968
      %v4092 = vpack.c.b16 %v3971, %v3970
      %v4093 = vpack.c.b16 %v3973, %v3972
      %v4094 = vpack.c.b16 %v3975, %v3974
      %v4095 = vpack.c.b16 %v3977, %v3976
      %v4096 = vpack.c.b16 %v3979, %v3978
      %v4097 = vpack.c.b16 %v3981, %v3980
      %v4098 = vpack.c.b16 %v3983, %v3982
      %v4099 = vpack.c.b16 %v3985, %v3984
      %v4100 = vpack.c.b16 %v3987, %v3986
      %v4101 = vpack.c.b16 %v3989, %v3988
      %v4102 = vpack.c.b16 %v3991, %v3990
      %v4103 = vpack.c.b16 %v3993, %v3992
      %v4104 = vpack.c.b16 %v3995, %v3994
      %v4105 = vpack.c.b16 %v3997, %v3996
      %v4106 = vpack.c.b16 %v3999, %v3998
      %v4107 = vpack.c.b16 %v4001, %v4000
      %v4108 = vpack.c.b16 %v4003, %v4002
      %v4109 = vpack.c.b16 %v4005, %v4004
      %v4110 = vpack.c.b16 %v4007, %v4006
      %v4111 = vpack.c.b16 %v4009, %v4008
      %v4112 = vpack.c.b16 %v4011, %v4010
      %v4113 = vpack.c.b16 %v4013, %v4012
      %v4114 = vpack.c.b16 %v4015, %v4014
      %v4115 = vpack.c.b16 %v4017, %v4016
      %v4116 = vpack.c.b16 %v4019, %v4018
      %v4117 = vpack.c.b16 %v4021, %v4020
      %v4118 = vpack.c.b16 %v4023, %v4022
      %v4119 = vpack.c.b16 %v4025, %v4024
      %v4120 = vpack.c.b16 %v4027, %v4026
      %v4121 = vpack.c.b16 %v4029, %v4028
      %v4122 = vpack.c.b16 %v4031, %v4030
      %v4123 = vpack.c.b16 %v4033, %v4032
      %v4124 = vpack.c.b16 %v4035, %v4034
      %v4125 = vpack.c.b16 %v4037, %v4036
      %v4126 = vpack.c.b16 %v4039, %v4038
      %v4127 = vpack.c.b16 %v4041, %v4040
      %v4128 = vpack.c.b16 %v4043, %v4042
      %v4129 = vpack.c.b16 %v4045, %v4044
      %v4130 = vpack.c.b16 %v4047, %v4046
      %v4131 = vpack.c.b16 %v4049, %v4048
      %v4132 = vpack.c.b16 %v4051, %v4050
      %v4133 = vpack.c.b16 %v4053, %v4052
      %v4134 = vpack.c.b16 %v4055, %v4054
      %v4135 = vpack.c.b16 %v4057, %v4056
      %v4136 = vpack.c.b16 %v4059, %v4058
      %v4137 = vpack.c.b16 %v4061, %v4060
      %v4138 = vpack.c.b16 %v4063, %v4062
      %v4139 = vpack.c.b16 %v4065, %v4064
      %v4140 = vpack.c.b16 %v4067, %v4066
      %v4141 = vpack.c.b16 %v4069, %v4068
      %4214 = vmatprep.subr.bf16.mxu0 0
      %4215 = vmatpush1.bf16.msra.mxu0 %v4070
      %4216 = vmatprep.subr.bf16.mxu0 0
      %4217 = vmatpush1.bf16.msra.mxu0 %v4071
      %4218 = vmatprep.subr.bf16.mxu0 0
      %4219 = vmatpush1.bf16.msra.mxu0 %v4072
      %4220 = vmatprep.subr.bf16.mxu0 0
      %4221 = vmatpush1.bf16.msra.mxu0 %v4073
      %4222 = vmatprep.subr.bf16.mxu0 0
      %4223 = vmatpush1.bf16.msra.mxu0 %v4074
      %4224 = vmatprep.subr.bf16.mxu0 0
      %4225 = vmatpush1.bf16.msra.mxu0 %v4075
      %4226 = vmatprep.subr.bf16.mxu0 0
      %4227 = vmatpush1.bf16.msra.mxu0 %v4076
      %4228 = vmatprep.subr.bf16.mxu0 0
      %4229 = vmatpush1.bf16.msra.mxu0 %v4077
      %4230 = vmatprep.subr.bf16.mxu0 0
      %4231 = vmatpush1.bf16.msra.mxu0 %v4078
      %4232 = vmatprep.subr.bf16.mxu0 0
      %4233 = vmatpush1.bf16.msra.mxu0 %v4079
      %4234 = vmatprep.subr.bf16.mxu0 0
      %4235 = vmatpush1.bf16.msra.mxu0 %v4080
      %4236 = vmatprep.subr.bf16.mxu0 0
      %4237 = vmatpush1.bf16.msra.mxu0 %v4081
      %4238 = vmatprep.subr.bf16.mxu0 0
      %4239 = vmatpush1.bf16.msra.mxu0 %v4082
      %4240 = vmatprep.subr.bf16.mxu0 0
      %4241 = vmatpush1.bf16.msra.mxu0 %v4083
      %4242 = vmatprep.subr.bf16.mxu0 0
      %4243 = vmatpush1.bf16.msra.mxu0 %v4084
      %4244 = vmatprep.subr.bf16.mxu0 0
      %4245 = vmatpush1.bf16.msra.mxu0 %v4085
      %4246 = vmatprep.mubr.bf16.mxu0 %v3119
      %4247 = vmatmul.mubr.bf16.gmra.mrb[0].mxu0 %v3055
      %v4248 = vpop.f32.mrb[0].mxu0
      %v4249 = vadd.f32 %v3780, %v4248
      %v4250 = vpop.f32.mrb[0].mxu0
      %v4251 = vpop.f32.mrb[0].mxu0
      %v4252 = vadd.f32 %v3780, %v4251
      %v4253 = vpop.f32.mrb[0].mxu0
      %4254 = vmatprep.mubr.bf16.mxu0 %v3120
      %4255 = vmatmul.mubr.bf16.gmra.mrb[0].mxu0 %v3056
      %v4256 = vpop.f32.mrb[0].mxu0
      %v4257 = vadd.f32 %v3780, %v4256
      %v4258 = vpop.f32.mrb[0].mxu0
      %v4259 = vpop.f32.mrb[0].mxu0
      %v4260 = vadd.f32 %v3780, %v4259
      %v4261 = vpop.f32.mrb[0].mxu0
      %4262 = vmatprep.mubr.bf16.mxu0 %v3121
      %4263 = vmatmul.mubr.bf16.gmra.mrb[0].mxu0 %v3057
      %v4264 = vpop.f32.mrb[0].mxu0
      %v4265 = vadd.f32 %v3780, %v4264
      %v4266 = vpop.f32.mrb[0].mxu0
      %v4267 = vpop.f32.mrb[0].mxu0
      %v4268 = vadd.f32 %v3780, %v4267
      %v4269 = vpop.f32.mrb[0].mxu0
      %4270 = vmatprep.mubr.bf16.mxu0 %v3122
      %4271 = vmatmul.mubr.bf16.gmra.mrb[0].mxu0 %v3058
      %v4272 = vpop.f32.mrb[0].mxu0
      %v4273 = vadd.f32 %v3780, %v4272
      %v4274 = vpop.f32.mrb[0].mxu0
      %v4275 = vpop.f32.mrb[0].mxu0
      %v4276 = vadd.f32 %v3780, %v4275
      %v4277 = vpop.f32.mrb[0].mxu0
      %4278 = vmatprep.mubr.bf16.mxu0 %v3123
      %4279 = vmatmul.mubr.bf16.gmra.mrb[0].mxu0 %v3059
      %v4280 = vpop.f32.mrb[0].mxu0
      %v4281 = vadd.f32 %v3780, %v4280
      %v4282 = vpop.f32.mrb[0].mxu0
      %v4283 = vpop.f32.mrb[0].mxu0
      %v4284 = vadd.f32 %v3780, %v4283
      %v4285 = vpop.f32.mrb[0].mxu0
      %4286 = vmatprep.mubr.bf16.mxu0 %v3124
      %4287 = vmatmul.mubr.bf16.gmra.mrb[0].mxu0 %v3060
      %v4288 = vpop.f32.mrb[0].mxu0
      %v4289 = vadd.f32 %v3780, %v4288
      %v4290 = vpop.f32.mrb[0].mxu0
      %v4291 = vpop.f32.mrb[0].mxu0
      %v4292 = vadd.f32 %v3780, %v4291
      %v4293 = vpop.f32.mrb[0].mxu0
      %4294 = vmatprep.mubr.bf16.mxu0 %v3125
      %4295 = vmatmul.mubr.bf16.gmra.mrb[0].mxu0 %v3061
      %v4296 = vpop.f32.mrb[0].mxu0
      %v4297 = vadd.f32 %v3780, %v4296
      %v4298 = vpop.f32.mrb[0].mxu0
      %v4299 = vpop.f32.mrb[0].mxu0
      %v4300 = vadd.f32 %v3780, %v4299
      %v4301 = vpop.f32.mrb[0].mxu0
      %4302 = vmatprep.mubr.bf16.mxu0 %v3126
      %4303 = vmatmul.mubr.bf16.gmra.mrb[0].mxu0 %v3062
      %v4304 = vpop.f32.mrb[0].mxu0
      %v4305 = vadd.f32 %v3780, %v4304
      %v4306 = vpop.f32.mrb[0].mxu0
      %v4307 = vpop.f32.mrb[0].mxu0
      %v4308 = vadd.f32 %v3780, %v4307
      %v4309 = vpop.f32.mrb[0].mxu0
      %4310 = vmatprep.mubr.bf16.mxu0 %v3127
      %4311 = vmatmul.mubr.bf16.gmra.mrb[0].mxu0 %v3063
      %v4312 = vpop.f32.mrb[0].mxu0
      %v4313 = vadd.f32 %v3780, %v4312
      %v4314 = vpop.f32.mrb[0].mxu0
      %v4315 = vpop.f32.mrb[0].mxu0
      %v4316 = vadd.f32 %v3780, %v4315
      %v4317 = vpop.f32.mrb[0].mxu0
      %4318 = vmatprep.mubr.bf16.mxu0 %v3128
      %4319 = vmatmul.mubr.bf16.gmra.mrb[0].mxu0 %v3064
      %v4320 = vpop.f32.mrb[0].mxu0
      %v4321 = vadd.f32 %v3780, %v4320
      %v4322 = vpop.f32.mrb[0].mxu0
      %v4323 = vpop.f32.mrb[0].mxu0
      %v4324 = vadd.f32 %v3780, %v4323
      %v4325 = vpop.f32.mrb[0].mxu0
      %4326 = vmatprep.mubr.bf16.mxu0 %v3129
      %4327 = vmatmul.mubr.bf16.gmra.mrb[0].mxu0 %v3065
      %v4328 = vpop.f32.mrb[0].mxu0
      %v4329 = vadd.f32 %v3780, %v4328
      %v4330 = vpop.f32.mrb[0].mxu0
      %v4331 = vpop.f32.mrb[0].mxu0
      %v4332 = vadd.f32 %v3780, %v4331
      %v4333 = vpop.f32.mrb[0].mxu0
      %4334 = vmatprep.mubr.bf16.mxu0 %v3130
      %4335 = vmatmul.mubr.bf16.gmra.mrb[0].mxu0 %v3066
      %v4336 = vpop.f32.mrb[0].mxu0
      %v4337 = vadd.f32 %v3780, %v4336
      %v4338 = vpop.f32.mrb[0].mxu0
      %v4339 = vpop.f32.mrb[0].mxu0
      %v4340 = vadd.f32 %v3780, %v4339
      %v4341 = vpop.f32.mrb[0].mxu0
      %4342 = vmatprep.mubr.bf16.mxu0 %v3131
      %4343 = vmatmul.mubr.bf16.gmra.mrb[0].mxu0 %v3067
      %v4344 = vpop.f32.mrb[0].mxu0
      %v4345 = vadd.f32 %v3780, %v4344
      %v4346 = vpop.f32.mrb[0].mxu0
      %v4347 = vpop.f32.mrb[0].mxu0
      %v4348 = vadd.f32 %v3780, %v4347
      %v4349 = vpop.f32.mrb[0].mxu0
      %4350 = vmatprep.mubr.bf16.mxu0 %v3132
      %4351 = vmatmul.mubr.bf16.gmra.mrb[0].mxu0 %v3068
      %v4352 = vpop.f32.mrb[0].mxu0
      %v4353 = vadd.f32 %v3780, %v4352
      %v4354 = vpop.f32.mrb[0].mxu0
      %v4355 = vpop.f32.mrb[0].mxu0
      %v4356 = vadd.f32 %v3780, %v4355
      %v4357 = vpop.f32.mrb[0].mxu0
      %4358 = vmatprep.mubr.bf16.mxu0 %v3133
      %4359 = vmatmul.mubr.bf16.gmra.mrb[0].mxu0 %v3069
      %v4360 = vpop.f32.mrb[0].mxu0
      %v4361 = vadd.f32 %v3780, %v4360
      %v4362 = vpop.f32.mrb[0].mxu0
      %v4363 = vpop.f32.mrb[0].mxu0
      %v4364 = vadd.f32 %v3780, %v4363
      %v4365 = vpop.f32.mrb[0].mxu0
      %4366 = vmatprep.mubr.bf16.mxu0 %v3134
      %4367 = vmatmul.mubr.bf16.gmra.mrb[0].mxu0 %v3070
      %v4368 = vpop.f32.mrb[0].mxu0
      %v4369 = vadd.f32 %v3780, %v4368
      %v4370 = vpop.f32.mrb[0].mxu0
      %v4371 = vpop.f32.mrb[0].mxu0
      %v4372 = vadd.f32 %v3780, %v4371
      %v4373 = vpop.f32.mrb[0].mxu0
      %4374 = vdwg.mxu0
      %4375 = vmatprep.subr.bf16.mxu0 0
      %4376 = vmatpush1.bf16.msra.mxu0 %v4086
      %4377 = vmatprep.subr.bf16.mxu0 0
      %4378 = vmatpush1.bf16.msra.mxu0 %v4087
      %4379 = vmatprep.subr.bf16.mxu0 0
      %4380 = vmatpush1.bf16.msra.mxu0 %v4088
      %4381 = vmatprep.subr.bf16.mxu0 0
      %4382 = vmatpush1.bf16.msra.mxu0 %v4089
      %4383 = vmatprep.subr.bf16.mxu0 0
      %4384 = vmatpush1.bf16.msra.mxu0 %v4090
      %4385 = vmatprep.subr.bf16.mxu0 0
      %4386 = vmatpush1.bf16.msra.mxu0 %v4091
      %4387 = vmatprep.subr.bf16.mxu0 0
      %4388 = vmatpush1.bf16.msra.mxu0 %v4092
      %4389 = vmatprep.subr.bf16.mxu0 0
      %4390 = vmatpush1.bf16.msra.mxu0 %v4093
      %4391 = vmatprep.subr.bf16.mxu0 0
      %4392 = vmatpush1.bf16.msra.mxu0 %v4094
      %4393 = vmatprep.subr.bf16.mxu0 0
      %4394 = vmatpush1.bf16.msra.mxu0 %v4095
      %4395 = vmatprep.subr.bf16.mxu0 0
      %4396 = vmatpush1.bf16.msra.mxu0 %v4096
      %4397 = vmatprep.subr.bf16.mxu0 0
      %4398 = vmatpush1.bf16.msra.mxu0 %v4097
      %4399 = vmatprep.subr.bf16.mxu0 0
      %4400 = vmatpush1.bf16.msra.mxu0 %v4098
      %4401 = vmatprep.subr.bf16.mxu0 0
      %4402 = vmatpush1.bf16.msra.mxu0 %v4099
      %4403 = vmatprep.subr.bf16.mxu0 0
      %4404 = vmatpush1.bf16.msra.mxu0 %v4100
      %4405 = vmatprep.subr.bf16.mxu0 0
      %4406 = vmatpush1.bf16.msra.mxu0 %v4101
      %4407 = vmatprep.mubr.bf16.mxu0 %v3263
      %4408 = vmatmul.mubr.bf16.gmra.mrb[0].mxu0 %v3183
      %v4409 = vpop.f32.mrb[0].mxu0
      %v4410 = vadd.f32 %v4249, %v4409
      %v4411 = vpop.f32.mrb[0].mxu0
      %v4412 = vpop.f32.mrb[0].mxu0
      %v4413 = vadd.f32 %v4252, %v4412
      %v4414 = vpop.f32.mrb[0].mxu0
      %4415 = vmatprep.mubr.bf16.mxu0 %v3264
      %4416 = vmatmul.mubr.bf16.gmra.mrb[0].mxu0 %v3184
      %v4417 = vpop.f32.mrb[0].mxu0
      %v4418 = vadd.f32 %v4257, %v4417
      %v4419 = vpop.f32.mrb[0].mxu0
      %v4420 = vpop.f32.mrb[0].mxu0
      %v4421 = vadd.f32 %v4260, %v4420
      %v4422 = vpop.f32.mrb[0].mxu0
      %4423 = vmatprep.mubr.bf16.mxu0 %v3265
      %4424 = vmatmul.mubr.bf16.gmra.mrb[0].mxu0 %v3185
      %v4425 = vpop.f32.mrb[0].mxu0
      %v4426 = vadd.f32 %v4265, %v4425
      %v4427 = vpop.f32.mrb[0].mxu0
      %v4428 = vpop.f32.mrb[0].mxu0
      %v4429 = vadd.f32 %v4268, %v4428
      %v4430 = vpop.f32.mrb[0].mxu0
      %4431 = vmatprep.mubr.bf16.mxu0 %v3266
      %4432 = vmatmul.mubr.bf16.gmra.mrb[0].mxu0 %v3186
      %v4433 = vpop.f32.mrb[0].mxu0
      %v4434 = vadd.f32 %v4273, %v4433
      %v4435 = vpop.f32.mrb[0].mxu0
      %v4436 = vpop.f32.mrb[0].mxu0
      %v4437 = vadd.f32 %v4276, %v4436
      %v4438 = vpop.f32.mrb[0].mxu0
      %4439 = vmatprep.mubr.bf16.mxu0 %v3267
      %4440 = vmatmul.mubr.bf16.gmra.mrb[0].mxu0 %v3187
      %v4441 = vpop.f32.mrb[0].mxu0
      %v4442 = vadd.f32 %v4281, %v4441
      %v4443 = vpop.f32.mrb[0].mxu0
      %v4444 = vpop.f32.mrb[0].mxu0
      %v4445 = vadd.f32 %v4284, %v4444
      %v4446 = vpop.f32.mrb[0].mxu0
      %4447 = vmatprep.mubr.bf16.mxu0 %v3268
      %4448 = vmatmul.mubr.bf16.gmra.mrb[0].mxu0 %v3188
      %v4449 = vpop.f32.mrb[0].mxu0
      %v4450 = vadd.f32 %v4289, %v4449
      %v4451 = vpop.f32.mrb[0].mxu0
      %v4452 = vpop.f32.mrb[0].mxu0
      %v4453 = vadd.f32 %v4292, %v4452
      %v4454 = vpop.f32.mrb[0].mxu0
      %4455 = vmatprep.mubr.bf16.mxu0 %v3269
      %4456 = vmatmul.mubr.bf16.gmra.mrb[0].mxu0 %v3189
      %v4457 = vpop.f32.mrb[0].mxu0
      %v4458 = vadd.f32 %v4297, %v4457
      %v4459 = vpop.f32.mrb[0].mxu0
      %v4460 = vpop.f32.mrb[0].mxu0
      %v4461 = vadd.f32 %v4300, %v4460
      %v4462 = vpop.f32.mrb[0].mxu0
      %4463 = vmatprep.mubr.bf16.mxu0 %v3270
      %4464 = vmatmul.mubr.bf16.gmra.mrb[0].mxu0 %v3190
      %v4465 = vpop.f32.mrb[0].mxu0
      %v4466 = vadd.f32 %v4305, %v4465
      %v4467 = vpop.f32.mrb[0].mxu0
      %v4468 = vpop.f32.mrb[0].mxu0
      %v4469 = vadd.f32 %v4308, %v4468
      %v4470 = vpop.f32.mrb[0].mxu0
      %4471 = vmatprep.mubr.bf16.mxu0 %v3271
      %4472 = vmatmul.mubr.bf16.gmra.mrb[0].mxu0 %v3191
      %v4473 = vpop.f32.mrb[0].mxu0
      %v4474 = vadd.f32 %v4313, %v4473
      %v4475 = vpop.f32.mrb[0].mxu0
      %v4476 = vpop.f32.mrb[0].mxu0
      %v4477 = vadd.f32 %v4316, %v4476
      %v4478 = vpop.f32.mrb[0].mxu0
      %4479 = vmatprep.mubr.bf16.mxu0 %v3272
      %4480 = vmatmul.mubr.bf16.gmra.mrb[0].mxu0 %v3192
      %v4481 = vpop.f32.mrb[0].mxu0
      %v4482 = vadd.f32 %v4321, %v4481
      %v4483 = vpop.f32.mrb[0].mxu0
      %v4484 = vpop.f32.mrb[0].mxu0
      %v4485 = vadd.f32 %v4324, %v4484
      %v4486 = vpop.f32.mrb[0].mxu0
      %4487 = vmatprep.mubr.bf16.mxu0 %v3273
      %4488 = vmatmul.mubr.bf16.gmra.mrb[0].mxu0 %v3193
      %v4489 = vpop.f32.mrb[0].mxu0
      %v4490 = vadd.f32 %v4329, %v4489
      %v4491 = vpop.f32.mrb[0].mxu0
      %v4492 = vpop.f32.mrb[0].mxu0
      %v4493 = vadd.f32 %v4332, %v4492
      %v4494 = vpop.f32.mrb[0].mxu0
      %4495 = vmatprep.mubr.bf16.mxu0 %v3274
      %4496 = vmatmul.mubr.bf16.gmra.mrb[0].mxu0 %v3194
      %v4497 = vpop.f32.mrb[0].mxu0
      %v4498 = vadd.f32 %v4337, %v4497
      %v4499 = vpop.f32.mrb[0].mxu0
      %v4500 = vpop.f32.mrb[0].mxu0
      %v4501 = vadd.f32 %v4340, %v4500
      %v4502 = vpop.f32.mrb[0].mxu0
      %4503 = vmatprep.mubr.bf16.mxu0 %v3275
      %4504 = vmatmul.mubr.bf16.gmra.mrb[0].mxu0 %v3195
      %v4505 = vpop.f32.mrb[0].mxu0
      %v4506 = vadd.f32 %v4345, %v4505
      %v4507 = vpop.f32.mrb[0].mxu0
      %v4508 = vpop.f32.mrb[0].mxu0
      %v4509 = vadd.f32 %v4348, %v4508
      %v4510 = vpop.f32.mrb[0].mxu0
      %4511 = vmatprep.mubr.bf16.mxu0 %v3276
      %4512 = vmatmul.mubr.bf16.gmra.mrb[0].mxu0 %v3196
      %v4513 = vpop.f32.mrb[0].mxu0
      %v4514 = vadd.f32 %v4353, %v4513
      %v4515 = vpop.f32.mrb[0].mxu0
      %v4516 = vpop.f32.mrb[0].mxu0
      %v4517 = vadd.f32 %v4356, %v4516
      %v4518 = vpop.f32.mrb[0].mxu0
      %4519 = vmatprep.mubr.bf16.mxu0 %v3277
      %4520 = vmatmul.mubr.bf16.gmra.mrb[0].mxu0 %v3197
      %v4521 = vpop.f32.mrb[0].mxu0
      %v4522 = vadd.f32 %v4361, %v4521
      %v4523 = vpop.f32.mrb[0].mxu0
      %v4524 = vpop.f32.mrb[0].mxu0
      %v4525 = vadd.f32 %v4364, %v4524
      %v4526 = vpop.f32.mrb[0].mxu0
      %4527 = vmatprep.mubr.bf16.mxu0 %v3278
      %4528 = vmatmul.mubr.bf16.gmra.mrb[0].mxu0 %v3198
      %v4529 = vpop.f32.mrb[0].mxu0
      %v4530 = vadd.f32 %v4369, %v4529
      %v4531 = vpop.f32.mrb[0].mxu0
      %v4532 = vpop.f32.mrb[0].mxu0
      %v4533 = vadd.f32 %v4372, %v4532
      %v4534 = vpop.f32.mrb[0].mxu0
      %4535 = vdwg.mxu0
      %4536 = vmatprep.subr.bf16.mxu0 0
      %4537 = vmatpush1.bf16.msra.mxu0 %v4102
      %4538 = vmatprep.subr.bf16.mxu0 0
      %4539 = vmatpush1.bf16.msra.mxu0 %v4103
      %4540 = vmatprep.subr.bf16.mxu0 0
      %4541 = vmatpush1.bf16.msra.mxu0 %v4104
      %4542 = vmatprep.subr.bf16.mxu0 0
      %4543 = vmatpush1.bf16.msra.mxu0 %v4105
      %4544 = vmatprep.subr.bf16.mxu0 0
      %4545 = vmatpush1.bf16.msra.mxu0 %v4106
      %4546 = vmatprep.subr.bf16.mxu0 0
      %4547 = vmatpush1.bf16.msra.mxu0 %v4107
      %4548 = vmatprep.subr.bf16.mxu0 0
      %4549 = vmatpush1.bf16.msra.mxu0 %v4108
      %4550 = vmatprep.subr.bf16.mxu0 0
      %4551 = vmatpush1.bf16.msra.mxu0 %v4109
      %4552 = vmatprep.subr.bf16.mxu0 0
      %4553 = vmatpush1.bf16.msra.mxu0 %v4110
      %4554 = vmatprep.subr.bf16.mxu0 0
      %4555 = vmatpush1.bf16.msra.mxu0 %v4111
      %4556 = vmatprep.subr.bf16.mxu0 0
      %4557 = vmatpush1.bf16.msra.mxu0 %v4112
      %4558 = vmatprep.subr.bf16.mxu0 0
      %4559 = vmatpush1.bf16.msra.mxu0 %v4113
      %4560 = vmatprep.subr.bf16.mxu0 0
      %4561 = vmatpush1.bf16.msra.mxu0 %v4114
      %4562 = vmatprep.subr.bf16.mxu0 0
      %4563 = vmatpush1.bf16.msra.mxu0 %v4115
      %4564 = vmatprep.subr.bf16.mxu0 0
      %4565 = vmatpush1.bf16.msra.mxu0 %v4116
      %4566 = vmatprep.subr.bf16.mxu0 0
      %4567 = vmatpush1.bf16.msra.mxu0 %v4117
      %4568 = vmatprep.mubr.bf16.mxu0 %v3391
      %4569 = vmatmul.mubr.bf16.gmra.mrb[0].mxu0 %v3327
      %v4570 = vpop.f32.mrb[0].mxu0
      %v4571 = vadd.f32 %v4410, %v4570
      %v4572 = vpop.f32.mrb[0].mxu0
      %v4573 = vpop.f32.mrb[0].mxu0
      %v4574 = vadd.f32 %v4413, %v4573
      %v4575 = vpop.f32.mrb[0].mxu0
      %4576 = vmatprep.mubr.bf16.mxu0 %v3392
      %4577 = vmatmul.mubr.bf16.gmra.mrb[0].mxu0 %v3328
      %v4578 = vpop.f32.mrb[0].mxu0
      %v4579 = vadd.f32 %v4418, %v4578
      %v4580 = vpop.f32.mrb[0].mxu0
      %v4581 = vpop.f32.mrb[0].mxu0
      %v4582 = vadd.f32 %v4421, %v4581
      %v4583 = vpop.f32.mrb[0].mxu0
      %4584 = vmatprep.mubr.bf16.mxu0 %v3393
      %4585 = vmatmul.mubr.bf16.gmra.mrb[0].mxu0 %v3329
      %v4586 = vpop.f32.mrb[0].mxu0
      %v4587 = vadd.f32 %v4426, %v4586
      %v4588 = vpop.f32.mrb[0].mxu0
      %v4589 = vpop.f32.mrb[0].mxu0
      %v4590 = vadd.f32 %v4429, %v4589
      %v4591 = vpop.f32.mrb[0].mxu0
      %4592 = vmatprep.mubr.bf16.mxu0 %v3394
      %4593 = vmatmul.mubr.bf16.gmra.mrb[0].mxu0 %v3330
      %v4594 = vpop.f32.mrb[0].mxu0
      %v4595 = vadd.f32 %v4434, %v4594
      %v4596 = vpop.f32.mrb[0].mxu0
      %v4597 = vpop.f32.mrb[0].mxu0
      %v4598 = vadd.f32 %v4437, %v4597
      %v4599 = vpop.f32.mrb[0].mxu0
      %4600 = vmatprep.mubr.bf16.mxu0 %v3395
      %4601 = vmatmul.mubr.bf16.gmra.mrb[0].mxu0 %v3331
      %v4602 = vpop.f32.mrb[0].mxu0
      %v4603 = vadd.f32 %v4442, %v4602
      %v4604 = vpop.f32.mrb[0].mxu0
      %v4605 = vpop.f32.mrb[0].mxu0
      %v4606 = vadd.f32 %v4445, %v4605
      %v4607 = vpop.f32.mrb[0].mxu0
      %4608 = vmatprep.mubr.bf16.mxu0 %v3396
      %4609 = vmatmul.mubr.bf16.gmra.mrb[0].mxu0 %v3332
      %v4610 = vpop.f32.mrb[0].mxu0
      %v4611 = vadd.f32 %v4450, %v4610
      %v4612 = vpop.f32.mrb[0].mxu0
      %v4613 = vpop.f32.mrb[0].mxu0
      %v4614 = vadd.f32 %v4453, %v4613
      %v4615 = vpop.f32.mrb[0].mxu0
      %4616 = vmatprep.mubr.bf16.mxu0 %v3397
      %4617 = vmatmul.mubr.bf16.gmra.mrb[0].mxu0 %v3333
      %v4618 = vpop.f32.mrb[0].mxu0
      %v4619 = vadd.f32 %v4458, %v4618
      %v4620 = vpop.f32.mrb[0].mxu0
      %v4621 = vpop.f32.mrb[0].mxu0
      %v4622 = vadd.f32 %v4461, %v4621
      %v4623 = vpop.f32.mrb[0].mxu0
      %4624 = vmatprep.mubr.bf16.mxu0 %v3398
      %4625 = vmatmul.mubr.bf16.gmra.mrb[0].mxu0 %v3334
      %v4626 = vpop.f32.mrb[0].mxu0
      %v4627 = vadd.f32 %v4466, %v4626
      %v4628 = vpop.f32.mrb[0].mxu0
      %v4629 = vpop.f32.mrb[0].mxu0
      %v4630 = vadd.f32 %v4469, %v4629
      %v4631 = vpop.f32.mrb[0].mxu0
      %4632 = vmatprep.mubr.bf16.mxu0 %v3399
      %4633 = vmatmul.mubr.bf16.gmra.mrb[0].mxu0 %v3335
      %v4634 = vpop.f32.mrb[0].mxu0
      %v4635 = vadd.f32 %v4474, %v4634
      %v4636 = vpop.f32.mrb[0].mxu0
      %v4637 = vpop.f32.mrb[0].mxu0
      %v4638 = vadd.f32 %v4477, %v4637
      %v4639 = vpop.f32.mrb[0].mxu0
      %4640 = vmatprep.mubr.bf16.mxu0 %v3400
      %4641 = vmatmul.mubr.bf16.gmra.mrb[0].mxu0 %v3336
      %v4642 = vpop.f32.mrb[0].mxu0
      %v4643 = vadd.f32 %v4482, %v4642
      %v4644 = vpop.f32.mrb[0].mxu0
      %v4645 = vpop.f32.mrb[0].mxu0
      %v4646 = vadd.f32 %v4485, %v4645
      %v4647 = vpop.f32.mrb[0].mxu0
      %4648 = vmatprep.mubr.bf16.mxu0 %v3401
      %4649 = vmatmul.mubr.bf16.gmra.mrb[0].mxu0 %v3337
      %v4650 = vpop.f32.mrb[0].mxu0
      %v4651 = vadd.f32 %v4490, %v4650
      %v4652 = vpop.f32.mrb[0].mxu0
      %v4653 = vpop.f32.mrb[0].mxu0
      %v4654 = vadd.f32 %v4493, %v4653
      %v4655 = vpop.f32.mrb[0].mxu0
      %4656 = vmatprep.mubr.bf16.mxu0 %v3402
      %4657 = vmatmul.mubr.bf16.gmra.mrb[0].mxu0 %v3338
      %v4658 = vpop.f32.mrb[0].mxu0
      %v4659 = vadd.f32 %v4498, %v4658
      %v4660 = vpop.f32.mrb[0].mxu0
      %v4661 = vpop.f32.mrb[0].mxu0
      %v4662 = vadd.f32 %v4501, %v4661
      %v4663 = vpop.f32.mrb[0].mxu0
      %4664 = vmatprep.mubr.bf16.mxu0 %v3403
      %4665 = vmatmul.mubr.bf16.gmra.mrb[0].mxu0 %v3339
      %v4666 = vpop.f32.mrb[0].mxu0
      %v4667 = vadd.f32 %v4506, %v4666
      %v4668 = vpop.f32.mrb[0].mxu0
      %v4669 = vpop.f32.mrb[0].mxu0
      %v4670 = vadd.f32 %v4509, %v4669
      %v4671 = vpop.f32.mrb[0].mxu0
      %4672 = vmatprep.mubr.bf16.mxu0 %v3404
      %4673 = vmatmul.mubr.bf16.gmra.mrb[0].mxu0 %v3340
      %v4674 = vpop.f32.mrb[0].mxu0
      %v4675 = vadd.f32 %v4514, %v4674
      %v4676 = vpop.f32.mrb[0].mxu0
      %v4677 = vpop.f32.mrb[0].mxu0
      %v4678 = vadd.f32 %v4517, %v4677
      %v4679 = vpop.f32.mrb[0].mxu0
      %4680 = vmatprep.mubr.bf16.mxu0 %v3405
      %4681 = vmatmul.mubr.bf16.gmra.mrb[0].mxu0 %v3341
      %v4682 = vpop.f32.mrb[0].mxu0
      %v4683 = vadd.f32 %v4522, %v4682
      %v4684 = vpop.f32.mrb[0].mxu0
      %v4685 = vpop.f32.mrb[0].mxu0
      %v4686 = vadd.f32 %v4525, %v4685
      %v4687 = vpop.f32.mrb[0].mxu0
      %4688 = vmatprep.mubr.bf16.mxu0 %v3406
      %4689 = vmatmul.mubr.bf16.gmra.mrb[0].mxu0 %v3342
      %v4690 = vpop.f32.mrb[0].mxu0
      %v4691 = vadd.f32 %v4530, %v4690
      %v4692 = vpop.f32.mrb[0].mxu0
      %v4693 = vpop.f32.mrb[0].mxu0
      %v4694 = vadd.f32 %v4533, %v4693
      %v4695 = vpop.f32.mrb[0].mxu0
      %4696 = vdwg.mxu0
      %4697 = vmatprep.subr.bf16.mxu0 0
      %4698 = vmatpush1.bf16.msra.mxu0 %v4118
      %4699 = vmatprep.subr.bf16.mxu0 0
      %4700 = vmatpush1.bf16.msra.mxu0 %v4119
      %4701 = vmatprep.subr.bf16.mxu0 0
      %4702 = vmatpush1.bf16.msra.mxu0 %v4120
      %4703 = vmatprep.subr.bf16.mxu0 0
      %4704 = vmatpush1.bf16.msra.mxu0 %v4121
      %4705 = vmatprep.subr.bf16.mxu0 0
      %4706 = vmatpush1.bf16.msra.mxu0 %v4122
      %4707 = vmatprep.subr.bf16.mxu0 0
      %4708 = vmatpush1.bf16.msra.mxu0 %v4123
      %4709 = vmatprep.subr.bf16.mxu0 0
      %4710 = vmatpush1.bf16.msra.mxu0 %v4124
      %4711 = vmatprep.subr.bf16.mxu0 0
      %4712 = vmatpush1.bf16.msra.mxu0 %v4125
      %4713 = vmatprep.subr.bf16.mxu0 0
      %4714 = vmatpush1.bf16.msra.mxu0 %v4126
      %4715 = vmatprep.subr.bf16.mxu0 0
      %4716 = vmatpush1.bf16.msra.mxu0 %v4127
      %4717 = vmatprep.subr.bf16.mxu0 0
      %4718 = vmatpush1.bf16.msra.mxu0 %v4128
      %4719 = vmatprep.subr.bf16.mxu0 0
      %4720 = vmatpush1.bf16.msra.mxu0 %v4129
      %4721 = vmatprep.subr.bf16.mxu0 0
      %4722 = vmatpush1.bf16.msra.mxu0 %v4130
      %4723 = vmatprep.subr.bf16.mxu0 0
      %4724 = vmatpush1.bf16.msra.mxu0 %v4131
      %4725 = vmatprep.subr.bf16.mxu0 0
      %4726 = vmatpush1.bf16.msra.mxu0 %v4132
      %4727 = vmatprep.subr.bf16.mxu0 0
      %4728 = vmatpush1.bf16.msra.mxu0 %v4133
      %4729 = vmatprep.mubr.bf16.mxu0 %v3535
      %4730 = vmatmul.mubr.bf16.gmra.mrb[0].mxu0 %v3471
      %v4731 = vpop.f32.mrb[0].mxu0
      %v4732 = vadd.f32 %v4571, %v4731
      %v4733 = vpop.f32.mrb[0].mxu0
      %v4734 = vpop.f32.mrb[0].mxu0
      %v4735 = vadd.f32 %v4574, %v4734
      %v4736 = vpop.f32.mrb[0].mxu0
      %4737 = vmatprep.mubr.bf16.mxu0 %v3536
      %4738 = vmatmul.mubr.bf16.gmra.mrb[0].mxu0 %v3472
      %v4739 = vpop.f32.mrb[0].mxu0
      %v4740 = vadd.f32 %v4579, %v4739
      %v4741 = vpop.f32.mrb[0].mxu0
      %v4742 = vpop.f32.mrb[0].mxu0
      %v4743 = vadd.f32 %v4582, %v4742
      %v4744 = vpop.f32.mrb[0].mxu0
      %4745 = vmatprep.mubr.bf16.mxu0 %v3537
      %4746 = vmatmul.mubr.bf16.gmra.mrb[0].mxu0 %v3473
      %v4747 = vpop.f32.mrb[0].mxu0
      %v4748 = vadd.f32 %v4587, %v4747
      %v4749 = vpop.f32.mrb[0].mxu0
      %v4750 = vpop.f32.mrb[0].mxu0
      %v4751 = vadd.f32 %v4590, %v4750
      %v4752 = vpop.f32.mrb[0].mxu0
      %4753 = vmatprep.mubr.bf16.mxu0 %v3538
      %4754 = vmatmul.mubr.bf16.gmra.mrb[0].mxu0 %v3474
      %v4755 = vpop.f32.mrb[0].mxu0
      %v4756 = vadd.f32 %v4595, %v4755
      %v4757 = vpop.f32.mrb[0].mxu0
      %v4758 = vpop.f32.mrb[0].mxu0
      %v4759 = vadd.f32 %v4598, %v4758
      %v4760 = vpop.f32.mrb[0].mxu0
      %4761 = vmatprep.mubr.bf16.mxu0 %v3539
      %4762 = vmatmul.mubr.bf16.gmra.mrb[0].mxu0 %v3475
      %v4763 = vpop.f32.mrb[0].mxu0
      %v4764 = vadd.f32 %v4603, %v4763
      %v4765 = vpop.f32.mrb[0].mxu0
      %v4766 = vpop.f32.mrb[0].mxu0
      %v4767 = vadd.f32 %v4606, %v4766
      %v4768 = vpop.f32.mrb[0].mxu0
      %4769 = vmatprep.mubr.bf16.mxu0 %v3540
      %4770 = vmatmul.mubr.bf16.gmra.mrb[0].mxu0 %v3476
      %v4771 = vpop.f32.mrb[0].mxu0
      %v4772 = vadd.f32 %v4611, %v4771
      %v4773 = vpop.f32.mrb[0].mxu0
      %v4774 = vpop.f32.mrb[0].mxu0
      %v4775 = vadd.f32 %v4614, %v4774
      %v4776 = vpop.f32.mrb[0].mxu0
      %4777 = vmatprep.mubr.bf16.mxu0 %v3541
      %4778 = vmatmul.mubr.bf16.gmra.mrb[0].mxu0 %v3477
      %v4779 = vpop.f32.mrb[0].mxu0
      %v4780 = vadd.f32 %v4619, %v4779
      %v4781 = vpop.f32.mrb[0].mxu0
      %v4782 = vpop.f32.mrb[0].mxu0
      %v4783 = vadd.f32 %v4622, %v4782
      %v4784 = vpop.f32.mrb[0].mxu0
      %4785 = vmatprep.mubr.bf16.mxu0 %v3542
      %4786 = vmatmul.mubr.bf16.gmra.mrb[0].mxu0 %v3478
      %v4787 = vpop.f32.mrb[0].mxu0
      %v4788 = vadd.f32 %v4627, %v4787
      %v4789 = vpop.f32.mrb[0].mxu0
      %v4790 = vpop.f32.mrb[0].mxu0
      %v4791 = vadd.f32 %v4630, %v4790
      %v4792 = vpop.f32.mrb[0].mxu0
      %4793 = vmatprep.mubr.bf16.mxu0 %v3543
      %4794 = vmatmul.mubr.bf16.gmra.mrb[0].mxu0 %v3479
      %v4795 = vpop.f32.mrb[0].mxu0
      %v4796 = vadd.f32 %v4635, %v4795
      %v4797 = vpop.f32.mrb[0].mxu0
      %v4798 = vpop.f32.mrb[0].mxu0
      %v4799 = vadd.f32 %v4638, %v4798
      %v4800 = vpop.f32.mrb[0].mxu0
      %4801 = vmatprep.mubr.bf16.mxu0 %v3544
      %4802 = vmatmul.mubr.bf16.gmra.mrb[0].mxu0 %v3480
      %v4803 = vpop.f32.mrb[0].mxu0
      %v4804 = vadd.f32 %v4643, %v4803
      %v4805 = vpop.f32.mrb[0].mxu0
      %v4806 = vpop.f32.mrb[0].mxu0
      %v4807 = vadd.f32 %v4646, %v4806
      %v4808 = vpop.f32.mrb[0].mxu0
      %4809 = vmatprep.mubr.bf16.mxu0 %v3545
      %4810 = vmatmul.mubr.bf16.gmra.mrb[0].mxu0 %v3481
      %v4811 = vpop.f32.mrb[0].mxu0
      %v4812 = vadd.f32 %v4651, %v4811
      %v4813 = vpop.f32.mrb[0].mxu0
      %v4814 = vpop.f32.mrb[0].mxu0
      %v4815 = vadd.f32 %v4654, %v4814
      %v4816 = vpop.f32.mrb[0].mxu0
      %4817 = vmatprep.mubr.bf16.mxu0 %v3546
      %4818 = vmatmul.mubr.bf16.gmra.mrb[0].mxu0 %v3482
      %v4819 = vpop.f32.mrb[0].mxu0
      %v4820 = vadd.f32 %v4659, %v4819
      %v4821 = vpop.f32.mrb[0].mxu0
      %v4822 = vpop.f32.mrb[0].mxu0
      %v4823 = vadd.f32 %v4662, %v4822
      %v4824 = vpop.f32.mrb[0].mxu0
      %4825 = vmatprep.mubr.bf16.mxu0 %v3547
      %4826 = vmatmul.mubr.bf16.gmra.mrb[0].mxu0 %v3483
      %v4827 = vpop.f32.mrb[0].mxu0
      %v4828 = vadd.f32 %v4667, %v4827
      %v4829 = vpop.f32.mrb[0].mxu0
      %v4830 = vpop.f32.mrb[0].mxu0
      %v4831 = vadd.f32 %v4670, %v4830
      %v4832 = vpop.f32.mrb[0].mxu0
      %4833 = vmatprep.mubr.bf16.mxu0 %v3548
      %4834 = vmatmul.mubr.bf16.gmra.mrb[0].mxu0 %v3484
      %v4835 = vpop.f32.mrb[0].mxu0
      %v4836 = vadd.f32 %v4675, %v4835
      %v4837 = vpop.f32.mrb[0].mxu0
      %v4838 = vpop.f32.mrb[0].mxu0
      %v4839 = vadd.f32 %v4678, %v4838
      %v4840 = vpop.f32.mrb[0].mxu0
      %4841 = vmatprep.mubr.bf16.mxu0 %v3549
      %4842 = vmatmul.mubr.bf16.gmra.mrb[0].mxu0 %v3485
      %v4843 = vpop.f32.mrb[0].mxu0
      %v4844 = vadd.f32 %v4683, %v4843
      %v4845 = vpop.f32.mrb[0].mxu0
      %v4846 = vpop.f32.mrb[0].mxu0
      %v4847 = vadd.f32 %v4686, %v4846
      %v4848 = vpop.f32.mrb[0].mxu0
      %4849 = vmatprep.mubr.bf16.mxu0 %v3550
      %4850 = vmatmul.mubr.bf16.gmra.mrb[0].mxu0 %v3486
      %v4851 = vpop.f32.mrb[0].mxu0
      %v4852 = vadd.f32 %v4691, %v4851
      %v4853 = vpop.f32.mrb[0].mxu0
      %v4854 = vpop.f32.mrb[0].mxu0
      %v4855 = vadd.f32 %v4694, %v4854
      %v4856 = vpop.f32.mrb[0].mxu0
      %4857 = vdwg.mxu0
      %4858 = vmatprep.subr.bf16.mxu0 0
      %4859 = vmatpush1.bf16.msra.mxu0 %v4134
      %4860 = vmatprep.subr.bf16.mxu0 0
      %4861 = vmatpush1.bf16.msra.mxu0 %v4135
      %4862 = vmatprep.subr.bf16.mxu0 0
      %4863 = vmatpush1.bf16.msra.mxu0 %v4136
      %4864 = vmatprep.subr.bf16.mxu0 0
      %4865 = vmatpush1.bf16.msra.mxu0 %v4137
      %4866 = vmatprep.subr.bf16.mxu0 0
      %4867 = vmatpush1.bf16.msra.mxu0 %v4138
      %4868 = vmatprep.subr.bf16.mxu0 0
      %4869 = vmatpush1.bf16.msra.mxu0 %v4139
      %4870 = vmatprep.subr.bf16.mxu0 0
      %4871 = vmatpush1.bf16.msra.mxu0 %v4140
      %4872 = vmatprep.subr.bf16.mxu0 0
      %4873 = vmatpush1.bf16.msra.mxu0 %v4141
      %4874 = vmatprep.subr.bf16.mxu0 0
      %4875 = vmatpush1.bf16.msra.mxu0 0
      %4876 = vmatprep.subr.bf16.mxu0 0
      %4877 = vmatpush1.bf16.msra.mxu0 0
      %4878 = vmatprep.subr.bf16.mxu0 0
      %4879 = vmatpush1.bf16.msra.mxu0 0
      %4880 = vmatprep.subr.bf16.mxu0 0
      %4881 = vmatpush1.bf16.msra.mxu0 0
      %4882 = vmatprep.subr.bf16.mxu0 0
      %4883 = vmatpush1.bf16.msra.mxu0 0
      %4884 = vmatprep.subr.bf16.mxu0 0
      %4885 = vmatpush1.bf16.msra.mxu0 0
      %4886 = vmatprep.subr.bf16.mxu0 0
      %4887 = vmatpush1.bf16.msra.mxu0 0
      %4888 = vmatprep.subr.bf16.mxu0 0
      %4889 = vmatpush1.bf16.msra.mxu0 0
      %4890 = vmatprep.mubr.bf16.mxu0 0
      %4891 = vmatmul.mubr.bf16.gmra.mrb[0].mxu0 %v3599
      %v4892 = vpop.f32.mrb[0].mxu0
      %v4893 = vadd.f32 %v4732, %v4892
      %v4894 = vpop.f32.mrb[0].mxu0
      %v4895 = vpop.f32.mrb[0].mxu0
      %v4896 = vadd.f32 %v4735, %v4895
      %v4897 = vpop.f32.mrb[0].mxu0
      %4898 = vmatprep.mubr.bf16.mxu0 0
      %4899 = vmatmul.mubr.bf16.gmra.mrb[0].mxu0 %v3600
      %v4900 = vpop.f32.mrb[0].mxu0
      %v4901 = vadd.f32 %v4740, %v4900
      %v4902 = vpop.f32.mrb[0].mxu0
      %v4903 = vpop.f32.mrb[0].mxu0
      %v4904 = vadd.f32 %v4743, %v4903
      %v4905 = vpop.f32.mrb[0].mxu0
      %4906 = vmatprep.mubr.bf16.mxu0 0
      %4907 = vmatmul.mubr.bf16.gmra.mrb[0].mxu0 %v3601
      %v4908 = vpop.f32.mrb[0].mxu0
      %v4909 = vadd.f32 %v4748, %v4908
      %v4910 = vpop.f32.mrb[0].mxu0
      %v4911 = vpop.f32.mrb[0].mxu0
      %v4912 = vadd.f32 %v4751, %v4911
      %v4913 = vpop.f32.mrb[0].mxu0
      %4914 = vmatprep.mubr.bf16.mxu0 0
      %4915 = vmatmul.mubr.bf16.gmra.mrb[0].mxu0 %v3602
      %v4916 = vpop.f32.mrb[0].mxu0
      %v4917 = vadd.f32 %v4756, %v4916
      %v4918 = vpop.f32.mrb[0].mxu0
      %v4919 = vpop.f32.mrb[0].mxu0
      %v4920 = vadd.f32 %v4759, %v4919
      %v4921 = vpop.f32.mrb[0].mxu0
      %4922 = vmatprep.mubr.bf16.mxu0 0
      %4923 = vmatmul.mubr.bf16.gmra.mrb[0].mxu0 %v3603
      %v4924 = vpop.f32.mrb[0].mxu0
      %v4925 = vadd.f32 %v4764, %v4924
      %v4926 = vpop.f32.mrb[0].mxu0
      %v4927 = vpop.f32.mrb[0].mxu0
      %v4928 = vadd.f32 %v4767, %v4927
      %v4929 = vpop.f32.mrb[0].mxu0
      %4930 = vmatprep.mubr.bf16.mxu0 0
      %4931 = vmatmul.mubr.bf16.gmra.mrb[0].mxu0 %v3604
      %v4932 = vpop.f32.mrb[0].mxu0
      %v4933 = vadd.f32 %v4772, %v4932
      %v4934 = vpop.f32.mrb[0].mxu0
      %v4935 = vpop.f32.mrb[0].mxu0
      %v4936 = vadd.f32 %v4775, %v4935
      %v4937 = vpop.f32.mrb[0].mxu0
      %4938 = vmatprep.mubr.bf16.mxu0 0
      %4939 = vmatmul.mubr.bf16.gmra.mrb[0].mxu0 %v3605
      %v4940 = vpop.f32.mrb[0].mxu0
      %v4941 = vadd.f32 %v4780, %v4940
      %v4942 = vpop.f32.mrb[0].mxu0
      %v4943 = vpop.f32.mrb[0].mxu0
      %v4944 = vadd.f32 %v4783, %v4943
      %v4945 = vpop.f32.mrb[0].mxu0
      %4946 = vmatprep.mubr.bf16.mxu0 0
      %4947 = vmatmul.mubr.bf16.gmra.mrb[0].mxu0 %v3606
      %v4948 = vpop.f32.mrb[0].mxu0
      %v4949 = vadd.f32 %v4788, %v4948
      %v4950 = vpop.f32.mrb[0].mxu0
      %v4951 = vpop.f32.mrb[0].mxu0
      %v4952 = vadd.f32 %v4791, %v4951
      %v4953 = vpop.f32.mrb[0].mxu0
      %4954 = vmatprep.mubr.bf16.mxu0 0
      %4955 = vmatmul.mubr.bf16.gmra.mrb[0].mxu0 %v3607
      %v4956 = vpop.f32.mrb[0].mxu0
      %v4957 = vadd.f32 %v4796, %v4956
      %v4958 = vpop.f32.mrb[0].mxu0
      %v4959 = vpop.f32.mrb[0].mxu0
      %v4960 = vadd.f32 %v4799, %v4959
      %v4961 = vpop.f32.mrb[0].mxu0
      %4962 = vmatprep.mubr.bf16.mxu0 0
      %4963 = vmatmul.mubr.bf16.gmra.mrb[0].mxu0 %v3608
      %v4964 = vpop.f32.mrb[0].mxu0
      %v4965 = vadd.f32 %v4804, %v4964
      %v4966 = vpop.f32.mrb[0].mxu0
      %v4967 = vpop.f32.mrb[0].mxu0
      %v4968 = vadd.f32 %v4807, %v4967
      %v4969 = vpop.f32.mrb[0].mxu0
      %4970 = vmatprep.mubr.bf16.mxu0 0
      %4971 = vmatmul.mubr.bf16.gmra.mrb[0].mxu0 %v3609
      %v4972 = vpop.f32.mrb[0].mxu0
      %v4973 = vadd.f32 %v4812, %v4972
      %v4974 = vpop.f32.mrb[0].mxu0
      %v4975 = vpop.f32.mrb[0].mxu0
      %v4976 = vadd.f32 %v4815, %v4975
      %v4977 = vpop.f32.mrb[0].mxu0
      %4978 = vmatprep.mubr.bf16.mxu0 0
      %4979 = vmatmul.mubr.bf16.gmra.mrb[0].mxu0 %v3610
      %v4980 = vpop.f32.mrb[0].mxu0
      %v4981 = vadd.f32 %v4820, %v4980
      %v4982 = vpop.f32.mrb[0].mxu0
      %v4983 = vpop.f32.mrb[0].mxu0
      %v4984 = vadd.f32 %v4823, %v4983
      %v4985 = vpop.f32.mrb[0].mxu0
      %4986 = vmatprep.mubr.bf16.mxu0 0
      %4987 = vmatmul.mubr.bf16.gmra.mrb[0].mxu0 %v3611
      %v4988 = vpop.f32.mrb[0].mxu0
      %v4989 = vadd.f32 %v4828, %v4988
      %v4990 = vpop.f32.mrb[0].mxu0
      %v4991 = vpop.f32.mrb[0].mxu0
      %v4992 = vadd.f32 %v4831, %v4991
      %v4993 = vpop.f32.mrb[0].mxu0
      %4994 = vmatprep.mubr.bf16.mxu0 0
      %4995 = vmatmul.mubr.bf16.gmra.mrb[0].mxu0 %v3612
      %v4996 = vpop.f32.mrb[0].mxu0
      %v4997 = vadd.f32 %v4836, %v4996
      %v4998 = vpop.f32.mrb[0].mxu0
      %v4999 = vpop.f32.mrb[0].mxu0
      %v5000 = vadd.f32 %v4839, %v4999
      %v5001 = vpop.f32.mrb[0].mxu0
      %5002 = vmatprep.mubr.bf16.mxu0 0
      %5003 = vmatmul.mubr.bf16.gmra.mrb[0].mxu0 %v3613
      %v5004 = vpop.f32.mrb[0].mxu0
      %v5005 = vadd.f32 %v4844, %v5004
      %v5006 = vpop.f32.mrb[0].mxu0
      %v5007 = vpop.f32.mrb[0].mxu0
      %v5008 = vadd.f32 %v4847, %v5007
      %v5009 = vpop.f32.mrb[0].mxu0
      %5010 = vmatprep.mubr.bf16.mxu0 0
      %5011 = vmatmul.mubr.bf16.gmra.mrb[0].mxu0 %v3614
      %v5012 = vpop.f32.mrb[0].mxu0
      %v5013 = vadd.f32 %v4852, %v5012
      %v5014 = vpop.f32.mrb[0].mxu0
      %v5015 = vpop.f32.mrb[0].mxu0
      %v5016 = vadd.f32 %v4855, %v5015
      %v5017 = vpop.f32.mrb[0].mxu0
      %5018 = vdwg.mxu0
      %v5019 = vmax.f32 %v4893, 0.0
      %v5020 = vmax.f32 %v4896, 0.0
      %v5021 = vmax.f32 %v4901, 0.0
      %v5022 = vmax.f32 %v4904, 0.0
      %v5023 = vmax.f32 %v4909, 0.0
      %v5024 = vmax.f32 %v4912, 0.0
      %v5025 = vmax.f32 %v4917, 0.0
      %v5026 = vmax.f32 %v4920, 0.0
      %v5027 = vmax.f32 %v4925, 0.0
      %v5028 = vmax.f32 %v4928, 0.0
      %v5029 = vmax.f32 %v4933, 0.0
      %v5030 = vmax.f32 %v4936, 0.0
      %v5031 = vmax.f32 %v4941, 0.0
      %v5032 = vmax.f32 %v4944, 0.0
      %v5033 = vmax.f32 %v4949, 0.0
      %v5034 = vmax.f32 %v4952, 0.0
      %v5035 = vmax.f32 %v4957, 0.0
      %v5036 = vmax.f32 %v4960, 0.0
      %v5037 = vmax.f32 %v4965, 0.0
      %v5038 = vmax.f32 %v4968, 0.0
      %v5039 = vmax.f32 %v4973, 0.0
      %v5040 = vmax.f32 %v4976, 0.0
      %v5041 = vmax.f32 %v4981, 0.0
      %v5042 = vmax.f32 %v4984, 0.0
      %v5043 = vmax.f32 %v4989, 0.0
      %v5044 = vmax.f32 %v4992, 0.0
      %v5045 = vmax.f32 %v4997, 0.0
      %v5046 = vmax.f32 %v5000, 0.0
      %v5047 = vmax.f32 %v5005, 0.0
      %v5048 = vmax.f32 %v5008, 0.0
      %v5049 = vmax.f32 %v5013, 0.0
      %v5050 = vmax.f32 %v5016, 0.0
      %v5051 = vpack.c.bf16 %v5020, %v5019
      %v5052 = vpack.c.bf16 %v5022, %v5021
      %v5053 = vpack.c.bf16 %v5024, %v5023
      %v5054 = vpack.c.bf16 %v5026, %v5025
      %v5055 = vpack.c.bf16 %v5028, %v5027
      %v5056 = vpack.c.bf16 %v5030, %v5029
      %v5057 = vpack.c.bf16 %v5032, %v5031
      %v5058 = vpack.c.bf16 %v5034, %v5033
      %v5059 = vpack.c.bf16 %v5036, %v5035
      %v5060 = vpack.c.bf16 %v5038, %v5037
      %v5061 = vpack.c.bf16 %v5040, %v5039
      %v5062 = vpack.c.bf16 %v5042, %v5041
      %v5063 = vpack.c.bf16 %v5044, %v5043
      %v5064 = vpack.c.bf16 %v5046, %v5045
      %v5065 = vpack.c.bf16 %v5048, %v5047
      %v5066 = vpack.c.bf16 %v5050, %v5049
      %v5067 = vld [vmem:[%s5] sm:$0xf]
      %v5068 = vld [vmem:[%s5 + $0x4] sm:$0xf]
      %v5069 = vld [vmem:[%s5 + $0x8] sm:$0xf]
      %v5070 = vld [vmem:[%s5 + $0xc] sm:$0xf]
      %v5071 = vld [vmem:[%s5 + $0x10] sm:$0xf]
      %v5072 = vld [vmem:[%s5 + $0x14] sm:$0xf]
      %v5073 = vld [vmem:[%s5 + $0x18] sm:$0xf]
      %v5074 = vld [vmem:[%s5 + $0x1c] sm:$0xf]
      %v5075 = vld [vmem:[%s5 + $0x20] sm:$0xf]
      %v5076 = vld [vmem:[%s5 + $0x24] sm:$0xf]
      %v5077 = vld [vmem:[%s5 + $0x28] sm:$0xf]
      %v5078 = vld [vmem:[%s5 + $0x2c] sm:$0xf]
      %v5079 = vld [vmem:[%s5 + $0x30] sm:$0xf]
      %v5080 = vld [vmem:[%s5 + $0x34] sm:$0xf]
      %v5081 = vld [vmem:[%s5 + $0x38] sm:$0xf]
      %v5082 = vld [vmem:[%s5 + $0x3c] sm:$0xf]
      %v5083 = vld [vmem:[%s6] sm:$0x1]
      %v5085 = vlaneseq
      %v5086 = vshrl.u32 %v5085, 7
      %v5087 = vsub.s32 0, %v5086
      %v5088 = vrot.slane %v5083, %v5087
      %v5106 = vunpack.c.l.b16 %v5067
      %v5107 = vunpack.c.l.b16 %v5068
      %v5108 = vunpack.c.l.b16 %v5069
      %v5109 = vunpack.c.l.b16 %v5070
      %v5110 = vunpack.c.l.b16 %v5071
      %v5111 = vunpack.c.l.b16 %v5072
      %v5112 = vunpack.c.l.b16 %v5073
      %v5113 = vunpack.c.l.b16 %v5074
      %v5114 = vunpack.c.l.b16 %v5075
      %v5115 = vunpack.c.l.b16 %v5076
      %v5116 = vunpack.c.l.b16 %v5077
      %v5117 = vunpack.c.l.b16 %v5078
      %v5118 = vunpack.c.l.b16 %v5079
      %v5119 = vunpack.c.l.b16 %v5080
      %v5120 = vunpack.c.l.b16 %v5081
      %v5121 = vunpack.c.l.b16 %v5082
      %v5122 = vpack.c.b16 %v5107, %v5106
      %v5123 = vpack.c.b16 %v5109, %v5108
      %v5124 = vpack.c.b16 %v5111, %v5110
      %v5125 = vpack.c.b16 %v5113, %v5112
      %v5126 = vpack.c.b16 %v5115, %v5114
      %v5127 = vpack.c.b16 %v5117, %v5116
      %v5128 = vpack.c.b16 %v5119, %v5118
      %v5129 = vpack.c.b16 %v5121, %v5120
      %5138 = vmatprep.subr.bf16.mxu0 0
      %5139 = vmatpush1.bf16.msra.mxu0 %v5122
      %5140 = vmatprep.subr.bf16.mxu0 0
      %5141 = vmatpush1.bf16.msra.mxu0 %v5123
      %5142 = vmatprep.subr.bf16.mxu0 0
      %5143 = vmatpush1.bf16.msra.mxu0 %v5124
      %5144 = vmatprep.subr.bf16.mxu0 0
      %5145 = vmatpush1.bf16.msra.mxu0 %v5125
      %5146 = vmatprep.subr.bf16.mxu0 0
      %5147 = vmatpush1.bf16.msra.mxu0 %v5126
      %5148 = vmatprep.subr.bf16.mxu0 0
      %5149 = vmatpush1.bf16.msra.mxu0 %v5127
      %5150 = vmatprep.subr.bf16.mxu0 0
      %5151 = vmatpush1.bf16.msra.mxu0 %v5128
      %5152 = vmatprep.subr.bf16.mxu0 0
      %5153 = vmatpush1.bf16.msra.mxu0 %v5129
      %5154 = vmatprep.subr.bf16.mxu0 0
      %5155 = vmatpush1.bf16.msra.mxu0 0
      %5156 = vmatprep.subr.bf16.mxu0 0
      %5157 = vmatpush1.bf16.msra.mxu0 0
      %5158 = vmatprep.subr.bf16.mxu0 0
      %5159 = vmatpush1.bf16.msra.mxu0 0
      %5160 = vmatprep.subr.bf16.mxu0 0
      %5161 = vmatpush1.bf16.msra.mxu0 0
      %5162 = vmatprep.subr.bf16.mxu0 0
      %5163 = vmatpush1.bf16.msra.mxu0 0
      %5164 = vmatprep.subr.bf16.mxu0 0
      %5165 = vmatpush1.bf16.msra.mxu0 0
      %5166 = vmatprep.subr.bf16.mxu0 0
      %5167 = vmatpush1.bf16.msra.mxu0 0
      %5168 = vmatprep.subr.bf16.mxu0 0
      %5169 = vmatpush1.bf16.msra.mxu0 0
      %5170 = vmatprep.mubr.bf16.mxu0 0
      %5171 = vmatmul.mubr.bf16.gmra.mrb[0].mxu0 %v5051
      %v5172 = vpop.f32.mrb[0].mxu0
      %v5173 = vadd.f32 %v5088, %v5172
      %v5174 = vpop.f32.mrb[0].mxu0
      %v5175 = vpop.f32.mrb[0].mxu0
      %v5176 = vadd.f32 %v5088, %v5175
      %v5177 = vpop.f32.mrb[0].mxu0
      %5178 = vmatprep.mubr.bf16.mxu0 0
      %5179 = vmatmul.mubr.bf16.gmra.mrb[0].mxu0 %v5052
      %v5180 = vpop.f32.mrb[0].mxu0
      %v5181 = vadd.f32 %v5088, %v5180
      %v5182 = vpop.f32.mrb[0].mxu0
      %v5183 = vpop.f32.mrb[0].mxu0
      %v5184 = vadd.f32 %v5088, %v5183
      %v5185 = vpop.f32.mrb[0].mxu0
      %5186 = vmatprep.mubr.bf16.mxu0 0
      %5187 = vmatmul.mubr.bf16.gmra.mrb[0].mxu0 %v5053
      %v5188 = vpop.f32.mrb[0].mxu0
      %v5189 = vadd.f32 %v5088, %v5188
      %v5190 = vpop.f32.mrb[0].mxu0
      %v5191 = vpop.f32.mrb[0].mxu0
      %v5192 = vadd.f32 %v5088, %v5191
      %v5193 = vpop.f32.mrb[0].mxu0
      %5194 = vmatprep.mubr.bf16.mxu0 0
      %5195 = vmatmul.mubr.bf16.gmra.mrb[0].mxu0 %v5054
      %v5196 = vpop.f32.mrb[0].mxu0
      %v5197 = vadd.f32 %v5088, %v5196
      %v5198 = vpop.f32.mrb[0].mxu0
      %v5199 = vpop.f32.mrb[0].mxu0
      %v5200 = vadd.f32 %v5088, %v5199
      %v5201 = vpop.f32.mrb[0].mxu0
      %5202 = vmatprep.mubr.bf16.mxu0 0
      %5203 = vmatmul.mubr.bf16.gmra.mrb[0].mxu0 %v5055
      %v5204 = vpop.f32.mrb[0].mxu0
      %v5205 = vadd.f32 %v5088, %v5204
      %v5206 = vpop.f32.mrb[0].mxu0
      %v5207 = vpop.f32.mrb[0].mxu0
      %v5208 = vadd.f32 %v5088, %v5207
      %v5209 = vpop.f32.mrb[0].mxu0
      %5210 = vmatprep.mubr.bf16.mxu0 0
      %5211 = vmatmul.mubr.bf16.gmra.mrb[0].mxu0 %v5056
      %v5212 = vpop.f32.mrb[0].mxu0
      %v5213 = vadd.f32 %v5088, %v5212
      %v5214 = vpop.f32.mrb[0].mxu0
      %v5215 = vpop.f32.mrb[0].mxu0
      %v5216 = vadd.f32 %v5088, %v5215
      %v5217 = vpop.f32.mrb[0].mxu0
      %5218 = vmatprep.mubr.bf16.mxu0 0
      %5219 = vmatmul.mubr.bf16.gmra.mrb[0].mxu0 %v5057
      %v5220 = vpop.f32.mrb[0].mxu0
      %v5221 = vadd.f32 %v5088, %v5220
      %v5222 = vpop.f32.mrb[0].mxu0
      %v5223 = vpop.f32.mrb[0].mxu0
      %v5224 = vadd.f32 %v5088, %v5223
      %v5225 = vpop.f32.mrb[0].mxu0
      %5226 = vmatprep.mubr.bf16.mxu0 0
      %5227 = vmatmul.mubr.bf16.gmra.mrb[0].mxu0 %v5058
      %v5228 = vpop.f32.mrb[0].mxu0
      %v5229 = vadd.f32 %v5088, %v5228
      %v5230 = vpop.f32.mrb[0].mxu0
      %v5231 = vpop.f32.mrb[0].mxu0
      %v5232 = vadd.f32 %v5088, %v5231
      %v5233 = vpop.f32.mrb[0].mxu0
      %5234 = vmatprep.mubr.bf16.mxu0 0
      %5235 = vmatmul.mubr.bf16.gmra.mrb[0].mxu0 %v5059
      %v5236 = vpop.f32.mrb[0].mxu0
      %v5237 = vadd.f32 %v5088, %v5236
      %v5238 = vpop.f32.mrb[0].mxu0
      %v5239 = vpop.f32.mrb[0].mxu0
      %v5240 = vadd.f32 %v5088, %v5239
      %v5241 = vpop.f32.mrb[0].mxu0
      %5242 = vmatprep.mubr.bf16.mxu0 0
      %5243 = vmatmul.mubr.bf16.gmra.mrb[0].mxu0 %v5060
      %v5244 = vpop.f32.mrb[0].mxu0
      %v5245 = vadd.f32 %v5088, %v5244
      %v5246 = vpop.f32.mrb[0].mxu0
      %v5247 = vpop.f32.mrb[0].mxu0
      %v5248 = vadd.f32 %v5088, %v5247
      %v5249 = vpop.f32.mrb[0].mxu0
      %5250 = vmatprep.mubr.bf16.mxu0 0
      %5251 = vmatmul.mubr.bf16.gmra.mrb[0].mxu0 %v5061
      %v5252 = vpop.f32.mrb[0].mxu0
      %v5253 = vadd.f32 %v5088, %v5252
      %v5254 = vpop.f32.mrb[0].mxu0
      %v5255 = vpop.f32.mrb[0].mxu0
      %v5256 = vadd.f32 %v5088, %v5255
      %v5257 = vpop.f32.mrb[0].mxu0
      %5258 = vmatprep.mubr.bf16.mxu0 0
      %5259 = vmatmul.mubr.bf16.gmra.mrb[0].mxu0 %v5062
      %v5260 = vpop.f32.mrb[0].mxu0
      %v5261 = vadd.f32 %v5088, %v5260
      %v5262 = vpop.f32.mrb[0].mxu0
      %v5263 = vpop.f32.mrb[0].mxu0
      %v5264 = vadd.f32 %v5088, %v5263
      %v5265 = vpop.f32.mrb[0].mxu0
      %5266 = vmatprep.mubr.bf16.mxu0 0
      %5267 = vmatmul.mubr.bf16.gmra.mrb[0].mxu0 %v5063
      %v5268 = vpop.f32.mrb[0].mxu0
      %v5269 = vadd.f32 %v5088, %v5268
      %v5270 = vpop.f32.mrb[0].mxu0
      %v5271 = vpop.f32.mrb[0].mxu0
      %v5272 = vadd.f32 %v5088, %v5271
      %v5273 = vpop.f32.mrb[0].mxu0
      %5274 = vmatprep.mubr.bf16.mxu0 0
      %5275 = vmatmul.mubr.bf16.gmra.mrb[0].mxu0 %v5064
      %v5276 = vpop.f32.mrb[0].mxu0
      %v5277 = vadd.f32 %v5088, %v5276
      %v5278 = vpop.f32.mrb[0].mxu0
      %v5279 = vpop.f32.mrb[0].mxu0
      %v5280 = vadd.f32 %v5088, %v5279
      %v5281 = vpop.f32.mrb[0].mxu0
      %5282 = vmatprep.mubr.bf16.mxu0 0
      %5283 = vmatmul.mubr.bf16.gmra.mrb[0].mxu0 %v5065
      %v5284 = vpop.f32.mrb[0].mxu0
      %v5285 = vadd.f32 %v5088, %v5284
      %v5286 = vpop.f32.mrb[0].mxu0
      %v5287 = vpop.f32.mrb[0].mxu0
      %v5288 = vadd.f32 %v5088, %v5287
      %v5289 = vpop.f32.mrb[0].mxu0
      %5290 = vmatprep.mubr.bf16.mxu0 0
      %5291 = vmatmul.mubr.bf16.gmra.mrb[0].mxu0 %v5066
      %v5292 = vpop.f32.mrb[0].mxu0
      %v5293 = vadd.f32 %v5088, %v5292
      %v5294 = vpop.f32.mrb[0].mxu0
      %v5295 = vpop.f32.mrb[0].mxu0
      %v5296 = vadd.f32 %v5088, %v5295
      %v5297 = vpop.f32.mrb[0].mxu0
      %5298 = vdwg.mxu0
      %v5299 = vadd.f32 %v5173, %v280
      %v5300 = vadd.f32 %v5176, %v281
      %v5301 = vadd.f32 %v5181, %v282
      %v5302 = vadd.f32 %v5184, %v283
      %v5303 = vadd.f32 %v5189, %v284
      %v5304 = vadd.f32 %v5192, %v285
      %v5305 = vadd.f32 %v5197, %v286
      %v5306 = vadd.f32 %v5200, %v287
      %v5307 = vadd.f32 %v5205, %v288
      %v5308 = vadd.f32 %v5208, %v289
      %v5309 = vadd.f32 %v5213, %v290
      %v5310 = vadd.f32 %v5216, %v291
      %v5311 = vadd.f32 %v5221, %v292
      %v5312 = vadd.f32 %v5224, %v293
      %v5313 = vadd.f32 %v5229, %v294
      %v5314 = vadd.f32 %v5232, %v295
      %v5315 = vadd.f32 %v5237, %v296
      %v5316 = vadd.f32 %v5240, %v297
      %v5317 = vadd.f32 %v5245, %v298
      %v5318 = vadd.f32 %v5248, %v299
      %v5319 = vadd.f32 %v5253, %v300
      %v5320 = vadd.f32 %v5256, %v301
      %v5321 = vadd.f32 %v5261, %v302
      %v5322 = vadd.f32 %v5264, %v303
      %v5323 = vadd.f32 %v5269, %v304
      %v5324 = vadd.f32 %v5272, %v305
      %v5325 = vadd.f32 %v5277, %v306
      %v5326 = vadd.f32 %v5280, %v307
      %v5327 = vadd.f32 %v5285, %v308
      %v5328 = vadd.f32 %v5288, %v309
      %v5329 = vadd.f32 %v5293, %v310
      %v5330 = vadd.f32 %v5296, %v311
      %v5331 = vmax.f32 %v5299, 0.0
      %v5332 = vmax.f32 %v5300, 0.0
      %v5333 = vmax.f32 %v5301, 0.0
      %v5334 = vmax.f32 %v5302, 0.0
      %v5335 = vmax.f32 %v5303, 0.0
      %v5336 = vmax.f32 %v5304, 0.0
      %v5337 = vmax.f32 %v5305, 0.0
      %v5338 = vmax.f32 %v5306, 0.0
      %v5339 = vmax.f32 %v5307, 0.0
      %v5340 = vmax.f32 %v5308, 0.0
      %v5341 = vmax.f32 %v5309, 0.0
      %v5342 = vmax.f32 %v5310, 0.0
      %v5343 = vmax.f32 %v5311, 0.0
      %v5344 = vmax.f32 %v5312, 0.0
      %v5345 = vmax.f32 %v5313, 0.0
      %v5346 = vmax.f32 %v5314, 0.0
      %v5347 = vmax.f32 %v5315, 0.0
      %v5348 = vmax.f32 %v5316, 0.0
      %v5349 = vmax.f32 %v5317, 0.0
      %v5350 = vmax.f32 %v5318, 0.0
      %v5351 = vmax.f32 %v5319, 0.0
      %v5352 = vmax.f32 %v5320, 0.0
      %v5353 = vmax.f32 %v5321, 0.0
      %v5354 = vmax.f32 %v5322, 0.0
      %v5355 = vmax.f32 %v5323, 0.0
      %v5356 = vmax.f32 %v5324, 0.0
      %v5357 = vmax.f32 %v5325, 0.0
      %v5358 = vmax.f32 %v5326, 0.0
      %v5359 = vmax.f32 %v5327, 0.0
      %v5360 = vmax.f32 %v5328, 0.0
      %v5361 = vmax.f32 %v5329, 0.0
      %v5362 = vmax.f32 %v5330, 0.0
      %5363 = vst.msk [vmem:[%s278] sm:$0xff] %vm343, %v5331
      %5364 = vst.msk [vmem:[%s278 + $0x8] sm:$0xff] %vm343, %v5332
      %5365 = vst.msk [vmem:[%s278 + $0x10] sm:$0xff] %vm343, %v5333
      %5366 = vst.msk [vmem:[%s278 + $0x18] sm:$0xff] %vm343, %v5334
      %5367 = vst.msk [vmem:[%s278 + $0x20] sm:$0xff] %vm343, %v5335
      %5368 = vst.msk [vmem:[%s278 + $0x28] sm:$0xff] %vm343, %v5336
      %5369 = vst.msk [vmem:[%s278 + $0x30] sm:$0xff] %vm343, %v5337
      %5370 = vst.msk [vmem:[%s278 + $0x38] sm:$0xff] %vm343, %v5338
      %5371 = vst.msk [vmem:[%s278 + $0x40] sm:$0xff] %vm343, %v5339
      %5372 = vst.msk [vmem:[%s278 + $0x48] sm:$0xff] %vm343, %v5340
      %5373 = vst.msk [vmem:[%s278 + $0x50] sm:$0xff] %vm343, %v5341
      %5374 = vst.msk [vmem:[%s278 + $0x58] sm:$0xff] %vm343, %v5342
      %5375 = vst.msk [vmem:[%s278 + $0x60] sm:$0xff] %vm343, %v5343
      %5376 = vst.msk [vmem:[%s278 + $0x68] sm:$0xff] %vm343, %v5344
      %5377 = vst.msk [vmem:[%s278 + $0x70] sm:$0xff] %vm343, %v5345
      %5378 = vst.msk [vmem:[%s278 + $0x78] sm:$0xff] %vm343, %v5346
      %5379 = vst.msk [vmem:[%s278 + $0x80] sm:$0xff] %vm343, %v5347
      %5380 = vst.msk [vmem:[%s278 + $0x88] sm:$0xff] %vm343, %v5348
      %5381 = vst.msk [vmem:[%s278 + $0x90] sm:$0xff] %vm343, %v5349
      %5382 = vst.msk [vmem:[%s278 + $0x98] sm:$0xff] %vm343, %v5350
      %5383 = vst.msk [vmem:[%s278 + $0xa0] sm:$0xff] %vm343, %v5351
      %5384 = vst.msk [vmem:[%s278 + $0xa8] sm:$0xff] %vm343, %v5352
      %5385 = vst.msk [vmem:[%s278 + $0xb0] sm:$0xff] %vm343, %v5353
      %5386 = vst.msk [vmem:[%s278 + $0xb8] sm:$0xff] %vm343, %v5354
      %5387 = vst.msk [vmem:[%s278 + $0xc0] sm:$0xff] %vm343, %v5355
      %5388 = vst.msk [vmem:[%s278 + $0xc8] sm:$0xff] %vm343, %v5356
      %5389 = vst.msk [vmem:[%s278 + $0xd0] sm:$0xff] %vm343, %v5357
      %5390 = vst.msk [vmem:[%s278 + $0xd8] sm:$0xff] %vm343, %v5358
      %5391 = vst.msk [vmem:[%s278 + $0xe0] sm:$0xff] %vm343, %v5359
      %5392 = vst.msk [vmem:[%s278 + $0xe8] sm:$0xff] %vm343, %v5360
      %5393 = vst.msk [vmem:[%s278 + $0xf0] sm:$0xff] %vm343, %v5361
      %5394 = vst.msk [vmem:[%s278 + $0xf8] sm:$0xff] %vm343, %v5362
      %p5395 = scmp.lt.s32.totalorder %s18, 1
      %s5396 = scalar_select %p5395, %s18, 1
      %s5397 = smul.addr %s5396, 32
      %s5398 = smul.addr %s5397, 8
      %s5399 = scalar_lea.vmem %s7, %s5398
      // Predicated region
      $region49: #{bottleneck_forward.1} parent=47 // pred_check
        %p5400 = pneg %p188
      $region50: #{bottleneck_forward.1} parent=47 // pred_check_branch
        %5402 = sbr.rel (%p5400) target = $region52
      $region51: #{bottleneck_forward.1} parent=47 // pred_region
        _
      $region52: #{bottleneck_forward.1} parent=47 // pred_fallthru
        _
    $region48: #{bottleneck_forward.1} parent=5 // pred_fallthru
      _
    %p5403 = scmp.le.s32.totalorder 2, %s13
    // Predicated region
    $region53: #{bottleneck_forward.1} parent=5 // pred_check
      %p5404 = pneg %p5403
    $region54: #{bottleneck_forward.1} parent=5 // pred_check_branch
      %5406 = sbr.rel (%p5404) target = $region56
    $region55: #{bottleneck_forward.1} parent=5 // pred_region
      %s5407 = ssub.s32 %s13, 2
      // Predicated region
      $region57: #{bottleneck_forward.1} parent=55 // pred_check
        %p5408 = pneg %p194
      $region58: #{bottleneck_forward.1} parent=55 // pred_check_branch
        %5410 = sbr.rel (%p5408) target = $region60
      $region59: #{bottleneck_forward.1} parent=55 // pred_region
        %p5411 = scmp.lt.s32.totalorder %s19, 1
        %s5412 = scalar_select %p5411, %s19, 1
        %s5413 = smul.addr %s5412, 32
        %s5414 = smul.addr %s5413, 8
        %s5415 = scalar_lea.vmem %s7, %s5414
      $region60: #{bottleneck_forward.1} parent=55 // pred_fallthru
        _
    $region56: #{bottleneck_forward.1} parent=5 // pred_fallthru
      _
  $region6: #{bottleneck_forward.1} parent=0 // loop_footer
    %s17 = sadd.s32 1, %s13
  $region7: #{bottleneck_forward.1} parent=0 // loop_footer_branch
    %12 = sbr.rel target = $region3
  $region8: #{bottleneck_forward.1} parent=0 // loop_exit
    _

</llo_original>
